<compile_context>
chip_gen: v7x
topology: tpu7x:2x2x1
jax: 0.10.0
libtpu: 0.0.40
codegen_flags: <defaults>
</compile_context>

<pallas_src>
import functools
import math

import jax
import jax.numpy as jnp
from jax import lax
from jax.experimental import pallas as pl
from jax.experimental.pallas import tpu as pltpu


# --------------------------------------------------------------------------- kernel


def _attn_kernel(q_ref, k_ref, v_ref, o_ref, m_scr, l_scr, acc_scr, *,
                 scale, kv_len, kv_tile, needs_mask, exp_dtype, native_head_batch):
    # q_ref: (1, tq, hb, E)  k_ref: (1, tk, hb, E)  v_ref: (1, tk, hb, D)
    # o_ref: (1, tq, hb*D)   scratch: m/l (hb, tq, 1) f32, acc (hb, tq, D) f32
    kv_idx = pl.program_id(3)

    @pl.when(kv_idx == 0)
    def _init():
        m_scr[...] = jnp.full(m_scr.shape, -jnp.inf, dtype=jnp.float32)
        l_scr[...] = jnp.zeros(l_scr.shape, dtype=jnp.float32)
        acc_scr[...] = jnp.zeros(acc_scr.shape, dtype=jnp.float32)

    # Current tiles in their native (seq, heads, dim) layout.  scale folded into Q:
    # hb*tq*E VPU multiplies instead of a full (hb,tq,tk) f32 multiply per kv step.
    q = q_ref[0] * scale            # (tq, hb, E), native dtype
    k = k_ref[0]                    # (tk, hb, E)
    v = v_ref[0]                    # (tk, hb, D)

    if native_head_batch:
        # scores[h,l,s] = sum_e q[l,h,e]*k[s,h,e]: head batch dim at its native
        # position, contraction on E, f32 accumulation on the MXU — no relayout.
        s = lax.dot_general(q, k, (((2,), (2,)), ((1,), (1,))),
                            preferred_element_type=jnp.float32)       # (hb, tq, tk)
    else:
        qh = jnp.swapaxes(q, 0, 1)
        kh = jnp.swapaxes(k, 0, 1)
        s = lax.dot_general(qh, kh, (((2,), (2,)), ((0,), (0,))),
                            preferred_element_type=jnp.float32)       # (hb, tq, tk)

    if needs_mask:
        # Mask the padded kv tail to -inf before the online-softmax max/exp.
        kv_pos = kv_idx * kv_tile + lax.broadcasted_iota(
            jnp.int32, (1, 1, s.shape[-1]), 2)
        s = jnp.where(kv_pos < kv_len, s, -jnp.inf)

    # Online softmax update; running stats kept in f32, exp in exp_dtype
    # (bf16 for bf16 inputs -> EUP relief on v6e/v7x; p is fed to the MXU anyway).
    m_prev = m_scr[...]
    m_new = jnp.maximum(m_prev, jnp.max(s, axis=-1, keepdims=True))   # (hb, tq, 1)
    alpha = jnp.exp(m_prev - m_new)
    p = jnp.exp((s - m_new).astype(exp_dtype))                        # (hb, tq, tk)
    l_scr[...] = alpha * l_scr[...] + jnp.sum(p.astype(jnp.float32),
                                              axis=-1, keepdims=True)

    p_mm = p if p.dtype == v.dtype else p.astype(v.dtype)
    if native_head_batch:
        # out[h,l,d] += sum_s p[h,l,s] * v[s,h,d] — again no relayout of the V tile.
        pv = lax.dot_general(p_mm, v, (((2,), (0,)), ((0,), (1,))),
                             preferred_element_type=jnp.float32)      # (hb, tq, D)
    else:
        vh = jnp.swapaxes(v, 0, 1)
        pv = lax.dot_general(p_mm, vh, (((2,), (1,)), ((0,), (0,))),
                             preferred_element_type=jnp.float32)
    acc_scr[...] = alpha * acc_scr[...] + pv
    m_scr[...] = m_new

    @pl.when(kv_idx == pl.num_programs(3) - 1)
    def _finalize():
        # Exact reciprocal for f32 outputs (tiny vector), EUP approx for bf16.
        inv_l = pl.reciprocal(l_scr[...], approx=(o_ref.dtype == jnp.bfloat16))
        out = acc_scr[...] * inv_l                      # (hb, tq, D) f32
        hb, tq, d = out.shape
        # Head-major -> lane-dense (tq, hb*D) store; once per q tile, not per kv step.
        o_ref[0] = jnp.swapaxes(out, 0, 1).reshape(tq, hb * d).astype(o_ref.dtype)


# ------------------------------------------------------------------- tile budgeting


def _round_up(x, m):
    return -(-x // m) * m


def _cdiv(a, b):
    return -(-a // b)


def _vmem_limit_bytes():
    """Derive the VMEM limit from the chip (64 MiB on v7x, 128 MiB on v5e/v6e)."""
    cap = None
    try:
        cap = getattr(pltpu.get_tpu_info(), "vmem_capacity_bytes", None)
    except Exception:
        cap = None
    if not cap:
        cap = 64 * 1024 * 1024          # conservative: v7x per-core VMEM
    return min(cap * 3 // 4, 96 * 1024 * 1024)


def _vmem_bytes_estimate(tq, tk, hb, E, D, itemsize):
    """Per-grid-step VMEM estimate including lane padding (E/D < 128) and the live
    (hb, tq, tk) f32 score/prob temporaries the naive byte count hides."""
    lane, sub = 128, 8
    ru = _round_up
    q_blk = tq * ru(hb, sub) * ru(E, lane) * itemsize
    k_blk = tk * ru(hb, sub) * ru(E, lane) * itemsize
    v_blk = tk * ru(hb, sub) * ru(D, lane) * itemsize
    o_blk = ru(tq, sub) * ru(hb * D, lane) * itemsize
    pipelined = 2 * (q_blk + k_blk + v_blk + o_blk)             # double-buffered
    scratch = hb * ru(tq, sub) * (2 * lane + ru(D, lane)) * 4   # m, l, acc (f32)
    temps = 3 * hb * ru(tq, sub) * ru(tk, lane) * 4             # live score/prob tiles
    return pipelined + scratch + temps


def _head_block_options(H, D):
    """Valid head-block sizes: divide H and either equal H or be a multiple of 8
    with a lane-dense (hb*D) output slab.  Descending order."""
    opts = [H]
    for hb in range(H - 1, 0, -1):
        if H % hb == 0 and hb % 8 == 0 and (hb * D) % 128 == 0:
            opts.append(hb)
    return opts


def _pick_seq_tile(dim, cap):
    """Single 8-aligned tile when the axis fits under the cap, otherwise the largest
    128-aligned (MXU-friendly) tile <= cap with modest ragged-tail waste."""
    if dim <= cap:
        return _round_up(dim, 8)
    aligned_cap = max(128, (cap // 128) * 128)
    for t in range(aligned_cap, 127, -128):
        if dim % t == 0:
            return t
        pad = _round_up(dim, t) - dim
        if 10 * pad <= 3 * dim:          # accept <= ~30% ragged-tail waste
            return t
    return 128


def _choose_tiles(B, L, S, H, E, D, itemsize, q_cap, kv_cap, vmem_limit):
    budget = int(vmem_limit * 0.7)       # leave headroom for compiler scratch
    tq = _pick_seq_tile(L, q_cap)
    tk = _pick_seq_tile(S, kv_cap)
    hb_opts = _head_block_options(H, D)
    hb = hb_opts[0]

    def fits(tq_, tk_, hb_):
        return _vmem_bytes_estimate(tq_, tk_, hb_, E, D, itemsize) <= budget

    # Shrink the kv tile first (cheapest), then the head block, then the q tile last
    # (tq sets how many times the K/V stream is re-fetched from HBM).
    while not fits(tq, tk, hb):
        if tk > 128:
            tk = max(128, tk // 2)
        elif hb != hb_opts[-1]:
            hb = hb_opts[hb_opts.index(hb) + 1]
        elif tq > 128:
            tq = max(128, tq // 2)
        else:
            break

    # Megacore (v7x has 2 TensorCores): keep parallel grid extent >= 2 if possible.
    if B * _cdiv(L, tq) * (H // hb) < 2:
        if hb != hb_opts[-1]:
            hb = hb_opts[hb_opts.index(hb) + 1]
        elif L > tq // 2 >= 8:
            tq = _round_up(tq // 2, 8)
    return tq, tk, hb


# ------------------------------------------------------------------------- wrapper


def full_attention(queries, keys, values, attn_mask=None, *, scale=None,
                   q_tile_cap=512, kv_tile_cap=512):
    """FullAttention forward (eval mode): softmax(Q.K^T / sqrt(E)) @ V.

    queries: (B, L, H, E), keys: (B, S, H, E), values: (B, S, H, D) (PyTorch layout).
    Returns (B, L, H, D).
    """
    del attn_mask  # unused by the reference forward
    B, L, H, E = queries.shape
    _, S, _, D = values.shape
    if scale is None:
        scale = 1.0 / math.sqrt(E)

    vmem_limit = _vmem_limit_bytes()
    tq, tk, hb = _choose_tiles(B, L, S, H, E, D, queries.dtype.itemsize,
                               q_tile_cap, kv_tile_cap, vmem_limit)

    # Ragged L / S: pad to the tile; the kv tail is masked to -inf in the kernel and
    # the padded q rows are sliced away after the call.
    L_pad = _round_up(L, tq)
    S_pad = _round_up(S, tk)
    if L_pad != L:
        queries = jnp.pad(queries, ((0, 0), (0, L_pad - L), (0, 0), (0, 0)))
    if S_pad != S:
        keys = jnp.pad(keys, ((0, 0), (0, S_pad - S), (0, 0), (0, 0)))
        values = jnp.pad(values, ((0, 0), (0, S_pad - S), (0, 0), (0, 0)))

    grid = (B, H // hb, L_pad // tq, S_pad // tk)
    exp_dtype = jnp.bfloat16 if queries.dtype == jnp.bfloat16 else jnp.float32
    # TODO(synk): for f32 production inputs the MXU operands could additionally be
    # cast to bf16 (keeping f32 accumulation) for ~4x matmul throughput if the
    # accuracy budget allows; kept in f32 here to stay close to the f32 reference.

    def _call(native_head_batch):
        kernel = functools.partial(
            _attn_kernel, scale=float(scale), kv_len=S, kv_tile=tk,
            needs_mask=(S_pad != S), exp_dtype=exp_dtype,
            native_head_batch=native_head_batch)
        return pl.pallas_call(
            kernel,
            out_shape=jax.ShapeDtypeStruct((B, L_pad, H * D), queries.dtype),
            grid_spec=pltpu.PrefetchScalarGridSpec(
                num_scalar_prefetch=0,
                grid=grid,
                in_specs=[
                    pl.BlockSpec((1, tq, hb, E), lambda b, h, qi, ki: (b, qi, h, 0)),
                    pl.BlockSpec((1, tk, hb, E), lambda b, h, qi, ki: (b, ki, h, 0)),
                    pl.BlockSpec((1, tk, hb, D), lambda b, h, qi, ki: (b, ki, h, 0)),
                ],
                out_specs=pl.BlockSpec((1, tq, hb * D),
                                       lambda b, h, qi, ki: (b, qi, h)),
                scratch_shapes=[
                    pltpu.VMEM((hb, tq, 1), jnp.float32),   # running max  m
                    pltpu.VMEM((hb, tq, 1), jnp.float32),   # running sum  l
                    pltpu.VMEM((hb, tq, D), jnp.float32),   # running accumulator
                ],
            ),
            compiler_params=pltpu.CompilerParams(
                dimension_semantics=("parallel", "parallel", "parallel", "arbitrary"),
                vmem_limit_bytes=vmem_limit,
            ),
        )(queries, keys, values)

    try:
        out_flat = _call(True)
    except Exception:
        # Fallback for Mosaic versions that reject dot_general with a non-leading
        # batch dim: do the explicit head-major relayout inside VMEM instead.
        out_flat = _call(False)

    out = out_flat.reshape(B, L_pad, H, D)   # metadata-only reshape
    if L_pad != L:
        out = out[:, :L]
    return out


# ----------------------------------------------------------------------- reference


def _reference(queries, keys, values):
    E = queries.shape[-1]
    scale = 1.0 / math.sqrt(E)
    scores = jnp.einsum("blhe,bshe->bhls", queries, keys)
    attn = jax.nn.softmax(scale * scores, axis=-1)
    return jnp.einsum("bhls,bshd->blhd", attn, values)


if __name__ == "__main__":
    B, L, S, H, E, D = 2, 8, 8, 4, 32, 32
    key = jax.random.PRNGKey(0)
    kq, kk, kv = jax.random.split(key, 3)
    queries = jax.random.normal(kq, (B, L, H, E), dtype=jnp.float32)
    keys = jax.random.normal(kk, (B, S, H, E), dtype=jnp.float32)
    values = jax.random.normal(kv, (B, S, H, D), dtype=jnp.float32)

    out = jax.block_until_ready(full_attention(queries, keys, values, attn_mask=None))
    ref = _reference(queries, keys, values)
    assert out.shape == (B, L, H, D)
    assert jnp.allclose(out, ref, atol=5e-3, rtol=5e-3), \
        float(jnp.max(jnp.abs(out - ref)))

    # Ragged shapes exercise the padded-q / masked-kv-tail path.
    Lr, Sr = 10, 10
    qr = jax.random.normal(kq, (B, Lr, H, E), dtype=jnp.float32)
    kr = jax.random.normal(kk, (B, Sr, H, E), dtype=jnp.float32)
    vr = jax.random.normal(kv, (B, Sr, H, D), dtype=jnp.float32)
    out_r = jax.block_until_ready(full_attention(qr, kr, vr, attn_mask=None))
    ref_r = _reference(qr, kr, vr)
    assert out_r.shape == (B, Lr, H, D)
    assert jnp.allclose(out_r, ref_r, atol=5e-3, rtol=5e-3), \
        float(jnp.max(jnp.abs(out_r - ref_r)))

    # Native-dtype MXU path: bf16 inputs, bf16 exp, f32 accumulation in the kernel.
    q16, k16, v16 = (x.astype(jnp.bfloat16) for x in (queries, keys, values))
    out16 = jax.block_until_ready(full_attention(q16, k16, v16, attn_mask=None))
    ref16 = _reference(q16.astype(jnp.float32), k16.astype(jnp.float32),
                       v16.astype(jnp.float32))
    assert out16.shape == (B, L, H, D)
    assert jnp.allclose(out16.astype(jnp.float32), ref16, atol=3e-2, rtol=3e-2), \
        float(jnp.max(jnp.abs(out16.astype(jnp.float32) - ref16)))

    print("KERNEL_OK")
</pallas_src>

<mosaic_0001>
module attributes {stable_mosaic.version = 11 : i64} {
  func.func @_attn_kernel(%arg0: i32, %arg1: i32, %arg2: i32, %arg3: i32, %arg4: memref<1x8x4x32xf32, #tpu.memory_space<vmem>>, %arg5: memref<1x8x4x32xf32, #tpu.memory_space<vmem>>, %arg6: memref<1x8x4x32xf32, #tpu.memory_space<vmem>>, %arg7: memref<1x8x128xf32, #tpu.memory_space<vmem>>, %arg8: memref<4x8x1xf32, #tpu.memory_space<vmem>>, %arg9: memref<4x8x1xf32, #tpu.memory_space<vmem>>, %arg10: memref<4x8x32xf32, #tpu.memory_space<vmem>>) attributes {dimension_semantics = [#tpu.dimension_semantics<parallel>, #tpu.dimension_semantics<parallel>, #tpu.dimension_semantics<parallel>, #tpu.dimension_semantics<arbitrary>], iteration_bounds = array<i64: 2, 1, 1, 1>, scalar_prefetch = 0 : i64, scratch_operands = 3 : i64, tpu.core_type = #tpu.core_type<tc>, window_params = [{transform_indices = @transform_0, window_bounds = array<i64: 1, 8, 4, 32>}, {transform_indices = @transform_1, window_bounds = array<i64: 1, 8, 4, 32>}, {transform_indices = @transform_2, window_bounds = array<i64: 1, 8, 4, 32>}, {transform_indices = @transform_3, window_bounds = array<i64: 1, 8, 128>}]} {
    %c0_i32 = arith.constant 0 : i32
    %0 = arith.cmpi eq, %arg3, %c0_i32 : i32
    %1 = arith.extui %0 : i1 to i32
    %c0_i32_0 = arith.constant 0 : i32
    %2 = arith.cmpi ne, %1, %c0_i32_0 : i32
    scf.if %2 {
      %cst_36 = arith.constant 0xFF800000 : f32
      %37 = vector.broadcast %cst_36 : f32 to vector<4x8x1xf32>
      %c0_37 = arith.constant 0 : index
      %c0_38 = arith.constant 0 : index
      %c0_39 = arith.constant 0 : index
      %38 = vector.load %arg8[%c0_37, %c0_38, %c0_39] : memref<4x8x1xf32, #tpu.memory_space<vmem>>, vector<4x8x1xf32>
      tpu.vector_store %arg8[%c0_37, %c0_38, %c0_39], %37 {strides = array<i32>} : memref<4x8x1xf32, #tpu.memory_space<vmem>>, vector<4x8x1xf32>,
      %cst_40 = arith.constant 0.000000e+00 : f32
      %39 = vector.broadcast %cst_40 : f32 to vector<4x8x1xf32>
      %c0_41 = arith.constant 0 : index
      %c0_42 = arith.constant 0 : index
      %c0_43 = arith.constant 0 : index
      %40 = vector.load %arg9[%c0_41, %c0_42, %c0_43] : memref<4x8x1xf32, #tpu.memory_space<vmem>>, vector<4x8x1xf32>
      tpu.vector_store %arg9[%c0_41, %c0_42, %c0_43], %39 {strides = array<i32>} : memref<4x8x1xf32, #tpu.memory_space<vmem>>, vector<4x8x1xf32>,
      %cst_44 = arith.constant 0.000000e+00 : f32
      %41 = vector.broadcast %cst_44 : f32 to vector<4x8x32xf32>
      %c0_45 = arith.constant 0 : index
      %c0_46 = arith.constant 0 : index
      %c0_47 = arith.constant 0 : index
      %42 = vector.load %arg10[%c0_45, %c0_46, %c0_47] : memref<4x8x32xf32, #tpu.memory_space<vmem>>, vector<4x8x32xf32>
      tpu.vector_store %arg10[%c0_45, %c0_46, %c0_47], %41 {strides = array<i32>} : memref<4x8x32xf32, #tpu.memory_space<vmem>>, vector<4x8x32xf32>,
    } else {
    }
    %c0 = arith.constant 0 : index
    %c0_1 = arith.constant 0 : index
    %c0_2 = arith.constant 0 : index
    %c0_3 = arith.constant 0 : index
    %3 = vector.load %arg4[%c0, %c0_1, %c0_2, %c0_3] : memref<1x8x4x32xf32, #tpu.memory_space<vmem>>, vector<1x8x4x32xf32>
    %4 = vector.shape_cast %3 : vector<1x8x4x32xf32> to vector<8x4x32xf32>
    %cst = arith.constant 0.176776692 : f32
    %5 = vector.broadcast %cst : f32 to vector<8x4x32xf32>
    %6 = arith.mulf %4, %5 : vector<8x4x32xf32>
    %c0_4 = arith.constant 0 : index
    %c0_5 = arith.constant 0 : index
    %c0_6 = arith.constant 0 : index
    %c0_7 = arith.constant 0 : index
    %7 = vector.load %arg5[%c0_4, %c0_5, %c0_6, %c0_7] : memref<1x8x4x32xf32, #tpu.memory_space<vmem>>, vector<1x8x4x32xf32>
    %8 = vector.shape_cast %7 : vector<1x8x4x32xf32> to vector<8x4x32xf32>
    %c0_8 = arith.constant 0 : index
    %c0_9 = arith.constant 0 : index
    %c0_10 = arith.constant 0 : index
    %c0_11 = arith.constant 0 : index
    %9 = vector.load %arg6[%c0_8, %c0_9, %c0_10, %c0_11] : memref<1x8x4x32xf32, #tpu.memory_space<vmem>>, vector<1x8x4x32xf32>
    %10 = vector.shape_cast %9 : vector<1x8x4x32xf32> to vector<8x4x32xf32>
    %cst_12 = arith.constant dense<0.000000e+00> : vector<4x8x8xf32>
    %11 = tpu.matmul %6, %8, %cst_12 {dimension_numbers = #tpu.dot_dimension_numbers<[2], [2], [0], [0], [0, 1, 0, 0, 1, 0], [1], [1]>} : vector<8x4x32xf32>, vector<8x4x32xf32>, vector<4x8x8xf32> -> vector<4x8x8xf32>
    %c0_13 = arith.constant 0 : index
    %c0_14 = arith.constant 0 : index
    %c0_15 = arith.constant 0 : index
    %12 = vector.load %arg8[%c0_13, %c0_14, %c0_15] : memref<4x8x1xf32, #tpu.memory_space<vmem>>, vector<4x8x1xf32>
    %cst_16 = arith.constant dense<0xFF800000> : vector<4x8xf32>
    %13 = vector.multi_reduction <maximumf>, %11, %cst_16 [2] : vector<4x8x8xf32> to vector<4x8xf32>
    %14 = vector.shape_cast %13 : vector<4x8xf32> to vector<4x8x1xf32>
    %15 = arith.maximumf %12, %14 : vector<4x8x1xf32>
    %16 = arith.subf %12, %15 : vector<4x8x1xf32>
    %17 = math.exp %16 : vector<4x8x1xf32>
    %18 = vector.broadcast %15 : vector<4x8x1xf32> to vector<4x8x8xf32>
    %19 = arith.subf %11, %18 : vector<4x8x8xf32>
    %20 = math.exp %19 : vector<4x8x8xf32>
    %c0_17 = arith.constant 0 : index
    %c0_18 = arith.constant 0 : index
    %c0_19 = arith.constant 0 : index
    %21 = vector.load %arg9[%c0_17, %c0_18, %c0_19] : memref<4x8x1xf32, #tpu.memory_space<vmem>>, vector<4x8x1xf32>
    %22 = arith.mulf %17, %21 : vector<4x8x1xf32>
    %cst_20 = arith.constant dense<0.000000e+00> : vector<4x8xf32>
    %23 = vector.multi_reduction <add>, %20, %cst_20 [2] : vector<4x8x8xf32> to vector<4x8xf32>
    %24 = vector.shape_cast %23 : vector<4x8xf32> to vector<4x8x1xf32>
    %25 = arith.addf %22, %24 : vector<4x8x1xf32>
    %c0_21 = arith.constant 0 : index
    %c0_22 = arith.constant 0 : index
    %c0_23 = arith.constant 0 : index
    %26 = vector.load %arg9[%c0_21, %c0_22, %c0_23] : memref<4x8x1xf32, #tpu.memory_space<vmem>>, vector<4x8x1xf32>
    tpu.vector_store %arg9[%c0_21, %c0_22, %c0_23], %25 {strides = array<i32>} : memref<4x8x1xf32, #tpu.memory_space<vmem>>, vector<4x8x1xf32>,
    %cst_24 = arith.constant dense<0.000000e+00> : vector<4x8x32xf32>
    %27 = tpu.matmul %20, %10, %cst_24 {dimension_numbers = #tpu.dot_dimension_numbers<[2], [0], [1], [2], [0, 0, 0, 1, 1, 2], [0], [1]>} : vector<4x8x8xf32>, vector<8x4x32xf32>, vector<4x8x32xf32> -> vector<4x8x32xf32>
    %c0_25 = arith.constant 0 : index
    %c0_26 = arith.constant 0 : index
    %c0_27 = arith.constant 0 : index
    %28 = vector.load %arg10[%c0_25, %c0_26, %c0_27] : memref<4x8x32xf32, #tpu.memory_space<vmem>>, vector<4x8x32xf32>
    %29 = vector.broadcast %17 : vector<4x8x1xf32> to vector<4x8x32xf32>
    %30 = arith.mulf %29, %28 : vector<4x8x32xf32>
    %31 = arith.addf %30, %27 : vector<4x8x32xf32>
    %c0_28 = arith.constant 0 : index
    %c0_29 = arith.constant 0 : index
    %c0_30 = arith.constant 0 : index
    %32 = vector.load %arg10[%c0_28, %c0_29, %c0_30] : memref<4x8x32xf32, #tpu.memory_space<vmem>>, vector<4x8x32xf32>
    tpu.vector_store %arg10[%c0_28, %c0_29, %c0_30], %31 {strides = array<i32>} : memref<4x8x32xf32, #tpu.memory_space<vmem>>, vector<4x8x32xf32>,
    %c0_31 = arith.constant 0 : index
    %c0_32 = arith.constant 0 : index
    %c0_33 = arith.constant 0 : index
    %33 = vector.load %arg8[%c0_31, %c0_32, %c0_33] : memref<4x8x1xf32, #tpu.memory_space<vmem>>, vector<4x8x1xf32>
    tpu.vector_store %arg8[%c0_31, %c0_32, %c0_33], %15 {strides = array<i32>} : memref<4x8x1xf32, #tpu.memory_space<vmem>>, vector<4x8x1xf32>,
    %c0_i32_34 = arith.constant 0 : i32
    %34 = arith.cmpi eq, %arg3, %c0_i32_34 : i32
    %35 = arith.extui %34 : i1 to i32
    %c0_i32_35 = arith.constant 0 : i32
    %36 = arith.cmpi ne, %35, %c0_i32_35 : i32
    scf.if %36 {
      %c0_36 = arith.constant 0 : index
      %c0_37 = arith.constant 0 : index
      %c0_38 = arith.constant 0 : index
      %37 = vector.load %arg9[%c0_36, %c0_37, %c0_38] : memref<4x8x1xf32, #tpu.memory_space<vmem>>, vector<4x8x1xf32>
      %38 = tpu.reciprocal %37 : vector<4x8x1xf32> -> vector<4x8x1xf32>
      %c0_39 = arith.constant 0 : index
      %c0_40 = arith.constant 0 : index
      %c0_41 = arith.constant 0 : index
      %39 = vector.load %arg10[%c0_39, %c0_40, %c0_41] : memref<4x8x32xf32, #tpu.memory_space<vmem>>, vector<4x8x32xf32>
      %40 = vector.broadcast %38 : vector<4x8x1xf32> to vector<4x8x32xf32>
      %41 = arith.mulf %39, %40 : vector<4x8x32xf32>
      %42 = tpu.transpose %41, [1, 0, 2] : vector<4x8x32xf32> -> vector<8x4x32xf32>
      %43 = vector.shape_cast %42 : vector<8x4x32xf32> to vector<8x128xf32>
      %c0_42 = arith.constant 0 : index
      %c0_43 = arith.constant 0 : index
      %c0_44 = arith.constant 0 : index
      %44 = vector.load %arg7[%c0_42, %c0_43, %c0_44] : memref<1x8x128xf32, #tpu.memory_space<vmem>>, vector<1x8x128xf32>
      %45 = vector.shape_cast %44 : vector<1x8x128xf32> to vector<8x128xf32>
      %46 = vector.shape_cast %43 : vector<8x128xf32> to vector<1x8x128xf32>
      tpu.vector_store %arg7[%c0_42, %c0_43, %c0_44], %46 {strides = array<i32>} : memref<1x8x128xf32, #tpu.memory_space<vmem>>, vector<1x8x128xf32>,
    } else {
    }
    return
  }
  func.func @transform_0(%arg0: i32, %arg1: i32, %arg2: i32, %arg3: i32) -> (i32, i32, i32, i32) {
    %c0_i32 = arith.constant 0 : i32
    %c0_i32_0 = arith.constant 0 : i32
    return %arg0, %arg2, %arg1, %c0_i32 : i32, i32, i32, i32
  }
  func.func @transform_1(%arg0: i32, %arg1: i32, %arg2: i32, %arg3: i32) -> (i32, i32, i32, i32) {
    %c0_i32 = arith.constant 0 : i32
    %c0_i32_0 = arith.constant 0 : i32
    return %arg0, %arg3, %arg1, %c0_i32 : i32, i32, i32, i32
  }
  func.func @transform_2(%arg0: i32, %arg1: i32, %arg2: i32, %arg3: i32) -> (i32, i32, i32, i32) {
    %c0_i32 = arith.constant 0 : i32
    %c0_i32_0 = arith.constant 0 : i32
    return %arg0, %arg3, %arg1, %c0_i32 : i32, i32, i32, i32
  }
  func.func @transform_3(%arg0: i32, %arg1: i32, %arg2: i32, %arg3: i32) -> (i32, i32, i32) {
    %c0_i32 = arith.constant 0 : i32
    return %arg0, %arg2, %arg1 : i32, i32, i32
  }
}

module attributes {stable_mosaic.version = 11 : i64} {
  func.func @_attn_kernel(%arg0: i32, %arg1: i32, %arg2: i32, %arg3: i32, %arg4: memref<1x8x4x32xf32, #tpu.memory_space<vmem>>, %arg5: memref<1x8x4x32xf32, #tpu.memory_space<vmem>>, %arg6: memref<1x8x4x32xf32, #tpu.memory_space<vmem>>, %arg7: memref<1x8x128xf32, #tpu.memory_space<vmem>>, %arg8: memref<4x8x1xf32, #tpu.memory_space<vmem>>, %arg9: memref<4x8x1xf32, #tpu.memory_space<vmem>>, %arg10: memref<4x8x32xf32, #tpu.memory_space<vmem>>) attributes {dimension_semantics = [#tpu.dimension_semantics<parallel>, #tpu.dimension_semantics<parallel>, #tpu.dimension_semantics<parallel>, #tpu.dimension_semantics<arbitrary>], iteration_bounds = array<i64: 2, 1, 1, 1>, scalar_prefetch = 0 : i64, scratch_operands = 3 : i64, tpu.core_type = #tpu.core_type<tc>, window_params = [{transform_indices = @transform_0, window_bounds = array<i64: 1, 8, 4, 32>}, {transform_indices = @transform_1, window_bounds = array<i64: 1, 8, 4, 32>}, {transform_indices = @transform_2, window_bounds = array<i64: 1, 8, 4, 32>}, {transform_indices = @transform_3, window_bounds = array<i64: 1, 8, 128>}]} {
    %c0_i32 = arith.constant 0 : i32
    %0 = arith.cmpi eq, %arg3, %c0_i32 : i32
    %1 = arith.extui %0 : i1 to i32
    %c0_i32_0 = arith.constant 0 : i32
    %2 = arith.cmpi ne, %1, %c0_i32_0 : i32
    scf.if %2 {
      %cst_36 = arith.constant 0xFF800000 : f32
      %40 = vector.broadcast %cst_36 : f32 to vector<4x8x1xf32>
      %c0_37 = arith.constant 0 : index
      %c0_38 = arith.constant 0 : index
      %c0_39 = arith.constant 0 : index
      %41 = vector.load %arg8[%c0_37, %c0_38, %c0_39] : memref<4x8x1xf32, #tpu.memory_space<vmem>>, vector<4x8x1xf32>
      tpu.vector_store %arg8[%c0_37, %c0_38, %c0_39], %40 {strides = array<i32>} : memref<4x8x1xf32, #tpu.memory_space<vmem>>, vector<4x8x1xf32>,
      %cst_40 = arith.constant 0.000000e+00 : f32
      %42 = vector.broadcast %cst_40 : f32 to vector<4x8x1xf32>
      %c0_41 = arith.constant 0 : index
      %c0_42 = arith.constant 0 : index
      %c0_43 = arith.constant 0 : index
      %43 = vector.load %arg9[%c0_41, %c0_42, %c0_43] : memref<4x8x1xf32, #tpu.memory_space<vmem>>, vector<4x8x1xf32>
      tpu.vector_store %arg9[%c0_41, %c0_42, %c0_43], %42 {strides = array<i32>} : memref<4x8x1xf32, #tpu.memory_space<vmem>>, vector<4x8x1xf32>,
      %cst_44 = arith.constant 0.000000e+00 : f32
      %44 = vector.broadcast %cst_44 : f32 to vector<4x8x32xf32>
      %c0_45 = arith.constant 0 : index
      %c0_46 = arith.constant 0 : index
      %c0_47 = arith.constant 0 : index
      %45 = vector.load %arg10[%c0_45, %c0_46, %c0_47] : memref<4x8x32xf32, #tpu.memory_space<vmem>>, vector<4x8x32xf32>
      tpu.vector_store %arg10[%c0_45, %c0_46, %c0_47], %44 {strides = array<i32>} : memref<4x8x32xf32, #tpu.memory_space<vmem>>, vector<4x8x32xf32>,
    } else {
    }
    %c0 = arith.constant 0 : index
    %c0_1 = arith.constant 0 : index
    %c0_2 = arith.constant 0 : index
    %c0_3 = arith.constant 0 : index
    %3 = vector.load %arg4[%c0, %c0_1, %c0_2, %c0_3] : memref<1x8x4x32xf32, #tpu.memory_space<vmem>>, vector<1x8x4x32xf32>
    %4 = vector.shape_cast %3 : vector<1x8x4x32xf32> to vector<8x4x32xf32>
    %cst = arith.constant 0.176776692 : f32
    %5 = vector.broadcast %cst : f32 to vector<8x4x32xf32>
    %6 = arith.mulf %4, %5 : vector<8x4x32xf32>
    %c0_4 = arith.constant 0 : index
    %c0_5 = arith.constant 0 : index
    %c0_6 = arith.constant 0 : index
    %c0_7 = arith.constant 0 : index
    %7 = vector.load %arg5[%c0_4, %c0_5, %c0_6, %c0_7] : memref<1x8x4x32xf32, #tpu.memory_space<vmem>>, vector<1x8x4x32xf32>
    %8 = vector.shape_cast %7 : vector<1x8x4x32xf32> to vector<8x4x32xf32>
    %c0_8 = arith.constant 0 : index
    %c0_9 = arith.constant 0 : index
    %c0_10 = arith.constant 0 : index
    %c0_11 = arith.constant 0 : index
    %9 = vector.load %arg6[%c0_8, %c0_9, %c0_10, %c0_11] : memref<1x8x4x32xf32, #tpu.memory_space<vmem>>, vector<1x8x4x32xf32>
    %10 = vector.shape_cast %9 : vector<1x8x4x32xf32> to vector<8x4x32xf32>
    %11 = tpu.transpose %6, [1, 0, 2] : vector<8x4x32xf32> -> vector<4x8x32xf32>
    %12 = tpu.transpose %8, [1, 0, 2] : vector<8x4x32xf32> -> vector<4x8x32xf32>
    %cst_12 = arith.constant dense<0.000000e+00> : vector<4x8x8xf32>
    %13 = tpu.matmul %11, %12, %cst_12 {dimension_numbers = #tpu.dot_dimension_numbers<[2], [2], [1], [1], [0, 0, 0, 1, 1, 1], [0], [0]>} : vector<4x8x32xf32>, vector<4x8x32xf32>, vector<4x8x8xf32> -> vector<4x8x8xf32>
    %c0_13 = arith.constant 0 : index
    %c0_14 = arith.constant 0 : index
    %c0_15 = arith.constant 0 : index
    %14 = vector.load %arg8[%c0_13, %c0_14, %c0_15] : memref<4x8x1xf32, #tpu.memory_space<vmem>>, vector<4x8x1xf32>
    %cst_16 = arith.constant dense<0xFF800000> : vector<4x8xf32>
    %15 = vector.multi_reduction <maximumf>, %13, %cst_16 [2] : vector<4x8x8xf32> to vector<4x8xf32>
    %16 = vector.shape_cast %15 : vector<4x8xf32> to vector<4x8x1xf32>
    %17 = arith.maximumf %14, %16 : vector<4x8x1xf32>
    %18 = arith.subf %14, %17 : vector<4x8x1xf32>
    %19 = math.exp %18 : vector<4x8x1xf32>
    %20 = vector.broadcast %17 : vector<4x8x1xf32> to vector<4x8x8xf32>
    %21 = arith.subf %13, %20 : vector<4x8x8xf32>
    %22 = math.exp %21 : vector<4x8x8xf32>
    %c0_17 = arith.constant 0 : index
    %c0_18 = arith.constant 0 : index
    %c0_19 = arith.constant 0 : index
    %23 = vector.load %arg9[%c0_17, %c0_18, %c0_19] : memref<4x8x1xf32, #tpu.memory_space<vmem>>, vector<4x8x1xf32>
    %24 = arith.mulf %19, %23 : vector<4x8x1xf32>
    %cst_20 = arith.constant dense<0.000000e+00> : vector<4x8xf32>
    %25 = vector.multi_reduction <add>, %22, %cst_20 [2] : vector<4x8x8xf32> to vector<4x8xf32>
    %26 = vector.shape_cast %25 : vector<4x8xf32> to vector<4x8x1xf32>
    %27 = arith.addf %24, %26 : vector<4x8x1xf32>
    %c0_21 = arith.constant 0 : index
    %c0_22 = arith.constant 0 : index
    %c0_23 = arith.constant 0 : index
    %28 = vector.load %arg9[%c0_21, %c0_22, %c0_23] : memref<4x8x1xf32, #tpu.memory_space<vmem>>, vector<4x8x1xf32>
    tpu.vector_store %arg9[%c0_21, %c0_22, %c0_23], %27 {strides = array<i32>} : memref<4x8x1xf32, #tpu.memory_space<vmem>>, vector<4x8x1xf32>,
    %29 = tpu.transpose %10, [1, 0, 2] : vector<8x4x32xf32> -> vector<4x8x32xf32>
    %cst_24 = arith.constant dense<0.000000e+00> : vector<4x8x32xf32>
    %30 = tpu.matmul %22, %29, %cst_24 {dimension_numbers = #tpu.dot_dimension_numbers<[2], [1], [1], [2], [0, 0, 0, 1, 1, 2], [0], [0]>} : vector<4x8x8xf32>, vector<4x8x32xf32>, vector<4x8x32xf32> -> vector<4x8x32xf32>
    %c0_25 = arith.constant 0 : index
    %c0_26 = arith.constant 0 : index
    %c0_27 = arith.constant 0 : index
    %31 = vector.load %arg10[%c0_25, %c0_26, %c0_27] : memref<4x8x32xf32, #tpu.memory_space<vmem>>, vector<4x8x32xf32>
    %32 = vector.broadcast %19 : vector<4x8x1xf32> to vector<4x8x32xf32>
    %33 = arith.mulf %32, %31 : vector<4x8x32xf32>
    %34 = arith.addf %33, %30 : vector<4x8x32xf32>
    %c0_28 = arith.constant 0 : index
    %c0_29 = arith.constant 0 : index
    %c0_30 = arith.constant 0 : index
    %35 = vector.load %arg10[%c0_28, %c0_29, %c0_30] : memref<4x8x32xf32, #tpu.memory_space<vmem>>, vector<4x8x32xf32>
    tpu.vector_store %arg10[%c0_28, %c0_29, %c0_30], %34 {strides = array<i32>} : memref<4x8x32xf32, #tpu.memory_space<vmem>>, vector<4x8x32xf32>,
    %c0_31 = arith.constant 0 : index
    %c0_32 = arith.constant 0 : index
    %c0_33 = arith.constant 0 : index
    %36 = vector.load %arg8[%c0_31, %c0_32, %c0_33] : memref<4x8x1xf32, #tpu.memory_space<vmem>>, vector<4x8x1xf32>
    tpu.vector_store %arg8[%c0_31, %c0_32, %c0_33], %17 {strides = array<i32>} : memref<4x8x1xf32, #tpu.memory_space<vmem>>, vector<4x8x1xf32>,
    %c0_i32_34 = arith.constant 0 : i32
    %37 = arith.cmpi eq, %arg3, %c0_i32_34 : i32
    %38 = arith.extui %37 : i1 to i32
    %c0_i32_35 = arith.constant 0 : i32
    %39 = arith.cmpi ne, %38, %c0_i32_35 : i32
    scf.if %39 {
      %c0_36 = arith.constant 0 : index
      %c0_37 = arith.constant 0 : index
      %c0_38 = arith.constant 0 : index
      %40 = vector.load %arg9[%c0_36, %c0_37, %c0_38] : memref<4x8x1xf32, #tpu.memory_space<vmem>>, vector<4x8x1xf32>
      %41 = tpu.reciprocal %40 : vector<4x8x1xf32> -> vector<4x8x1xf32>
      %c0_39 = arith.constant 0 : index
      %c0_40 = arith.constant 0 : index
      %c0_41 = arith.constant 0 : index
      %42 = vector.load %arg10[%c0_39, %c0_40, %c0_41] : memref<4x8x32xf32, #tpu.memory_space<vmem>>, vector<4x8x32xf32>
      %43 = vector.broadcast %41 : vector<4x8x1xf32> to vector<4x8x32xf32>
      %44 = arith.mulf %42, %43 : vector<4x8x32xf32>
      %45 = tpu.transpose %44, [1, 0, 2] : vector<4x8x32xf32> -> vector<8x4x32xf32>
      %46 = vector.shape_cast %45 : vector<8x4x32xf32> to vector<8x128xf32>
      %c0_42 = arith.constant 0 : index
      %c0_43 = arith.constant 0 : index
      %c0_44 = arith.constant 0 : index
      %47 = vector.load %arg7[%c0_42, %c0_43, %c0_44] : memref<1x8x128xf32, #tpu.memory_space<vmem>>, vector<1x8x128xf32>
      %48 = vector.shape_cast %47 : vector<1x8x128xf32> to vector<8x128xf32>
      %49 = vector.shape_cast %46 : vector<8x128xf32> to vector<1x8x128xf32>
      tpu.vector_store %arg7[%c0_42, %c0_43, %c0_44], %49 {strides = array<i32>} : memref<1x8x128xf32, #tpu.memory_space<vmem>>, vector<1x8x128xf32>,
    } else {
    }
    return
  }
  func.func @transform_0(%arg0: i32, %arg1: i32, %arg2: i32, %arg3: i32) -> (i32, i32, i32, i32) {
    %c0_i32 = arith.constant 0 : i32
    %c0_i32_0 = arith.constant 0 : i32
    return %arg0, %arg2, %arg1, %c0_i32 : i32, i32, i32, i32
  }
  func.func @transform_1(%arg0: i32, %arg1: i32, %arg2: i32, %arg3: i32) -> (i32, i32, i32, i32) {
    %c0_i32 = arith.constant 0 : i32
    %c0_i32_0 = arith.constant 0 : i32
    return %arg0, %arg3, %arg1, %c0_i32 : i32, i32, i32, i32
  }
  func.func @transform_2(%arg0: i32, %arg1: i32, %arg2: i32, %arg3: i32) -> (i32, i32, i32, i32) {
    %c0_i32 = arith.constant 0 : i32
    %c0_i32_0 = arith.constant 0 : i32
    return %arg0, %arg3, %arg1, %c0_i32 : i32, i32, i32, i32
  }
  func.func @transform_3(%arg0: i32, %arg1: i32, %arg2: i32, %arg3: i32) -> (i32, i32, i32) {
    %c0_i32 = arith.constant 0 : i32
    return %arg0, %arg2, %arg1 : i32, i32, i32
  }
}

</mosaic_0001>

<llo_original>
// kernel: tpu_custom_call.1
$region0: #{tpu_custom_call.1}
  #allocation0 [shape = 'u32[]', space=smem, size = 0x4, offset = 0x4, fixed_abs, tag = 'smem constant byte address 0x4 - core index']
  #allocation1 [shape = 'u32[144,128]{1,0:T(1,128)}', space=vmem, size = 0x12000, scoped, tag = 'internal scratch']
  #allocation2 [shape = 'f32[4,8,1]{2,1,0:T(8,128)}', space=vmem, size = 0x4000, scoped, tag = 'scratch operand']
  #allocation3 [shape = 'f32[4,8,1]{2,1,0:T(8,128)}', space=vmem, size = 0x4000, scoped, tag = 'scratch operand']
  #allocation4 [shape = 'f32[4,8,32]{2,1,0:T(8,128)}', space=vmem, size = 0x4000, scoped, tag = 'scratch operand']
  %s0 = inlined_call_operand.hbm [shape: f32[2,8,4,32], index: 0, kind: input, shape index: {}]
  %s1 = inlined_call_operand.hbm [shape: f32[2,8,4,32], index: 1, kind: input, shape index: {}]
  %s2 = inlined_call_operand.hbm [shape: f32[2,8,4,32], index: 2, kind: input, shape index: {}]
  %s3 = inlined_call_operand.hbm [shape: f32[2,8,128], index: 3, kind: output, shape index: {}]
  %s4 = sld [smem:[#allocation0]]
  $region65: #{tpu_custom_call.1} parent=0
    _
  %s6 = ssub.s32 1, %s4
  %s7 = scalar_select 0, %s6, %s4
  $region1: #{tpu_custom_call.1} parent=0
    #allocation5 [shape = 'u8[32768]{0}', space=vmem, size = 0x8000, scoped, tag = 'input window, operand 0']
    #allocation6 [shape = 's32[2]{0}', space=sflag, size = 0x8, scoped, tag = 'scoped memory for tpu_custom_call.1']
    #allocation7 [shape = 's32[2]{0}', space=sflag, size = 0x8, scoped, tag = 'scoped memory for tpu_custom_call.1']
    #allocation8 [shape = 'u8[32768]{0}', space=vmem, size = 0x8000, scoped, tag = 'input window, operand 1']
    #allocation9 [shape = 's32[2]{0}', space=sflag, size = 0x8, scoped, tag = 'scoped memory for tpu_custom_call.1']
    #allocation10 [shape = 'u8[32768]{0}', space=vmem, size = 0x8000, scoped, tag = 'input window, operand 2']
    #allocation11 [shape = 'u8[8192]{0}', space=vmem, size = 0x2000, scoped, tag = 'output window, operand 0']
    %8 = vsyncpa [#allocation6], 0
    %s9 = scalar_lea.sflag [#allocation6], 1
    %10 = vsyncpa %s9, 0
    %11 = vsyncpa [#allocation9], 0
    %s12 = scalar_lea.sflag [#allocation9], 1
    %13 = vsyncpa %s12, 0
    %14 = vsyncpa [#allocation7], 0
    %s15 = scalar_lea.sflag [#allocation7], 1
    %16 = vsyncpa %s15, 0
    loop: start=0, step=1, limit=4
    $region2: #{tpu_custom_call.1} parent=1 // loop_pre_header
      _
    $region3: #{tpu_custom_call.1} parent=1 // loop_header
      %s18 = sphi 0, %s22
      %p19 = scmp.ge.s32.totalorder %s18, 4
      %s25 = sphi 0, %s51
      %s26 = sphi 0, %s47
      %s27 = sphi 0, %s43
      %s28 = sphi 0, %s39
      %s29 = sphi 0, %s25
      %s30 = sphi 0, %s26
      %s31 = sphi 0, %s27
      %s32 = sphi 0, %s28
      %s33 = sphi 0, %s29
      %s34 = sphi 0, %s30
      %s35 = sphi 0, %s31
      %s36 = sphi 0, %s32
      %s58 = sphi 0, %s60
      %s61 = sphi 0, %s58
      %s62 = sphi 0, %s61
      %s78 = sphi 0, %s62
      %s88 = sphi 0, %s90
      %s91 = sphi 0, %s88
      %s92 = sphi 0, %s91
      %s108 = sphi 0, %s92
      %s118 = sphi 0, %s120
      %s121 = sphi 0, %s118
      %s122 = sphi 0, %s121
      %s138 = sphi 0, %s122
      %s148 = sphi 0, %s150
      %s151 = sphi 0, %s148
      %s152 = sphi 0, %s151
      %s168 = sphi 0, %s152
    $region4: #{tpu_custom_call.1} parent=1 // loop_header_branch
      %21 = sbr.rel (%p19) target = $region8
    $region5: #{tpu_custom_call.1} parent=1 // loop_body
      %s23 = ssub.s32 %s18, 1
      %s24 = ssub.s32 %s18, 2
      %s37 = sadd.s32 1, %s28
      %p38 = scmp.ge.s32.totalorder %s37, 1
      %s39 = scalar_select %p38, 0, %s37
      %s40 = sadd.s32 1, %s27
      %s41 = scalar_select %p38, %s40, %s27
      %p42 = scmp.ge.s32.totalorder %s41, 1
      %s43 = scalar_select %p42, 0, %s41
      %s44 = sadd.s32 1, %s26
      %s45 = scalar_select %p42, %s44, %s26
      %p46 = scmp.ge.s32.totalorder %s45, 1
      %s47 = scalar_select %p46, 0, %s45
      %s48 = sadd.s32 1, %s25
      %s49 = scalar_select %p46, %s48, %s25
      %p50 = scmp.ge.s32.totalorder %s49, 2
      %s51 = scalar_select %p50, 0, %s49
      %s52 = ssub.s32 %s25, %s51
      %s53 = ssub.s32 %s27, %s43
      %s54 = sor.u32 %s52, %s53
      %s55 = ssub.s32 %s26, %s47
      %s56 = sor.u32 %s54, %s55
      %p57 = scmp.eq.s32.totalorder %s56, 0
      %s59 = sadd.s32 %s58, 1
      %s60 = scalar_select %p57, %s58, %s59
      %p63 = pneg %p57
      %p64 = scmp.eq.s32.totalorder %s18, 1
      %p65 = por %p63, %p64
      %p66 = scmp.ne.s32.totalorder %s58, %s61
      %p67 = scmp.eq.s32.totalorder %s18, 0
      %p68 = por %p66, %p67
      %p69 = scmp.ne.s32.totalorder %s58, %s61
      %p70 = scmp.eq.s32.totalorder %s23, 1
      %p71 = por %p69, %p70
      %p72 = scmp.ne.s32.totalorder %s61, %s62
      %p73 = scmp.eq.s32.totalorder %s23, 0
      %p74 = por %p72, %p73
      %p75 = scmp.ne.s32.totalorder %s61, %s62
      %p76 = scmp.eq.s32.totalorder %s24, 1
      %p77 = por %p75, %p76
      %p79 = scmp.ne.s32.totalorder %s62, %s78
      %p80 = scmp.eq.s32.totalorder %s24, 0
      %p81 = por %p79, %p80
      %s82 = ssub.s32 %s25, %s51
      %s83 = ssub.s32 %s28, %s39
      %s84 = sor.u32 %s82, %s83
      %s85 = ssub.s32 %s26, %s47
      %s86 = sor.u32 %s84, %s85
      %p87 = scmp.eq.s32.totalorder %s86, 0
      %s89 = sadd.s32 %s88, 1
      %s90 = scalar_select %p87, %s88, %s89
      %p93 = pneg %p87
      %p94 = scmp.eq.s32.totalorder %s18, 1
      %p95 = por %p93, %p94
      %p96 = scmp.ne.s32.totalorder %s88, %s91
      %p97 = scmp.eq.s32.totalorder %s18, 0
      %p98 = por %p96, %p97
      %p99 = scmp.ne.s32.totalorder %s88, %s91
      %p100 = scmp.eq.s32.totalorder %s23, 1
      %p101 = por %p99, %p100
      %p102 = scmp.ne.s32.totalorder %s91, %s92
      %p103 = scmp.eq.s32.totalorder %s23, 0
      %p104 = por %p102, %p103
      %p105 = scmp.ne.s32.totalorder %s91, %s92
      %p106 = scmp.eq.s32.totalorder %s24, 1
      %p107 = por %p105, %p106
      %p109 = scmp.ne.s32.totalorder %s92, %s108
      %p110 = scmp.eq.s32.totalorder %s24, 0
      %p111 = por %p109, %p110
      %s112 = ssub.s32 %s25, %s51
      %s113 = ssub.s32 %s28, %s39
      %s114 = sor.u32 %s112, %s113
      %s115 = ssub.s32 %s26, %s47
      %s116 = sor.u32 %s114, %s115
      %p117 = scmp.eq.s32.totalorder %s116, 0
      %s119 = sadd.s32 %s118, 1
      %s120 = scalar_select %p117, %s118, %s119
      %p123 = pneg %p117
      %p124 = scmp.eq.s32.totalorder %s18, 1
      %p125 = por %p123, %p124
      %p126 = scmp.ne.s32.totalorder %s118, %s121
      %p127 = scmp.eq.s32.totalorder %s18, 0
      %p128 = por %p126, %p127
      %p129 = scmp.ne.s32.totalorder %s118, %s121
      %p130 = scmp.eq.s32.totalorder %s23, 1
      %p131 = por %p129, %p130
      %p132 = scmp.ne.s32.totalorder %s121, %s122
      %p133 = scmp.eq.s32.totalorder %s23, 0
      %p134 = por %p132, %p133
      %p135 = scmp.ne.s32.totalorder %s121, %s122
      %p136 = scmp.eq.s32.totalorder %s24, 1
      %p137 = por %p135, %p136
      %p139 = scmp.ne.s32.totalorder %s122, %s138
      %p140 = scmp.eq.s32.totalorder %s24, 0
      %p141 = por %p139, %p140
      %s142 = ssub.s32 %s25, %s51
      %s143 = ssub.s32 %s27, %s43
      %s144 = sor.u32 %s142, %s143
      %s145 = ssub.s32 %s26, %s47
      %s146 = sor.u32 %s144, %s145
      %p147 = scmp.eq.s32.totalorder %s146, 0
      %s149 = sadd.s32 %s148, 1
      %s150 = scalar_select %p147, %s148, %s149
      %p153 = pneg %p147
      %p154 = scmp.eq.s32.totalorder %s18, 1
      %p155 = por %p153, %p154
      %p156 = scmp.ne.s32.totalorder %s148, %s151
      %p157 = scmp.eq.s32.totalorder %s18, 0
      %p158 = por %p156, %p157
      %p159 = scmp.ne.s32.totalorder %s148, %s151
      %p160 = scmp.eq.s32.totalorder %s23, 1
      %p161 = por %p159, %p160
      %p162 = scmp.ne.s32.totalorder %s151, %s152
      %p163 = scmp.eq.s32.totalorder %s23, 0
      %p164 = por %p162, %p163
      %p165 = scmp.ne.s32.totalorder %s151, %s152
      %p166 = scmp.eq.s32.totalorder %s24, 1
      %p167 = por %p165, %p166
      %p169 = scmp.ne.s32.totalorder %s152, %s168
      %p170 = scmp.eq.s32.totalorder %s24, 0
      %p171 = por %p169, %p170
      %p172 = scmp.le.s32.totalorder 1, %s18
      %p173 = scmp.lt.s32.totalorder %s18, 3
      %p174 = pnand %p172, %p173
      %p175 = pneg %p174
      // Predicated region
      $region9: #{tpu_custom_call.1} parent=5 // pred_check
        _
      $region10: #{tpu_custom_call.1} parent=5 // pred_check_branch
        %177 = sbr.rel (%p174) target = $region12
      $region11: #{tpu_custom_call.1} parent=5 // pred_region
        %s178 = ssub.s32 %s18, 1
      $region12: #{tpu_custom_call.1} parent=5 // pred_fallthru
        _
      %p179 = scmp.lt.s32.totalorder %s18, 2
      // Predicated region
      $region13: #{tpu_custom_call.1} parent=5 // pred_check
        %p180 = pneg %p179
      $region14: #{tpu_custom_call.1} parent=5 // pred_check_branch
        %182 = sbr.rel (%p180) target = $region16
      $region15: #{tpu_custom_call.1} parent=5 // pred_region
        // Predicated region
        $region17: #{tpu_custom_call.1} parent=15 // pred_check
          %p183 = pneg %p68
        $region18: #{tpu_custom_call.1} parent=15 // pred_check_branch
          %185 = sbr.rel (%p183) target = $region20
        $region19: #{tpu_custom_call.1} parent=15 // pred_region
          %s186 = sand.u32 %s58, 1
          %s187 = scalar_lea.sflag [#allocation6], %s186
          %s188 = sand.u32 %s58, 1
          %s189 = smul.addr %s188, 32
          %s190 = scalar_lea.vmem [#allocation5], %s189
          %s191 = smul.u32 8, %s27
          %s193 = ssub.s32 512, 512
          %194 = vsyncadd %s187, %s193
          %s195 = sadd.s32 %s26, %s191
          %s196 = smul.addr %s25, 8
          %s197 = sadd.s32 %s195, %s196
          %s198 = smul.addr %s197, 64
          %s199 = scalar_lea.hbm %s0, %s198
          %s200 = sshll.u32 %s190, 4
          %s201 = int_to_ptr.vmem [resolvable:$true] %s200
          %206 = dma.hbm_to_vmem [thread:$0]  %s199, 512, %s201, %s187, 64, 64, 4
        $region20: #{tpu_custom_call.1} parent=15 // pred_fallthru
          _
        // Predicated region
        $region21: #{tpu_custom_call.1} parent=15 // pred_check
          %p207 = pneg %p98
        $region22: #{tpu_custom_call.1} parent=15 // pred_check_branch
          %209 = sbr.rel (%p207) target = $region24
        $region23: #{tpu_custom_call.1} parent=15 // pred_region
          %s210 = sand.u32 %s18, 1
          %s211 = scalar_lea.sflag [#allocation9], %s210
          %s212 = sand.u32 %s88, 1
          %s213 = smul.addr %s212, 32
          %s214 = scalar_lea.vmem [#allocation8], %s213
          %s215 = smul.u32 8, %s28
          %s217 = ssub.s32 512, 512
          %218 = vsyncadd %s211, %s217
          %s219 = sadd.s32 %s26, %s215
          %s220 = smul.addr %s25, 8
          %s221 = sadd.s32 %s219, %s220
          %s222 = smul.addr %s221, 64
          %s223 = scalar_lea.hbm %s1, %s222
          %s224 = sshll.u32 %s214, 4
          %s225 = int_to_ptr.vmem [resolvable:$true] %s224
          %230 = dma.hbm_to_vmem [thread:$0]  %s223, 512, %s225, %s211, 64, 64, 4
        $region24: #{tpu_custom_call.1} parent=15 // pred_fallthru
          _
        // Predicated region
        $region25: #{tpu_custom_call.1} parent=15 // pred_check
          %p231 = pneg %p128
        $region26: #{tpu_custom_call.1} parent=15 // pred_check_branch
          %233 = sbr.rel (%p231) target = $region28
        $region27: #{tpu_custom_call.1} parent=15 // pred_region
          %s234 = sand.u32 %s18, 1
          %s235 = scalar_lea.sflag [#allocation9], %s234
          %s236 = sand.u32 %s118, 1
          %s237 = smul.addr %s236, 32
          %s238 = scalar_lea.vmem [#allocation10], %s237
          %s239 = smul.u32 8, %s28
          %s241 = ssub.s32 512, 512
          %242 = vsyncadd %s235, %s241
          %s243 = sadd.s32 %s26, %s239
          %s244 = smul.addr %s25, 8
          %s245 = sadd.s32 %s243, %s244
          %s246 = smul.addr %s245, 64
          %s247 = scalar_lea.hbm %s2, %s246
          %s248 = sshll.u32 %s238, 4
          %s249 = int_to_ptr.vmem [resolvable:$true] %s248
          %254 = dma.hbm_to_vmem [thread:$0]  %s247, 512, %s249, %s235, 64, 64, 4
        $region28: #{tpu_custom_call.1} parent=15 // pred_fallthru
          _
      $region16: #{tpu_custom_call.1} parent=5 // pred_fallthru
        _
      %p255 = scmp.le.s32.totalorder 1, %s18
      %p256 = scmp.lt.s32.totalorder %s18, 3
      %p257 = pnand %p255, %p256
      %p258 = pneg %p257
      // Predicated region
      $region29: #{tpu_custom_call.1} parent=5 // pred_check
        _
      $region30: #{tpu_custom_call.1} parent=5 // pred_check_branch
        %260 = sbr.rel (%p257) target = $region32
      $region31: #{tpu_custom_call.1} parent=5 // pred_region
        %s261 = ssub.s32 %s18, 1
        %s262 = sand.u32 %s61, 1
        %s263 = scalar_lea.sflag [#allocation6], %s262
        %s264 = sand.u32 %s61, 1
        %s265 = smul.addr %s264, 32
        %s266 = scalar_lea.vmem [#allocation5], %s265
        // Predicated region
        $region33: #{tpu_custom_call.1} parent=31 // pred_check
          %p267 = pneg %p74
        $region34: #{tpu_custom_call.1} parent=31 // pred_check_branch
          %269 = sbr.rel (%p267) target = $region36
        $region35: #{tpu_custom_call.1} parent=31 // pred_region
          %270 = dma.done %s263, 512
        $region36: #{tpu_custom_call.1} parent=31 // pred_fallthru
          _
        %s271 = sand.u32 %s23, 1
        %s272 = scalar_lea.sflag [#allocation9], %s271
        %s273 = sand.u32 %s91, 1
        %s274 = smul.addr %s273, 32
        %s275 = scalar_lea.vmem [#allocation8], %s274
        // Predicated region
        $region37: #{tpu_custom_call.1} parent=31 // pred_check
          %p276 = pneg %p104
        $region38: #{tpu_custom_call.1} parent=31 // pred_check_branch
          %278 = sbr.rel (%p276) target = $region40
        $region39: #{tpu_custom_call.1} parent=31 // pred_region
          %279 = dma.done %s272, 512
        $region40: #{tpu_custom_call.1} parent=31 // pred_fallthru
          _
        %s280 = sand.u32 %s23, 1
        %s281 = scalar_lea.sflag [#allocation9], %s280
        %s282 = sand.u32 %s121, 1
        %s283 = smul.addr %s282, 32
        %s284 = scalar_lea.vmem [#allocation10], %s283
        // Predicated region
        $region41: #{tpu_custom_call.1} parent=31 // pred_check
          %p285 = pneg %p134
        $region42: #{tpu_custom_call.1} parent=31 // pred_check_branch
          %287 = sbr.rel (%p285) target = $region44
        $region43: #{tpu_custom_call.1} parent=31 // pred_region
          %288 = dma.done %s281, 512
        $region44: #{tpu_custom_call.1} parent=31 // pred_fallthru
          _
        %s289 = sand.u32 %s61, 1
        %s290 = scalar_lea.sflag [#allocation6], %s289
        %s291 = sand.u32 %s61, 1
        %s292 = smul.addr %s291, 32
        %s293 = scalar_lea.vmem [#allocation5], %s292
        %p294 = pneg %p74
        %p295 = pneg %p71
        %s296 = sand.u32 %s23, 1
        %s297 = scalar_lea.sflag [#allocation9], %s296
        %s298 = sand.u32 %s91, 1
        %s299 = smul.addr %s298, 32
        %s300 = scalar_lea.vmem [#allocation8], %s299
        %p301 = pneg %p104
        %p302 = pneg %p101
        %s303 = sand.u32 %s23, 1
        %s304 = scalar_lea.sflag [#allocation9], %s303
        %s305 = sand.u32 %s121, 1
        %s306 = smul.addr %s305, 32
        %s307 = scalar_lea.vmem [#allocation10], %s306
        %p308 = pneg %p134
        %p309 = pneg %p131
        %p310 = pneg %p164
        %p311 = pneg %p161
        %s312 = sand.u32 %s151, 1
        %s313 = scalar_lea.sflag [#allocation7], %s312
        %s314 = sand.u32 %s151, 1
        %s315 = smul.addr %s314, 8
        %s316 = scalar_lea.vmem [#allocation11], %s315
        %s317 = smul.u32 8, %s31
        %s318 = smul.u32 8, %s32
        %s319 = smul.u32 8, %s32
        %p320 = scmp.eq.s32.totalorder %s32, 0
        // Predicated region
        $region45: #{tpu_custom_call.1} parent=31 // pred_check
          %p321 = pneg %p320
        $region46: #{tpu_custom_call.1} parent=31 // pred_check_branch
          %323 = sbr.rel (%p321) target = $region48
        $region47: #{tpu_custom_call.1} parent=31 // pred_region
          %vm324 = vcmask 7168
          %325 = vst.msk [vmem:[#allocation2] sm:$0xff] %vm324, -inf
          %326 = vst.msk [vmem:[#allocation2 + $0x8] sm:$0xff] %vm324, -inf
          %327 = vst.msk [vmem:[#allocation2 + $0x10] sm:$0xff] %vm324, -inf
          %328 = vst.msk [vmem:[#allocation2 + $0x18] sm:$0xff] %vm324, -inf
          %329 = vst.msk [vmem:[#allocation3] sm:$0xff] %vm324, 0.0
          %330 = vst.msk [vmem:[#allocation3 + $0x8] sm:$0xff] %vm324, 0.0
          %331 = vst.msk [vmem:[#allocation3 + $0x10] sm:$0xff] %vm324, 0.0
          %332 = vst.msk [vmem:[#allocation3 + $0x18] sm:$0xff] %vm324, 0.0
          %vm333 = vcmask 261120
          %334 = vst.msk [vmem:[#allocation4] sm:$0xff] %vm333, 0.0
          %335 = vst.msk [vmem:[#allocation4 + $0x8] sm:$0xff] %vm333, 0.0
          %336 = vst.msk [vmem:[#allocation4 + $0x10] sm:$0xff] %vm333, 0.0
          %337 = vst.msk [vmem:[#allocation4 + $0x18] sm:$0xff] %vm333, 0.0
        $region48: #{tpu_custom_call.1} parent=31 // pred_fallthru
          _
        %v338 = vld [vmem:[%s266] sm:$0xf]
        %v339 = vld [vmem:[%s266 + $0x4] sm:$0xf]
        %v340 = vld [vmem:[%s266 + $0x8] sm:$0xf]
        %v341 = vld [vmem:[%s266 + $0xc] sm:$0xf]
        %v342 = vld [vmem:[%s266 + $0x10] sm:$0xf]
        %v343 = vld [vmem:[%s266 + $0x14] sm:$0xf]
        %v344 = vld [vmem:[%s266 + $0x18] sm:$0xf]
        %v345 = vld [vmem:[%s266 + $0x1c] sm:$0xf]
        %v346 = vmul.f32 %v338, 0.17677669
        %v347 = vmul.f32 %v339, 0.17677669
        %v348 = vmul.f32 %v340, 0.17677669
        %v349 = vmul.f32 %v341, 0.17677669
        %v350 = vmul.f32 %v342, 0.17677669
        %v351 = vmul.f32 %v343, 0.17677669
        %v352 = vmul.f32 %v344, 0.17677669
        %v353 = vmul.f32 %v345, 0.17677669
        %v354 = vld [vmem:[%s275] sm:$0xf]
        %v355 = vld [vmem:[%s275 + $0x4] sm:$0xf]
        %v356 = vld [vmem:[%s275 + $0x8] sm:$0xf]
        %v357 = vld [vmem:[%s275 + $0xc] sm:$0xf]
        %v358 = vld [vmem:[%s275 + $0x10] sm:$0xf]
        %v359 = vld [vmem:[%s275 + $0x14] sm:$0xf]
        %v360 = vld [vmem:[%s275 + $0x18] sm:$0xf]
        %v361 = vld [vmem:[%s275 + $0x1c] sm:$0xf]
        %v362 = vld [vmem:[%s284] sm:$0xf]
        %v363 = vld [vmem:[%s284 + $0x4] sm:$0xf]
        %v364 = vld [vmem:[%s284 + $0x8] sm:$0xf]
        %v365 = vld [vmem:[%s284 + $0xc] sm:$0xf]
        %v366 = vld [vmem:[%s284 + $0x10] sm:$0xf]
        %v367 = vld [vmem:[%s284 + $0x14] sm:$0xf]
        %v368 = vld [vmem:[%s284 + $0x18] sm:$0xf]
        %v369 = vld [vmem:[%s284 + $0x1c] sm:$0xf]
        %v370 = vcombine.low %v346, %v348
        %v372 = vunpack.c.l.s4 1983009808
        %v373 = vunpack.c.0.s8 %v372
        %v374 = vlaneseq
        %v375 = vshrl.u32 %v374, 7
        %v376 = vsub.s32 %v373, %v375
        %v377 = vrot.slane %v370, %v376
        %v378 = vcombine.low %v347, %v349
        %v380 = vunpack.c.l.s4 1983009808
        %v381 = vunpack.c.0.s8 %v380
        %v382 = vlaneseq
        %v383 = vshrl.u32 %v382, 7
        %v384 = vsub.s32 %v381, %v383
        %v385 = vrot.slane %v378, %v384
        %v386 = vcombine.low %v350, %v352
        %v388 = vunpack.c.l.s4 1983009808
        %v389 = vunpack.c.0.s8 %v388
        %v390 = vlaneseq
        %v391 = vshrl.u32 %v390, 7
        %v392 = vsub.s32 %v389, %v391
        %v393 = vrot.slane %v386, %v392
        %v394 = vcombine.low %v351, %v353
        %v396 = vunpack.c.l.s4 1983009808
        %v397 = vunpack.c.0.s8 %v396
        %v398 = vlaneseq
        %v399 = vshrl.u32 %v398, 7
        %v400 = vsub.s32 %v397, %v399
        %v401 = vrot.slane %v394, %v400
        %v402 = vcombine.low %v377, %v385
        %v403 = vcombine.high %v377, %v385
        %v405 = vunpack.c.l.s4 1934713408
        %v406 = vunpack.c.0.s8 %v405
        %v407 = vlaneseq
        %v408 = vshrl.u32 %v407, 7
        %v409 = vsub.s32 %v406, %v408
        %v410 = vrot.slane %v402, %v409
        %v412 = vunpack.c.l.s4 1934713408
        %v413 = vunpack.c.0.s8 %v412
        %v414 = vlaneseq
        %v415 = vshrl.u32 %v414, 7
        %v416 = vsub.s32 %v413, %v415
        %v417 = vrot.slane %v403, %v416
        %v418 = vcombine.low %v393, %v401
        %v419 = vcombine.high %v393, %v401
        %v421 = vunpack.c.l.s4 1934713408
        %v422 = vunpack.c.0.s8 %v421
        %v423 = vlaneseq
        %v424 = vshrl.u32 %v423, 7
        %v425 = vsub.s32 %v422, %v424
        %v426 = vrot.slane %v418, %v425
        %v428 = vunpack.c.l.s4 1934713408
        %v429 = vunpack.c.0.s8 %v428
        %v430 = vlaneseq
        %v431 = vshrl.u32 %v430, 7
        %v432 = vsub.s32 %v429, %v431
        %v433 = vrot.slane %v419, %v432
        %v434 = vcombine.low %v410, %v426
        %v435 = vcombine.high %v410, %v426
        %v436 = vcombine.low %v417, %v433
        %v437 = vcombine.high %v417, %v433
        %438 = vxpose.xlu0.b32.start [1/16] %v354, 128
        %439 = vxpose.xlu0.b32.cont [2/16] 0.0, 128
        %440 = vxpose.xlu0.b32.cont [3/16] 0.0, 128
        %441 = vxpose.xlu0.b32.cont [4/16] 0.0, 128
        %442 = vxpose.xlu0.b32.cont [5/16] 0.0, 128
        %443 = vxpose.xlu0.b32.cont [6/16] 0.0, 128
        %444 = vxpose.xlu0.b32.cont [7/16] 0.0, 128
        %445 = vxpose.xlu0.b32.cont [8/16] 0.0, 128
        %446 = vxpose.xlu0.b32.cont [9/16] 0.0, 128
        %447 = vxpose.xlu0.b32.cont [10/16] 0.0, 128
        %448 = vxpose.xlu0.b32.cont [11/16] 0.0, 128
        %449 = vxpose.xlu0.b32.cont [12/16] 0.0, 128
        %450 = vxpose.xlu0.b32.cont [13/16] 0.0, 128
        %451 = vxpose.xlu0.b32.cont [14/16] 0.0, 128
        %452 = vxpose.xlu0.b32.cont [15/16] 0.0, 128
        %453 = vxpose.xlu0.b32.end [16/16] 0.0, 128
        %v454 = vpop.trf.xlu0
        %v455 = vpop.trf.xlu0
        %v456 = vpop.trf.xlu0
        %v457 = vpop.trf.xlu0
        %v458 = vpop.trf.xlu0
        %v459 = vpop.trf.xlu0
        %v460 = vpop.trf.xlu0
        %v461 = vpop.trf.xlu0
        %v462 = vpop.trf.xlu0
        %v463 = vpop.trf.xlu0
        %v464 = vpop.trf.xlu0
        %v465 = vpop.trf.xlu0
        %v466 = vpop.trf.xlu0
        %v467 = vpop.trf.xlu0
        %v468 = vpop.trf.xlu0
        %v469 = vpop.trf.xlu0
        %470 = vxpose.xlu0.b32.start [1/16] %v355, 128
        %471 = vxpose.xlu0.b32.cont [2/16] 0.0, 128
        %472 = vxpose.xlu0.b32.cont [3/16] 0.0, 128
        %473 = vxpose.xlu0.b32.cont [4/16] 0.0, 128
        %474 = vxpose.xlu0.b32.cont [5/16] 0.0, 128
        %475 = vxpose.xlu0.b32.cont [6/16] 0.0, 128
        %476 = vxpose.xlu0.b32.cont [7/16] 0.0, 128
        %477 = vxpose.xlu0.b32.cont [8/16] 0.0, 128
        %478 = vxpose.xlu0.b32.cont [9/16] 0.0, 128
        %479 = vxpose.xlu0.b32.cont [10/16] 0.0, 128
        %480 = vxpose.xlu0.b32.cont [11/16] 0.0, 128
        %481 = vxpose.xlu0.b32.cont [12/16] 0.0, 128
        %482 = vxpose.xlu0.b32.cont [13/16] 0.0, 128
        %483 = vxpose.xlu0.b32.cont [14/16] 0.0, 128
        %484 = vxpose.xlu0.b32.cont [15/16] 0.0, 128
        %485 = vxpose.xlu0.b32.end [16/16] 0.0, 128
        %v486 = vpop.trf.xlu0
        %v487 = vpop.trf.xlu0
        %v488 = vpop.trf.xlu0
        %v489 = vpop.trf.xlu0
        %v490 = vpop.trf.xlu0
        %v491 = vpop.trf.xlu0
        %v492 = vpop.trf.xlu0
        %v493 = vpop.trf.xlu0
        %v494 = vpop.trf.xlu0
        %v495 = vpop.trf.xlu0
        %v496 = vpop.trf.xlu0
        %v497 = vpop.trf.xlu0
        %v498 = vpop.trf.xlu0
        %v499 = vpop.trf.xlu0
        %v500 = vpop.trf.xlu0
        %v501 = vpop.trf.xlu0
        %502 = vxpose.xlu0.b32.start [1/16] %v356, 128
        %503 = vxpose.xlu0.b32.cont [2/16] 0.0, 128
        %504 = vxpose.xlu0.b32.cont [3/16] 0.0, 128
        %505 = vxpose.xlu0.b32.cont [4/16] 0.0, 128
        %506 = vxpose.xlu0.b32.cont [5/16] 0.0, 128
        %507 = vxpose.xlu0.b32.cont [6/16] 0.0, 128
        %508 = vxpose.xlu0.b32.cont [7/16] 0.0, 128
        %509 = vxpose.xlu0.b32.cont [8/16] 0.0, 128
        %510 = vxpose.xlu0.b32.cont [9/16] 0.0, 128
        %511 = vxpose.xlu0.b32.cont [10/16] 0.0, 128
        %512 = vxpose.xlu0.b32.cont [11/16] 0.0, 128
        %513 = vxpose.xlu0.b32.cont [12/16] 0.0, 128
        %514 = vxpose.xlu0.b32.cont [13/16] 0.0, 128
        %515 = vxpose.xlu0.b32.cont [14/16] 0.0, 128
        %516 = vxpose.xlu0.b32.cont [15/16] 0.0, 128
        %517 = vxpose.xlu0.b32.end [16/16] 0.0, 128
        %v518 = vpop.trf.xlu0
        %v519 = vpop.trf.xlu0
        %v520 = vpop.trf.xlu0
        %v521 = vpop.trf.xlu0
        %v522 = vpop.trf.xlu0
        %v523 = vpop.trf.xlu0
        %v524 = vpop.trf.xlu0
        %v525 = vpop.trf.xlu0
        %v526 = vpop.trf.xlu0
        %v527 = vpop.trf.xlu0
        %v528 = vpop.trf.xlu0
        %v529 = vpop.trf.xlu0
        %v530 = vpop.trf.xlu0
        %v531 = vpop.trf.xlu0
        %v532 = vpop.trf.xlu0
        %v533 = vpop.trf.xlu0
        %534 = vxpose.xlu0.b32.start [1/16] %v357, 128
        %535 = vxpose.xlu0.b32.cont [2/16] 0.0, 128
        %536 = vxpose.xlu0.b32.cont [3/16] 0.0, 128
        %537 = vxpose.xlu0.b32.cont [4/16] 0.0, 128
        %538 = vxpose.xlu0.b32.cont [5/16] 0.0, 128
        %539 = vxpose.xlu0.b32.cont [6/16] 0.0, 128
        %540 = vxpose.xlu0.b32.cont [7/16] 0.0, 128
        %541 = vxpose.xlu0.b32.cont [8/16] 0.0, 128
        %542 = vxpose.xlu0.b32.cont [9/16] 0.0, 128
        %543 = vxpose.xlu0.b32.cont [10/16] 0.0, 128
        %544 = vxpose.xlu0.b32.cont [11/16] 0.0, 128
        %545 = vxpose.xlu0.b32.cont [12/16] 0.0, 128
        %546 = vxpose.xlu0.b32.cont [13/16] 0.0, 128
        %547 = vxpose.xlu0.b32.cont [14/16] 0.0, 128
        %548 = vxpose.xlu0.b32.cont [15/16] 0.0, 128
        %549 = vxpose.xlu0.b32.end [16/16] 0.0, 128
        %v550 = vpop.trf.xlu0
        %v551 = vpop.trf.xlu0
        %v552 = vpop.trf.xlu0
        %v553 = vpop.trf.xlu0
        %v554 = vpop.trf.xlu0
        %v555 = vpop.trf.xlu0
        %v556 = vpop.trf.xlu0
        %v557 = vpop.trf.xlu0
        %v558 = vpop.trf.xlu0
        %v559 = vpop.trf.xlu0
        %v560 = vpop.trf.xlu0
        %v561 = vpop.trf.xlu0
        %v562 = vpop.trf.xlu0
        %v563 = vpop.trf.xlu0
        %v564 = vpop.trf.xlu0
        %v565 = vpop.trf.xlu0
        %566 = vxpose.xlu0.b32.start [1/16] %v358, 128
        %567 = vxpose.xlu0.b32.cont [2/16] 0.0, 128
        %568 = vxpose.xlu0.b32.cont [3/16] 0.0, 128
        %569 = vxpose.xlu0.b32.cont [4/16] 0.0, 128
        %570 = vxpose.xlu0.b32.cont [5/16] 0.0, 128
        %571 = vxpose.xlu0.b32.cont [6/16] 0.0, 128
        %572 = vxpose.xlu0.b32.cont [7/16] 0.0, 128
        %573 = vxpose.xlu0.b32.cont [8/16] 0.0, 128
        %574 = vxpose.xlu0.b32.cont [9/16] 0.0, 128
        %575 = vxpose.xlu0.b32.cont [10/16] 0.0, 128
        %576 = vxpose.xlu0.b32.cont [11/16] 0.0, 128
        %577 = vxpose.xlu0.b32.cont [12/16] 0.0, 128
        %578 = vxpose.xlu0.b32.cont [13/16] 0.0, 128
        %579 = vxpose.xlu0.b32.cont [14/16] 0.0, 128
        %580 = vxpose.xlu0.b32.cont [15/16] 0.0, 128
        %581 = vxpose.xlu0.b32.end [16/16] 0.0, 128
        %v582 = vpop.trf.xlu0
        %v583 = vpop.trf.xlu0
        %v584 = vpop.trf.xlu0
        %v585 = vpop.trf.xlu0
        %v586 = vpop.trf.xlu0
        %v587 = vpop.trf.xlu0
        %v588 = vpop.trf.xlu0
        %v589 = vpop.trf.xlu0
        %v590 = vpop.trf.xlu0
        %v591 = vpop.trf.xlu0
        %v592 = vpop.trf.xlu0
        %v593 = vpop.trf.xlu0
        %v594 = vpop.trf.xlu0
        %v595 = vpop.trf.xlu0
        %v596 = vpop.trf.xlu0
        %v597 = vpop.trf.xlu0
        %598 = vxpose.xlu0.b32.start [1/16] %v359, 128
        %599 = vxpose.xlu0.b32.cont [2/16] 0.0, 128
        %600 = vxpose.xlu0.b32.cont [3/16] 0.0, 128
        %601 = vxpose.xlu0.b32.cont [4/16] 0.0, 128
        %602 = vxpose.xlu0.b32.cont [5/16] 0.0, 128
        %603 = vxpose.xlu0.b32.cont [6/16] 0.0, 128
        %604 = vxpose.xlu0.b32.cont [7/16] 0.0, 128
        %605 = vxpose.xlu0.b32.cont [8/16] 0.0, 128
        %606 = vxpose.xlu0.b32.cont [9/16] 0.0, 128
        %607 = vxpose.xlu0.b32.cont [10/16] 0.0, 128
        %608 = vxpose.xlu0.b32.cont [11/16] 0.0, 128
        %609 = vxpose.xlu0.b32.cont [12/16] 0.0, 128
        %610 = vxpose.xlu0.b32.cont [13/16] 0.0, 128
        %611 = vxpose.xlu0.b32.cont [14/16] 0.0, 128
        %612 = vxpose.xlu0.b32.cont [15/16] 0.0, 128
        %613 = vxpose.xlu0.b32.end [16/16] 0.0, 128
        %v614 = vpop.trf.xlu0
        %v615 = vpop.trf.xlu0
        %v616 = vpop.trf.xlu0
        %v617 = vpop.trf.xlu0
        %v618 = vpop.trf.xlu0
        %v619 = vpop.trf.xlu0
        %v620 = vpop.trf.xlu0
        %v621 = vpop.trf.xlu0
        %v622 = vpop.trf.xlu0
        %v623 = vpop.trf.xlu0
        %v624 = vpop.trf.xlu0
        %v625 = vpop.trf.xlu0
        %v626 = vpop.trf.xlu0
        %v627 = vpop.trf.xlu0
        %v628 = vpop.trf.xlu0
        %v629 = vpop.trf.xlu0
        %630 = vxpose.xlu0.b32.start [1/16] %v360, 128
        %631 = vxpose.xlu0.b32.cont [2/16] 0.0, 128
        %632 = vxpose.xlu0.b32.cont [3/16] 0.0, 128
        %633 = vxpose.xlu0.b32.cont [4/16] 0.0, 128
        %634 = vxpose.xlu0.b32.cont [5/16] 0.0, 128
        %635 = vxpose.xlu0.b32.cont [6/16] 0.0, 128
        %636 = vxpose.xlu0.b32.cont [7/16] 0.0, 128
        %637 = vxpose.xlu0.b32.cont [8/16] 0.0, 128
        %638 = vxpose.xlu0.b32.cont [9/16] 0.0, 128
        %639 = vxpose.xlu0.b32.cont [10/16] 0.0, 128
        %640 = vxpose.xlu0.b32.cont [11/16] 0.0, 128
        %641 = vxpose.xlu0.b32.cont [12/16] 0.0, 128
        %642 = vxpose.xlu0.b32.cont [13/16] 0.0, 128
        %643 = vxpose.xlu0.b32.cont [14/16] 0.0, 128
        %644 = vxpose.xlu0.b32.cont [15/16] 0.0, 128
        %645 = vxpose.xlu0.b32.end [16/16] 0.0, 128
        %v646 = vpop.trf.xlu0
        %v647 = vpop.trf.xlu0
        %v648 = vpop.trf.xlu0
        %v649 = vpop.trf.xlu0
        %v650 = vpop.trf.xlu0
        %v651 = vpop.trf.xlu0
        %v652 = vpop.trf.xlu0
        %v653 = vpop.trf.xlu0
        %v654 = vpop.trf.xlu0
        %v655 = vpop.trf.xlu0
        %v656 = vpop.trf.xlu0
        %v657 = vpop.trf.xlu0
        %v658 = vpop.trf.xlu0
        %v659 = vpop.trf.xlu0
        %v660 = vpop.trf.xlu0
        %v661 = vpop.trf.xlu0
        %662 = vxpose.xlu0.b32.start [1/16] %v361, 128
        %663 = vxpose.xlu0.b32.cont [2/16] 0.0, 128
        %664 = vxpose.xlu0.b32.cont [3/16] 0.0, 128
        %665 = vxpose.xlu0.b32.cont [4/16] 0.0, 128
        %666 = vxpose.xlu0.b32.cont [5/16] 0.0, 128
        %667 = vxpose.xlu0.b32.cont [6/16] 0.0, 128
        %668 = vxpose.xlu0.b32.cont [7/16] 0.0, 128
        %669 = vxpose.xlu0.b32.cont [8/16] 0.0, 128
        %670 = vxpose.xlu0.b32.cont [9/16] 0.0, 128
        %671 = vxpose.xlu0.b32.cont [10/16] 0.0, 128
        %672 = vxpose.xlu0.b32.cont [11/16] 0.0, 128
        %673 = vxpose.xlu0.b32.cont [12/16] 0.0, 128
        %674 = vxpose.xlu0.b32.cont [13/16] 0.0, 128
        %675 = vxpose.xlu0.b32.cont [14/16] 0.0, 128
        %676 = vxpose.xlu0.b32.cont [15/16] 0.0, 128
        %677 = vxpose.xlu0.b32.end [16/16] 0.0, 128
        %v678 = vpop.trf.xlu0
        %v679 = vpop.trf.xlu0
        %v680 = vpop.trf.xlu0
        %v681 = vpop.trf.xlu0
        %v682 = vpop.trf.xlu0
        %v683 = vpop.trf.xlu0
        %v684 = vpop.trf.xlu0
        %v685 = vpop.trf.xlu0
        %v686 = vpop.trf.xlu0
        %v687 = vpop.trf.xlu0
        %v688 = vpop.trf.xlu0
        %v689 = vpop.trf.xlu0
        %v690 = vpop.trf.xlu0
        %v691 = vpop.trf.xlu0
        %v692 = vpop.trf.xlu0
        %v693 = vpop.trf.xlu0
        %v694 = vcombine.low %v454, %v518
        %v695 = vcombine.high %v454, %v518
        %v697 = vunpack.c.l.s4 1983009808
        %v698 = vunpack.c.0.s8 %v697
        %v699 = vlaneseq
        %v700 = vshrl.u32 %v699, 7
        %v701 = vsub.s32 %v698, %v700
        %v702 = vrot.slane %v694, %v701
        %v704 = vunpack.c.l.s4 1983009808
        %v705 = vunpack.c.0.s8 %v704
        %v706 = vlaneseq
        %v707 = vshrl.u32 %v706, 7
        %v708 = vsub.s32 %v705, %v707
        %v709 = vrot.slane %v695, %v708
        %v710 = vcombine.low %v486, %v550
        %v711 = vcombine.high %v486, %v550
        %v713 = vunpack.c.l.s4 1983009808
        %v714 = vunpack.c.0.s8 %v713
        %v715 = vlaneseq
        %v716 = vshrl.u32 %v715, 7
        %v717 = vsub.s32 %v714, %v716
        %v718 = vrot.slane %v710, %v717
        %v720 = vunpack.c.l.s4 1983009808
        %v721 = vunpack.c.0.s8 %v720
        %v722 = vlaneseq
        %v723 = vshrl.u32 %v722, 7
        %v724 = vsub.s32 %v721, %v723
        %v725 = vrot.slane %v711, %v724
        %v726 = vcombine.low %v582, %v646
        %v727 = vcombine.high %v582, %v646
        %v729 = vunpack.c.l.s4 1983009808
        %v730 = vunpack.c.0.s8 %v729
        %v731 = vlaneseq
        %v732 = vshrl.u32 %v731, 7
        %v733 = vsub.s32 %v730, %v732
        %v734 = vrot.slane %v726, %v733
        %v736 = vunpack.c.l.s4 1983009808
        %v737 = vunpack.c.0.s8 %v736
        %v738 = vlaneseq
        %v739 = vshrl.u32 %v738, 7
        %v740 = vsub.s32 %v737, %v739
        %v741 = vrot.slane %v727, %v740
        %v742 = vcombine.low %v614, %v678
        %v743 = vcombine.high %v614, %v678
        %v745 = vunpack.c.l.s4 1983009808
        %v746 = vunpack.c.0.s8 %v745
        %v747 = vlaneseq
        %v748 = vshrl.u32 %v747, 7
        %v749 = vsub.s32 %v746, %v748
        %v750 = vrot.slane %v742, %v749
        %v752 = vunpack.c.l.s4 1983009808
        %v753 = vunpack.c.0.s8 %v752
        %v754 = vlaneseq
        %v755 = vshrl.u32 %v754, 7
        %v756 = vsub.s32 %v753, %v755
        %v757 = vrot.slane %v743, %v756
        %v758 = vcombine.low %v702, %v718
        %v759 = vcombine.high %v702, %v718
        %v761 = vunpack.c.l.s4 1934713408
        %v762 = vunpack.c.0.s8 %v761
        %v763 = vlaneseq
        %v764 = vshrl.u32 %v763, 7
        %v765 = vsub.s32 %v762, %v764
        %v766 = vrot.slane %v758, %v765
        %v768 = vunpack.c.l.s4 1934713408
        %v769 = vunpack.c.0.s8 %v768
        %v770 = vlaneseq
        %v771 = vshrl.u32 %v770, 7
        %v772 = vsub.s32 %v769, %v771
        %v773 = vrot.slane %v759, %v772
        %v774 = vcombine.low %v709, %v725
        %v775 = vcombine.high %v709, %v725
        %v777 = vunpack.c.l.s4 1934713408
        %v778 = vunpack.c.0.s8 %v777
        %v779 = vlaneseq
        %v780 = vshrl.u32 %v779, 7
        %v781 = vsub.s32 %v778, %v780
        %v782 = vrot.slane %v774, %v781
        %v784 = vunpack.c.l.s4 1934713408
        %v785 = vunpack.c.0.s8 %v784
        %v786 = vlaneseq
        %v787 = vshrl.u32 %v786, 7
        %v788 = vsub.s32 %v785, %v787
        %v789 = vrot.slane %v775, %v788
        %v790 = vcombine.low %v734, %v750
        %v791 = vcombine.high %v734, %v750
        %v793 = vunpack.c.l.s4 1934713408
        %v794 = vunpack.c.0.s8 %v793
        %v795 = vlaneseq
        %v796 = vshrl.u32 %v795, 7
        %v797 = vsub.s32 %v794, %v796
        %v798 = vrot.slane %v790, %v797
        %v800 = vunpack.c.l.s4 1934713408
        %v801 = vunpack.c.0.s8 %v800
        %v802 = vlaneseq
        %v803 = vshrl.u32 %v802, 7
        %v804 = vsub.s32 %v801, %v803
        %v805 = vrot.slane %v791, %v804
        %v806 = vcombine.low %v741, %v757
        %v807 = vcombine.high %v741, %v757
        %v809 = vunpack.c.l.s4 1934713408
        %v810 = vunpack.c.0.s8 %v809
        %v811 = vlaneseq
        %v812 = vshrl.u32 %v811, 7
        %v813 = vsub.s32 %v810, %v812
        %v814 = vrot.slane %v806, %v813
        %v816 = vunpack.c.l.s4 1934713408
        %v817 = vunpack.c.0.s8 %v816
        %v818 = vlaneseq
        %v819 = vshrl.u32 %v818, 7
        %v820 = vsub.s32 %v817, %v819
        %v821 = vrot.slane %v807, %v820
        %v822 = vcombine.low %v766, %v798
        %v823 = vcombine.high %v766, %v798
        %v824 = vcombine.low %v773, %v805
        %v825 = vcombine.high %v773, %v805
        %v826 = vcombine.low %v782, %v814
        %v827 = vcombine.high %v782, %v814
        %v828 = vcombine.low %v789, %v821
        %v829 = vcombine.high %v789, %v821
        %v830 = vcombine.low %v455, %v519
        %v831 = vcombine.high %v455, %v519
        %v833 = vunpack.c.l.s4 1983009808
        %v834 = vunpack.c.0.s8 %v833
        %v835 = vlaneseq
        %v836 = vshrl.u32 %v835, 7
        %v837 = vsub.s32 %v834, %v836
        %v838 = vrot.slane %v830, %v837
        %v840 = vunpack.c.l.s4 1983009808
        %v841 = vunpack.c.0.s8 %v840
        %v842 = vlaneseq
        %v843 = vshrl.u32 %v842, 7
        %v844 = vsub.s32 %v841, %v843
        %v845 = vrot.slane %v831, %v844
        %v846 = vcombine.low %v487, %v551
        %v847 = vcombine.high %v487, %v551
        %v849 = vunpack.c.l.s4 1983009808
        %v850 = vunpack.c.0.s8 %v849
        %v851 = vlaneseq
        %v852 = vshrl.u32 %v851, 7
        %v853 = vsub.s32 %v850, %v852
        %v854 = vrot.slane %v846, %v853
        %v856 = vunpack.c.l.s4 1983009808
        %v857 = vunpack.c.0.s8 %v856
        %v858 = vlaneseq
        %v859 = vshrl.u32 %v858, 7
        %v860 = vsub.s32 %v857, %v859
        %v861 = vrot.slane %v847, %v860
        %v862 = vcombine.low %v583, %v647
        %v863 = vcombine.high %v583, %v647
        %v865 = vunpack.c.l.s4 1983009808
        %v866 = vunpack.c.0.s8 %v865
        %v867 = vlaneseq
        %v868 = vshrl.u32 %v867, 7
        %v869 = vsub.s32 %v866, %v868
        %v870 = vrot.slane %v862, %v869
        %v872 = vunpack.c.l.s4 1983009808
        %v873 = vunpack.c.0.s8 %v872
        %v874 = vlaneseq
        %v875 = vshrl.u32 %v874, 7
        %v876 = vsub.s32 %v873, %v875
        %v877 = vrot.slane %v863, %v876
        %v878 = vcombine.low %v615, %v679
        %v879 = vcombine.high %v615, %v679
        %v881 = vunpack.c.l.s4 1983009808
        %v882 = vunpack.c.0.s8 %v881
        %v883 = vlaneseq
        %v884 = vshrl.u32 %v883, 7
        %v885 = vsub.s32 %v882, %v884
        %v886 = vrot.slane %v878, %v885
        %v888 = vunpack.c.l.s4 1983009808
        %v889 = vunpack.c.0.s8 %v888
        %v890 = vlaneseq
        %v891 = vshrl.u32 %v890, 7
        %v892 = vsub.s32 %v889, %v891
        %v893 = vrot.slane %v879, %v892
        %v894 = vcombine.low %v838, %v854
        %v895 = vcombine.high %v838, %v854
        %v897 = vunpack.c.l.s4 1934713408
        %v898 = vunpack.c.0.s8 %v897
        %v899 = vlaneseq
        %v900 = vshrl.u32 %v899, 7
        %v901 = vsub.s32 %v898, %v900
        %v902 = vrot.slane %v894, %v901
        %v904 = vunpack.c.l.s4 1934713408
        %v905 = vunpack.c.0.s8 %v904
        %v906 = vlaneseq
        %v907 = vshrl.u32 %v906, 7
        %v908 = vsub.s32 %v905, %v907
        %v909 = vrot.slane %v895, %v908
        %v910 = vcombine.low %v845, %v861
        %v911 = vcombine.high %v845, %v861
        %v913 = vunpack.c.l.s4 1934713408
        %v914 = vunpack.c.0.s8 %v913
        %v915 = vlaneseq
        %v916 = vshrl.u32 %v915, 7
        %v917 = vsub.s32 %v914, %v916
        %v918 = vrot.slane %v910, %v917
        %v920 = vunpack.c.l.s4 1934713408
        %v921 = vunpack.c.0.s8 %v920
        %v922 = vlaneseq
        %v923 = vshrl.u32 %v922, 7
        %v924 = vsub.s32 %v921, %v923
        %v925 = vrot.slane %v911, %v924
        %v926 = vcombine.low %v870, %v886
        %v927 = vcombine.high %v870, %v886
        %v929 = vunpack.c.l.s4 1934713408
        %v930 = vunpack.c.0.s8 %v929
        %v931 = vlaneseq
        %v932 = vshrl.u32 %v931, 7
        %v933 = vsub.s32 %v930, %v932
        %v934 = vrot.slane %v926, %v933
        %v936 = vunpack.c.l.s4 1934713408
        %v937 = vunpack.c.0.s8 %v936
        %v938 = vlaneseq
        %v939 = vshrl.u32 %v938, 7
        %v940 = vsub.s32 %v937, %v939
        %v941 = vrot.slane %v927, %v940
        %v942 = vcombine.low %v877, %v893
        %v943 = vcombine.high %v877, %v893
        %v945 = vunpack.c.l.s4 1934713408
        %v946 = vunpack.c.0.s8 %v945
        %v947 = vlaneseq
        %v948 = vshrl.u32 %v947, 7
        %v949 = vsub.s32 %v946, %v948
        %v950 = vrot.slane %v942, %v949
        %v952 = vunpack.c.l.s4 1934713408
        %v953 = vunpack.c.0.s8 %v952
        %v954 = vlaneseq
        %v955 = vshrl.u32 %v954, 7
        %v956 = vsub.s32 %v953, %v955
        %v957 = vrot.slane %v943, %v956
        %v958 = vcombine.low %v902, %v934
        %v959 = vcombine.high %v902, %v934
        %v960 = vcombine.low %v909, %v941
        %v961 = vcombine.high %v909, %v941
        %v962 = vcombine.low %v918, %v950
        %v963 = vcombine.high %v918, %v950
        %v964 = vcombine.low %v925, %v957
        %v965 = vcombine.high %v925, %v957
        %v966 = vcombine.low %v456, %v520
        %v967 = vcombine.high %v456, %v520
        %v969 = vunpack.c.l.s4 1983009808
        %v970 = vunpack.c.0.s8 %v969
        %v971 = vlaneseq
        %v972 = vshrl.u32 %v971, 7
        %v973 = vsub.s32 %v970, %v972
        %v974 = vrot.slane %v966, %v973
        %v976 = vunpack.c.l.s4 1983009808
        %v977 = vunpack.c.0.s8 %v976
        %v978 = vlaneseq
        %v979 = vshrl.u32 %v978, 7
        %v980 = vsub.s32 %v977, %v979
        %v981 = vrot.slane %v967, %v980
        %v982 = vcombine.low %v488, %v552
        %v983 = vcombine.high %v488, %v552
        %v985 = vunpack.c.l.s4 1983009808
        %v986 = vunpack.c.0.s8 %v985
        %v987 = vlaneseq
        %v988 = vshrl.u32 %v987, 7
        %v989 = vsub.s32 %v986, %v988
        %v990 = vrot.slane %v982, %v989
        %v992 = vunpack.c.l.s4 1983009808
        %v993 = vunpack.c.0.s8 %v992
        %v994 = vlaneseq
        %v995 = vshrl.u32 %v994, 7
        %v996 = vsub.s32 %v993, %v995
        %v997 = vrot.slane %v983, %v996
        %v998 = vcombine.low %v584, %v648
        %v999 = vcombine.high %v584, %v648
        %v1001 = vunpack.c.l.s4 1983009808
        %v1002 = vunpack.c.0.s8 %v1001
        %v1003 = vlaneseq
        %v1004 = vshrl.u32 %v1003, 7
        %v1005 = vsub.s32 %v1002, %v1004
        %v1006 = vrot.slane %v998, %v1005
        %v1008 = vunpack.c.l.s4 1983009808
        %v1009 = vunpack.c.0.s8 %v1008
        %v1010 = vlaneseq
        %v1011 = vshrl.u32 %v1010, 7
        %v1012 = vsub.s32 %v1009, %v1011
        %v1013 = vrot.slane %v999, %v1012
        %v1014 = vcombine.low %v616, %v680
        %v1015 = vcombine.high %v616, %v680
        %v1017 = vunpack.c.l.s4 1983009808
        %v1018 = vunpack.c.0.s8 %v1017
        %v1019 = vlaneseq
        %v1020 = vshrl.u32 %v1019, 7
        %v1021 = vsub.s32 %v1018, %v1020
        %v1022 = vrot.slane %v1014, %v1021
        %v1024 = vunpack.c.l.s4 1983009808
        %v1025 = vunpack.c.0.s8 %v1024
        %v1026 = vlaneseq
        %v1027 = vshrl.u32 %v1026, 7
        %v1028 = vsub.s32 %v1025, %v1027
        %v1029 = vrot.slane %v1015, %v1028
        %v1030 = vcombine.low %v974, %v990
        %v1031 = vcombine.high %v974, %v990
        %v1033 = vunpack.c.l.s4 1934713408
        %v1034 = vunpack.c.0.s8 %v1033
        %v1035 = vlaneseq
        %v1036 = vshrl.u32 %v1035, 7
        %v1037 = vsub.s32 %v1034, %v1036
        %v1038 = vrot.slane %v1030, %v1037
        %v1040 = vunpack.c.l.s4 1934713408
        %v1041 = vunpack.c.0.s8 %v1040
        %v1042 = vlaneseq
        %v1043 = vshrl.u32 %v1042, 7
        %v1044 = vsub.s32 %v1041, %v1043
        %v1045 = vrot.slane %v1031, %v1044
        %v1046 = vcombine.low %v981, %v997
        %v1047 = vcombine.high %v981, %v997
        %v1049 = vunpack.c.l.s4 1934713408
        %v1050 = vunpack.c.0.s8 %v1049
        %v1051 = vlaneseq
        %v1052 = vshrl.u32 %v1051, 7
        %v1053 = vsub.s32 %v1050, %v1052
        %v1054 = vrot.slane %v1046, %v1053
        %v1056 = vunpack.c.l.s4 1934713408
        %v1057 = vunpack.c.0.s8 %v1056
        %v1058 = vlaneseq
        %v1059 = vshrl.u32 %v1058, 7
        %v1060 = vsub.s32 %v1057, %v1059
        %v1061 = vrot.slane %v1047, %v1060
        %v1062 = vcombine.low %v1006, %v1022
        %v1063 = vcombine.high %v1006, %v1022
        %v1065 = vunpack.c.l.s4 1934713408
        %v1066 = vunpack.c.0.s8 %v1065
        %v1067 = vlaneseq
        %v1068 = vshrl.u32 %v1067, 7
        %v1069 = vsub.s32 %v1066, %v1068
        %v1070 = vrot.slane %v1062, %v1069
        %v1072 = vunpack.c.l.s4 1934713408
        %v1073 = vunpack.c.0.s8 %v1072
        %v1074 = vlaneseq
        %v1075 = vshrl.u32 %v1074, 7
        %v1076 = vsub.s32 %v1073, %v1075
        %v1077 = vrot.slane %v1063, %v1076
        %v1078 = vcombine.low %v1013, %v1029
        %v1079 = vcombine.high %v1013, %v1029
        %v1081 = vunpack.c.l.s4 1934713408
        %v1082 = vunpack.c.0.s8 %v1081
        %v1083 = vlaneseq
        %v1084 = vshrl.u32 %v1083, 7
        %v1085 = vsub.s32 %v1082, %v1084
        %v1086 = vrot.slane %v1078, %v1085
        %v1088 = vunpack.c.l.s4 1934713408
        %v1089 = vunpack.c.0.s8 %v1088
        %v1090 = vlaneseq
        %v1091 = vshrl.u32 %v1090, 7
        %v1092 = vsub.s32 %v1089, %v1091
        %v1093 = vrot.slane %v1079, %v1092
        %v1094 = vcombine.low %v1038, %v1070
        %v1095 = vcombine.high %v1038, %v1070
        %v1096 = vcombine.low %v1045, %v1077
        %v1097 = vcombine.high %v1045, %v1077
        %v1098 = vcombine.low %v1054, %v1086
        %v1099 = vcombine.high %v1054, %v1086
        %v1100 = vcombine.low %v1061, %v1093
        %v1101 = vcombine.high %v1061, %v1093
        %v1102 = vcombine.low %v457, %v521
        %v1103 = vcombine.high %v457, %v521
        %v1105 = vunpack.c.l.s4 1983009808
        %v1106 = vunpack.c.0.s8 %v1105
        %v1107 = vlaneseq
        %v1108 = vshrl.u32 %v1107, 7
        %v1109 = vsub.s32 %v1106, %v1108
        %v1110 = vrot.slane %v1102, %v1109
        %v1112 = vunpack.c.l.s4 1983009808
        %v1113 = vunpack.c.0.s8 %v1112
        %v1114 = vlaneseq
        %v1115 = vshrl.u32 %v1114, 7
        %v1116 = vsub.s32 %v1113, %v1115
        %v1117 = vrot.slane %v1103, %v1116
        %v1118 = vcombine.low %v489, %v553
        %v1119 = vcombine.high %v489, %v553
        %v1121 = vunpack.c.l.s4 1983009808
        %v1122 = vunpack.c.0.s8 %v1121
        %v1123 = vlaneseq
        %v1124 = vshrl.u32 %v1123, 7
        %v1125 = vsub.s32 %v1122, %v1124
        %v1126 = vrot.slane %v1118, %v1125
        %v1128 = vunpack.c.l.s4 1983009808
        %v1129 = vunpack.c.0.s8 %v1128
        %v1130 = vlaneseq
        %v1131 = vshrl.u32 %v1130, 7
        %v1132 = vsub.s32 %v1129, %v1131
        %v1133 = vrot.slane %v1119, %v1132
        %v1134 = vcombine.low %v585, %v649
        %v1135 = vcombine.high %v585, %v649
        %v1137 = vunpack.c.l.s4 1983009808
        %v1138 = vunpack.c.0.s8 %v1137
        %v1139 = vlaneseq
        %v1140 = vshrl.u32 %v1139, 7
        %v1141 = vsub.s32 %v1138, %v1140
        %v1142 = vrot.slane %v1134, %v1141
        %v1144 = vunpack.c.l.s4 1983009808
        %v1145 = vunpack.c.0.s8 %v1144
        %v1146 = vlaneseq
        %v1147 = vshrl.u32 %v1146, 7
        %v1148 = vsub.s32 %v1145, %v1147
        %v1149 = vrot.slane %v1135, %v1148
        %v1150 = vcombine.low %v617, %v681
        %v1151 = vcombine.high %v617, %v681
        %v1153 = vunpack.c.l.s4 1983009808
        %v1154 = vunpack.c.0.s8 %v1153
        %v1155 = vlaneseq
        %v1156 = vshrl.u32 %v1155, 7
        %v1157 = vsub.s32 %v1154, %v1156
        %v1158 = vrot.slane %v1150, %v1157
        %v1160 = vunpack.c.l.s4 1983009808
        %v1161 = vunpack.c.0.s8 %v1160
        %v1162 = vlaneseq
        %v1163 = vshrl.u32 %v1162, 7
        %v1164 = vsub.s32 %v1161, %v1163
        %v1165 = vrot.slane %v1151, %v1164
        %v1166 = vcombine.low %v1110, %v1126
        %v1167 = vcombine.high %v1110, %v1126
        %v1169 = vunpack.c.l.s4 1934713408
        %v1170 = vunpack.c.0.s8 %v1169
        %v1171 = vlaneseq
        %v1172 = vshrl.u32 %v1171, 7
        %v1173 = vsub.s32 %v1170, %v1172
        %v1174 = vrot.slane %v1166, %v1173
        %v1176 = vunpack.c.l.s4 1934713408
        %v1177 = vunpack.c.0.s8 %v1176
        %v1178 = vlaneseq
        %v1179 = vshrl.u32 %v1178, 7
        %v1180 = vsub.s32 %v1177, %v1179
        %v1181 = vrot.slane %v1167, %v1180
        %v1182 = vcombine.low %v1117, %v1133
        %v1183 = vcombine.high %v1117, %v1133
        %v1185 = vunpack.c.l.s4 1934713408
        %v1186 = vunpack.c.0.s8 %v1185
        %v1187 = vlaneseq
        %v1188 = vshrl.u32 %v1187, 7
        %v1189 = vsub.s32 %v1186, %v1188
        %v1190 = vrot.slane %v1182, %v1189
        %v1192 = vunpack.c.l.s4 1934713408
        %v1193 = vunpack.c.0.s8 %v1192
        %v1194 = vlaneseq
        %v1195 = vshrl.u32 %v1194, 7
        %v1196 = vsub.s32 %v1193, %v1195
        %v1197 = vrot.slane %v1183, %v1196
        %v1198 = vcombine.low %v1142, %v1158
        %v1199 = vcombine.high %v1142, %v1158
        %v1201 = vunpack.c.l.s4 1934713408
        %v1202 = vunpack.c.0.s8 %v1201
        %v1203 = vlaneseq
        %v1204 = vshrl.u32 %v1203, 7
        %v1205 = vsub.s32 %v1202, %v1204
        %v1206 = vrot.slane %v1198, %v1205
        %v1208 = vunpack.c.l.s4 1934713408
        %v1209 = vunpack.c.0.s8 %v1208
        %v1210 = vlaneseq
        %v1211 = vshrl.u32 %v1210, 7
        %v1212 = vsub.s32 %v1209, %v1211
        %v1213 = vrot.slane %v1199, %v1212
        %v1214 = vcombine.low %v1149, %v1165
        %v1215 = vcombine.high %v1149, %v1165
        %v1217 = vunpack.c.l.s4 1934713408
        %v1218 = vunpack.c.0.s8 %v1217
        %v1219 = vlaneseq
        %v1220 = vshrl.u32 %v1219, 7
        %v1221 = vsub.s32 %v1218, %v1220
        %v1222 = vrot.slane %v1214, %v1221
        %v1224 = vunpack.c.l.s4 1934713408
        %v1225 = vunpack.c.0.s8 %v1224
        %v1226 = vlaneseq
        %v1227 = vshrl.u32 %v1226, 7
        %v1228 = vsub.s32 %v1225, %v1227
        %v1229 = vrot.slane %v1215, %v1228
        %v1230 = vcombine.low %v1174, %v1206
        %v1231 = vcombine.high %v1174, %v1206
        %v1232 = vcombine.low %v1181, %v1213
        %v1233 = vcombine.high %v1181, %v1213
        %v1234 = vcombine.low %v1190, %v1222
        %v1235 = vcombine.high %v1190, %v1222
        %v1236 = vcombine.low %v1197, %v1229
        %v1237 = vcombine.high %v1197, %v1229
        %1238 = vxpose.xlu0.b32.start [1/16] %v822, 128
        %1239 = vxpose.xlu0.b32.cont [2/16] 0.0, 128
        %1240 = vxpose.xlu0.b32.cont [3/16] 0.0, 128
        %1241 = vxpose.xlu0.b32.cont [4/16] 0.0, 128
        %1242 = vxpose.xlu0.b32.cont [5/16] 0.0, 128
        %1243 = vxpose.xlu0.b32.cont [6/16] 0.0, 128
        %1244 = vxpose.xlu0.b32.cont [7/16] 0.0, 128
        %1245 = vxpose.xlu0.b32.cont [8/16] 0.0, 128
        %1246 = vxpose.xlu0.b32.cont [9/16] 0.0, 128
        %1247 = vxpose.xlu0.b32.cont [10/16] 0.0, 128
        %1248 = vxpose.xlu0.b32.cont [11/16] 0.0, 128
        %1249 = vxpose.xlu0.b32.cont [12/16] 0.0, 128
        %1250 = vxpose.xlu0.b32.cont [13/16] 0.0, 128
        %1251 = vxpose.xlu0.b32.cont [14/16] 0.0, 128
        %1252 = vxpose.xlu0.b32.cont [15/16] 0.0, 128
        %1253 = vxpose.xlu0.b32.end [16/16] 0.0, 128
        %v1254 = vpop.trf.xlu0
        %v1255 = vpop.trf.xlu0
        %v1256 = vpop.trf.xlu0
        %v1257 = vpop.trf.xlu0
        %v1258 = vpop.trf.xlu0
        %v1259 = vpop.trf.xlu0
        %v1260 = vpop.trf.xlu0
        %v1261 = vpop.trf.xlu0
        %v1262 = vpop.trf.xlu0
        %v1263 = vpop.trf.xlu0
        %v1264 = vpop.trf.xlu0
        %v1265 = vpop.trf.xlu0
        %v1266 = vpop.trf.xlu0
        %v1267 = vpop.trf.xlu0
        %v1268 = vpop.trf.xlu0
        %v1269 = vpop.trf.xlu0
        %1270 = vxpose.xlu0.b32.start [1/16] %v823, 128
        %1271 = vxpose.xlu0.b32.cont [2/16] 0.0, 128
        %1272 = vxpose.xlu0.b32.cont [3/16] 0.0, 128
        %1273 = vxpose.xlu0.b32.cont [4/16] 0.0, 128
        %1274 = vxpose.xlu0.b32.cont [5/16] 0.0, 128
        %1275 = vxpose.xlu0.b32.cont [6/16] 0.0, 128
        %1276 = vxpose.xlu0.b32.cont [7/16] 0.0, 128
        %1277 = vxpose.xlu0.b32.cont [8/16] 0.0, 128
        %1278 = vxpose.xlu0.b32.cont [9/16] 0.0, 128
        %1279 = vxpose.xlu0.b32.cont [10/16] 0.0, 128
        %1280 = vxpose.xlu0.b32.cont [11/16] 0.0, 128
        %1281 = vxpose.xlu0.b32.cont [12/16] 0.0, 128
        %1282 = vxpose.xlu0.b32.cont [13/16] 0.0, 128
        %1283 = vxpose.xlu0.b32.cont [14/16] 0.0, 128
        %1284 = vxpose.xlu0.b32.cont [15/16] 0.0, 128
        %1285 = vxpose.xlu0.b32.end [16/16] 0.0, 128
        %v1286 = vpop.trf.xlu0
        %v1287 = vpop.trf.xlu0
        %v1288 = vpop.trf.xlu0
        %v1289 = vpop.trf.xlu0
        %v1290 = vpop.trf.xlu0
        %v1291 = vpop.trf.xlu0
        %v1292 = vpop.trf.xlu0
        %v1293 = vpop.trf.xlu0
        %v1294 = vpop.trf.xlu0
        %v1295 = vpop.trf.xlu0
        %v1296 = vpop.trf.xlu0
        %v1297 = vpop.trf.xlu0
        %v1298 = vpop.trf.xlu0
        %v1299 = vpop.trf.xlu0
        %v1300 = vpop.trf.xlu0
        %v1301 = vpop.trf.xlu0
        %1302 = vxpose.xlu0.b32.start [1/16] %v824, 128
        %1303 = vxpose.xlu0.b32.cont [2/16] 0.0, 128
        %1304 = vxpose.xlu0.b32.cont [3/16] 0.0, 128
        %1305 = vxpose.xlu0.b32.cont [4/16] 0.0, 128
        %1306 = vxpose.xlu0.b32.cont [5/16] 0.0, 128
        %1307 = vxpose.xlu0.b32.cont [6/16] 0.0, 128
        %1308 = vxpose.xlu0.b32.cont [7/16] 0.0, 128
        %1309 = vxpose.xlu0.b32.cont [8/16] 0.0, 128
        %1310 = vxpose.xlu0.b32.cont [9/16] 0.0, 128
        %1311 = vxpose.xlu0.b32.cont [10/16] 0.0, 128
        %1312 = vxpose.xlu0.b32.cont [11/16] 0.0, 128
        %1313 = vxpose.xlu0.b32.cont [12/16] 0.0, 128
        %1314 = vxpose.xlu0.b32.cont [13/16] 0.0, 128
        %1315 = vxpose.xlu0.b32.cont [14/16] 0.0, 128
        %1316 = vxpose.xlu0.b32.cont [15/16] 0.0, 128
        %1317 = vxpose.xlu0.b32.end [16/16] 0.0, 128
        %v1318 = vpop.trf.xlu0
        %v1319 = vpop.trf.xlu0
        %v1320 = vpop.trf.xlu0
        %v1321 = vpop.trf.xlu0
        %v1322 = vpop.trf.xlu0
        %v1323 = vpop.trf.xlu0
        %v1324 = vpop.trf.xlu0
        %v1325 = vpop.trf.xlu0
        %v1326 = vpop.trf.xlu0
        %v1327 = vpop.trf.xlu0
        %v1328 = vpop.trf.xlu0
        %v1329 = vpop.trf.xlu0
        %v1330 = vpop.trf.xlu0
        %v1331 = vpop.trf.xlu0
        %v1332 = vpop.trf.xlu0
        %v1333 = vpop.trf.xlu0
        %1334 = vxpose.xlu0.b32.start [1/16] %v825, 128
        %1335 = vxpose.xlu0.b32.cont [2/16] 0.0, 128
        %1336 = vxpose.xlu0.b32.cont [3/16] 0.0, 128
        %1337 = vxpose.xlu0.b32.cont [4/16] 0.0, 128
        %1338 = vxpose.xlu0.b32.cont [5/16] 0.0, 128
        %1339 = vxpose.xlu0.b32.cont [6/16] 0.0, 128
        %1340 = vxpose.xlu0.b32.cont [7/16] 0.0, 128
        %1341 = vxpose.xlu0.b32.cont [8/16] 0.0, 128
        %1342 = vxpose.xlu0.b32.cont [9/16] 0.0, 128
        %1343 = vxpose.xlu0.b32.cont [10/16] 0.0, 128
        %1344 = vxpose.xlu0.b32.cont [11/16] 0.0, 128
        %1345 = vxpose.xlu0.b32.cont [12/16] 0.0, 128
        %1346 = vxpose.xlu0.b32.cont [13/16] 0.0, 128
        %1347 = vxpose.xlu0.b32.cont [14/16] 0.0, 128
        %1348 = vxpose.xlu0.b32.cont [15/16] 0.0, 128
        %1349 = vxpose.xlu0.b32.end [16/16] 0.0, 128
        %v1350 = vpop.trf.xlu0
        %v1351 = vpop.trf.xlu0
        %v1352 = vpop.trf.xlu0
        %v1353 = vpop.trf.xlu0
        %v1354 = vpop.trf.xlu0
        %v1355 = vpop.trf.xlu0
        %v1356 = vpop.trf.xlu0
        %v1357 = vpop.trf.xlu0
        %v1358 = vpop.trf.xlu0
        %v1359 = vpop.trf.xlu0
        %v1360 = vpop.trf.xlu0
        %v1361 = vpop.trf.xlu0
        %v1362 = vpop.trf.xlu0
        %v1363 = vpop.trf.xlu0
        %v1364 = vpop.trf.xlu0
        %v1365 = vpop.trf.xlu0
        %1366 = vxpose.xlu0.b32.start [1/16] %v826, 128
        %1367 = vxpose.xlu0.b32.cont [2/16] 0.0, 128
        %1368 = vxpose.xlu0.b32.cont [3/16] 0.0, 128
        %1369 = vxpose.xlu0.b32.cont [4/16] 0.0, 128
        %1370 = vxpose.xlu0.b32.cont [5/16] 0.0, 128
        %1371 = vxpose.xlu0.b32.cont [6/16] 0.0, 128
        %1372 = vxpose.xlu0.b32.cont [7/16] 0.0, 128
        %1373 = vxpose.xlu0.b32.cont [8/16] 0.0, 128
        %1374 = vxpose.xlu0.b32.cont [9/16] 0.0, 128
        %1375 = vxpose.xlu0.b32.cont [10/16] 0.0, 128
        %1376 = vxpose.xlu0.b32.cont [11/16] 0.0, 128
        %1377 = vxpose.xlu0.b32.cont [12/16] 0.0, 128
        %1378 = vxpose.xlu0.b32.cont [13/16] 0.0, 128
        %1379 = vxpose.xlu0.b32.cont [14/16] 0.0, 128
        %1380 = vxpose.xlu0.b32.cont [15/16] 0.0, 128
        %1381 = vxpose.xlu0.b32.end [16/16] 0.0, 128
        %v1382 = vpop.trf.xlu0
        %v1383 = vpop.trf.xlu0
        %v1384 = vpop.trf.xlu0
        %v1385 = vpop.trf.xlu0
        %v1386 = vpop.trf.xlu0
        %v1387 = vpop.trf.xlu0
        %v1388 = vpop.trf.xlu0
        %v1389 = vpop.trf.xlu0
        %v1390 = vpop.trf.xlu0
        %v1391 = vpop.trf.xlu0
        %v1392 = vpop.trf.xlu0
        %v1393 = vpop.trf.xlu0
        %v1394 = vpop.trf.xlu0
        %v1395 = vpop.trf.xlu0
        %v1396 = vpop.trf.xlu0
        %v1397 = vpop.trf.xlu0
        %1398 = vxpose.xlu0.b32.start [1/16] %v827, 128
        %1399 = vxpose.xlu0.b32.cont [2/16] 0.0, 128
        %1400 = vxpose.xlu0.b32.cont [3/16] 0.0, 128
        %1401 = vxpose.xlu0.b32.cont [4/16] 0.0, 128
        %1402 = vxpose.xlu0.b32.cont [5/16] 0.0, 128
        %1403 = vxpose.xlu0.b32.cont [6/16] 0.0, 128
        %1404 = vxpose.xlu0.b32.cont [7/16] 0.0, 128
        %1405 = vxpose.xlu0.b32.cont [8/16] 0.0, 128
        %1406 = vxpose.xlu0.b32.cont [9/16] 0.0, 128
        %1407 = vxpose.xlu0.b32.cont [10/16] 0.0, 128
        %1408 = vxpose.xlu0.b32.cont [11/16] 0.0, 128
        %1409 = vxpose.xlu0.b32.cont [12/16] 0.0, 128
        %1410 = vxpose.xlu0.b32.cont [13/16] 0.0, 128
        %1411 = vxpose.xlu0.b32.cont [14/16] 0.0, 128
        %1412 = vxpose.xlu0.b32.cont [15/16] 0.0, 128
        %1413 = vxpose.xlu0.b32.end [16/16] 0.0, 128
        %v1414 = vpop.trf.xlu0
        %v1415 = vpop.trf.xlu0
        %v1416 = vpop.trf.xlu0
        %v1417 = vpop.trf.xlu0
        %v1418 = vpop.trf.xlu0
        %v1419 = vpop.trf.xlu0
        %v1420 = vpop.trf.xlu0
        %v1421 = vpop.trf.xlu0
        %v1422 = vpop.trf.xlu0
        %v1423 = vpop.trf.xlu0
        %v1424 = vpop.trf.xlu0
        %v1425 = vpop.trf.xlu0
        %v1426 = vpop.trf.xlu0
        %v1427 = vpop.trf.xlu0
        %v1428 = vpop.trf.xlu0
        %v1429 = vpop.trf.xlu0
        %1430 = vxpose.xlu0.b32.start [1/16] %v828, 128
        %1431 = vxpose.xlu0.b32.cont [2/16] 0.0, 128
        %1432 = vxpose.xlu0.b32.cont [3/16] 0.0, 128
        %1433 = vxpose.xlu0.b32.cont [4/16] 0.0, 128
        %1434 = vxpose.xlu0.b32.cont [5/16] 0.0, 128
        %1435 = vxpose.xlu0.b32.cont [6/16] 0.0, 128
        %1436 = vxpose.xlu0.b32.cont [7/16] 0.0, 128
        %1437 = vxpose.xlu0.b32.cont [8/16] 0.0, 128
        %1438 = vxpose.xlu0.b32.cont [9/16] 0.0, 128
        %1439 = vxpose.xlu0.b32.cont [10/16] 0.0, 128
        %1440 = vxpose.xlu0.b32.cont [11/16] 0.0, 128
        %1441 = vxpose.xlu0.b32.cont [12/16] 0.0, 128
        %1442 = vxpose.xlu0.b32.cont [13/16] 0.0, 128
        %1443 = vxpose.xlu0.b32.cont [14/16] 0.0, 128
        %1444 = vxpose.xlu0.b32.cont [15/16] 0.0, 128
        %1445 = vxpose.xlu0.b32.end [16/16] 0.0, 128
        %v1446 = vpop.trf.xlu0
        %v1447 = vpop.trf.xlu0
        %v1448 = vpop.trf.xlu0
        %v1449 = vpop.trf.xlu0
        %v1450 = vpop.trf.xlu0
        %v1451 = vpop.trf.xlu0
        %v1452 = vpop.trf.xlu0
        %v1453 = vpop.trf.xlu0
        %v1454 = vpop.trf.xlu0
        %v1455 = vpop.trf.xlu0
        %v1456 = vpop.trf.xlu0
        %v1457 = vpop.trf.xlu0
        %v1458 = vpop.trf.xlu0
        %v1459 = vpop.trf.xlu0
        %v1460 = vpop.trf.xlu0
        %v1461 = vpop.trf.xlu0
        %1462 = vxpose.xlu0.b32.start [1/16] %v829, 128
        %1463 = vxpose.xlu0.b32.cont [2/16] 0.0, 128
        %1464 = vxpose.xlu0.b32.cont [3/16] 0.0, 128
        %1465 = vxpose.xlu0.b32.cont [4/16] 0.0, 128
        %1466 = vxpose.xlu0.b32.cont [5/16] 0.0, 128
        %1467 = vxpose.xlu0.b32.cont [6/16] 0.0, 128
        %1468 = vxpose.xlu0.b32.cont [7/16] 0.0, 128
        %1469 = vxpose.xlu0.b32.cont [8/16] 0.0, 128
        %1470 = vxpose.xlu0.b32.cont [9/16] 0.0, 128
        %1471 = vxpose.xlu0.b32.cont [10/16] 0.0, 128
        %1472 = vxpose.xlu0.b32.cont [11/16] 0.0, 128
        %1473 = vxpose.xlu0.b32.cont [12/16] 0.0, 128
        %1474 = vxpose.xlu0.b32.cont [13/16] 0.0, 128
        %1475 = vxpose.xlu0.b32.cont [14/16] 0.0, 128
        %1476 = vxpose.xlu0.b32.cont [15/16] 0.0, 128
        %1477 = vxpose.xlu0.b32.end [16/16] 0.0, 128
        %v1478 = vpop.trf.xlu0
        %v1479 = vpop.trf.xlu0
        %v1480 = vpop.trf.xlu0
        %v1481 = vpop.trf.xlu0
        %v1482 = vpop.trf.xlu0
        %v1483 = vpop.trf.xlu0
        %v1484 = vpop.trf.xlu0
        %v1485 = vpop.trf.xlu0
        %v1486 = vpop.trf.xlu0
        %v1487 = vpop.trf.xlu0
        %v1488 = vpop.trf.xlu0
        %v1489 = vpop.trf.xlu0
        %v1490 = vpop.trf.xlu0
        %v1491 = vpop.trf.xlu0
        %v1492 = vpop.trf.xlu0
        %v1493 = vpop.trf.xlu0
        %1494 = vxpose.xlu0.b32.start [1/16] %v958, 128
        %1495 = vxpose.xlu0.b32.cont [2/16] 0.0, 128
        %1496 = vxpose.xlu0.b32.cont [3/16] 0.0, 128
        %1497 = vxpose.xlu0.b32.cont [4/16] 0.0, 128
        %1498 = vxpose.xlu0.b32.cont [5/16] 0.0, 128
        %1499 = vxpose.xlu0.b32.cont [6/16] 0.0, 128
        %1500 = vxpose.xlu0.b32.cont [7/16] 0.0, 128
        %1501 = vxpose.xlu0.b32.cont [8/16] 0.0, 128
        %1502 = vxpose.xlu0.b32.cont [9/16] 0.0, 128
        %1503 = vxpose.xlu0.b32.cont [10/16] 0.0, 128
        %1504 = vxpose.xlu0.b32.cont [11/16] 0.0, 128
        %1505 = vxpose.xlu0.b32.cont [12/16] 0.0, 128
        %1506 = vxpose.xlu0.b32.cont [13/16] 0.0, 128
        %1507 = vxpose.xlu0.b32.cont [14/16] 0.0, 128
        %1508 = vxpose.xlu0.b32.cont [15/16] 0.0, 128
        %1509 = vxpose.xlu0.b32.end [16/16] 0.0, 128
        %v1510 = vpop.trf.xlu0
        %v1511 = vpop.trf.xlu0
        %v1512 = vpop.trf.xlu0
        %v1513 = vpop.trf.xlu0
        %v1514 = vpop.trf.xlu0
        %v1515 = vpop.trf.xlu0
        %v1516 = vpop.trf.xlu0
        %v1517 = vpop.trf.xlu0
        %v1518 = vpop.trf.xlu0
        %v1519 = vpop.trf.xlu0
        %v1520 = vpop.trf.xlu0
        %v1521 = vpop.trf.xlu0
        %v1522 = vpop.trf.xlu0
        %v1523 = vpop.trf.xlu0
        %v1524 = vpop.trf.xlu0
        %v1525 = vpop.trf.xlu0
        %1526 = vxpose.xlu0.b32.start [1/16] %v959, 128
        %1527 = vxpose.xlu0.b32.cont [2/16] 0.0, 128
        %1528 = vxpose.xlu0.b32.cont [3/16] 0.0, 128
        %1529 = vxpose.xlu0.b32.cont [4/16] 0.0, 128
        %1530 = vxpose.xlu0.b32.cont [5/16] 0.0, 128
        %1531 = vxpose.xlu0.b32.cont [6/16] 0.0, 128
        %1532 = vxpose.xlu0.b32.cont [7/16] 0.0, 128
        %1533 = vxpose.xlu0.b32.cont [8/16] 0.0, 128
        %1534 = vxpose.xlu0.b32.cont [9/16] 0.0, 128
        %1535 = vxpose.xlu0.b32.cont [10/16] 0.0, 128
        %1536 = vxpose.xlu0.b32.cont [11/16] 0.0, 128
        %1537 = vxpose.xlu0.b32.cont [12/16] 0.0, 128
        %1538 = vxpose.xlu0.b32.cont [13/16] 0.0, 128
        %1539 = vxpose.xlu0.b32.cont [14/16] 0.0, 128
        %1540 = vxpose.xlu0.b32.cont [15/16] 0.0, 128
        %1541 = vxpose.xlu0.b32.end [16/16] 0.0, 128
        %v1542 = vpop.trf.xlu0
        %v1543 = vpop.trf.xlu0
        %v1544 = vpop.trf.xlu0
        %v1545 = vpop.trf.xlu0
        %v1546 = vpop.trf.xlu0
        %v1547 = vpop.trf.xlu0
        %v1548 = vpop.trf.xlu0
        %v1549 = vpop.trf.xlu0
        %v1550 = vpop.trf.xlu0
        %v1551 = vpop.trf.xlu0
        %v1552 = vpop.trf.xlu0
        %v1553 = vpop.trf.xlu0
        %v1554 = vpop.trf.xlu0
        %v1555 = vpop.trf.xlu0
        %v1556 = vpop.trf.xlu0
        %v1557 = vpop.trf.xlu0
        %1558 = vxpose.xlu0.b32.start [1/16] %v960, 128
        %1559 = vxpose.xlu0.b32.cont [2/16] 0.0, 128
        %1560 = vxpose.xlu0.b32.cont [3/16] 0.0, 128
        %1561 = vxpose.xlu0.b32.cont [4/16] 0.0, 128
        %1562 = vxpose.xlu0.b32.cont [5/16] 0.0, 128
        %1563 = vxpose.xlu0.b32.cont [6/16] 0.0, 128
        %1564 = vxpose.xlu0.b32.cont [7/16] 0.0, 128
        %1565 = vxpose.xlu0.b32.cont [8/16] 0.0, 128
        %1566 = vxpose.xlu0.b32.cont [9/16] 0.0, 128
        %1567 = vxpose.xlu0.b32.cont [10/16] 0.0, 128
        %1568 = vxpose.xlu0.b32.cont [11/16] 0.0, 128
        %1569 = vxpose.xlu0.b32.cont [12/16] 0.0, 128
        %1570 = vxpose.xlu0.b32.cont [13/16] 0.0, 128
        %1571 = vxpose.xlu0.b32.cont [14/16] 0.0, 128
        %1572 = vxpose.xlu0.b32.cont [15/16] 0.0, 128
        %1573 = vxpose.xlu0.b32.end [16/16] 0.0, 128
        %v1574 = vpop.trf.xlu0
        %v1575 = vpop.trf.xlu0
        %v1576 = vpop.trf.xlu0
        %v1577 = vpop.trf.xlu0
        %v1578 = vpop.trf.xlu0
        %v1579 = vpop.trf.xlu0
        %v1580 = vpop.trf.xlu0
        %v1581 = vpop.trf.xlu0
        %v1582 = vpop.trf.xlu0
        %v1583 = vpop.trf.xlu0
        %v1584 = vpop.trf.xlu0
        %v1585 = vpop.trf.xlu0
        %v1586 = vpop.trf.xlu0
        %v1587 = vpop.trf.xlu0
        %v1588 = vpop.trf.xlu0
        %v1589 = vpop.trf.xlu0
        %1590 = vxpose.xlu0.b32.start [1/16] %v961, 128
        %1591 = vxpose.xlu0.b32.cont [2/16] 0.0, 128
        %1592 = vxpose.xlu0.b32.cont [3/16] 0.0, 128
        %1593 = vxpose.xlu0.b32.cont [4/16] 0.0, 128
        %1594 = vxpose.xlu0.b32.cont [5/16] 0.0, 128
        %1595 = vxpose.xlu0.b32.cont [6/16] 0.0, 128
        %1596 = vxpose.xlu0.b32.cont [7/16] 0.0, 128
        %1597 = vxpose.xlu0.b32.cont [8/16] 0.0, 128
        %1598 = vxpose.xlu0.b32.cont [9/16] 0.0, 128
        %1599 = vxpose.xlu0.b32.cont [10/16] 0.0, 128
        %1600 = vxpose.xlu0.b32.cont [11/16] 0.0, 128
        %1601 = vxpose.xlu0.b32.cont [12/16] 0.0, 128
        %1602 = vxpose.xlu0.b32.cont [13/16] 0.0, 128
        %1603 = vxpose.xlu0.b32.cont [14/16] 0.0, 128
        %1604 = vxpose.xlu0.b32.cont [15/16] 0.0, 128
        %1605 = vxpose.xlu0.b32.end [16/16] 0.0, 128
        %v1606 = vpop.trf.xlu0
        %v1607 = vpop.trf.xlu0
        %v1608 = vpop.trf.xlu0
        %v1609 = vpop.trf.xlu0
        %v1610 = vpop.trf.xlu0
        %v1611 = vpop.trf.xlu0
        %v1612 = vpop.trf.xlu0
        %v1613 = vpop.trf.xlu0
        %v1614 = vpop.trf.xlu0
        %v1615 = vpop.trf.xlu0
        %v1616 = vpop.trf.xlu0
        %v1617 = vpop.trf.xlu0
        %v1618 = vpop.trf.xlu0
        %v1619 = vpop.trf.xlu0
        %v1620 = vpop.trf.xlu0
        %v1621 = vpop.trf.xlu0
        %1622 = vxpose.xlu0.b32.start [1/16] %v962, 128
        %1623 = vxpose.xlu0.b32.cont [2/16] 0.0, 128
        %1624 = vxpose.xlu0.b32.cont [3/16] 0.0, 128
        %1625 = vxpose.xlu0.b32.cont [4/16] 0.0, 128
        %1626 = vxpose.xlu0.b32.cont [5/16] 0.0, 128
        %1627 = vxpose.xlu0.b32.cont [6/16] 0.0, 128
        %1628 = vxpose.xlu0.b32.cont [7/16] 0.0, 128
        %1629 = vxpose.xlu0.b32.cont [8/16] 0.0, 128
        %1630 = vxpose.xlu0.b32.cont [9/16] 0.0, 128
        %1631 = vxpose.xlu0.b32.cont [10/16] 0.0, 128
        %1632 = vxpose.xlu0.b32.cont [11/16] 0.0, 128
        %1633 = vxpose.xlu0.b32.cont [12/16] 0.0, 128
        %1634 = vxpose.xlu0.b32.cont [13/16] 0.0, 128
        %1635 = vxpose.xlu0.b32.cont [14/16] 0.0, 128
        %1636 = vxpose.xlu0.b32.cont [15/16] 0.0, 128
        %1637 = vxpose.xlu0.b32.end [16/16] 0.0, 128
        %v1638 = vpop.trf.xlu0
        %v1639 = vpop.trf.xlu0
        %v1640 = vpop.trf.xlu0
        %v1641 = vpop.trf.xlu0
        %v1642 = vpop.trf.xlu0
        %v1643 = vpop.trf.xlu0
        %v1644 = vpop.trf.xlu0
        %v1645 = vpop.trf.xlu0
        %v1646 = vpop.trf.xlu0
        %v1647 = vpop.trf.xlu0
        %v1648 = vpop.trf.xlu0
        %v1649 = vpop.trf.xlu0
        %v1650 = vpop.trf.xlu0
        %v1651 = vpop.trf.xlu0
        %v1652 = vpop.trf.xlu0
        %v1653 = vpop.trf.xlu0
        %1654 = vxpose.xlu0.b32.start [1/16] %v963, 128
        %1655 = vxpose.xlu0.b32.cont [2/16] 0.0, 128
        %1656 = vxpose.xlu0.b32.cont [3/16] 0.0, 128
        %1657 = vxpose.xlu0.b32.cont [4/16] 0.0, 128
        %1658 = vxpose.xlu0.b32.cont [5/16] 0.0, 128
        %1659 = vxpose.xlu0.b32.cont [6/16] 0.0, 128
        %1660 = vxpose.xlu0.b32.cont [7/16] 0.0, 128
        %1661 = vxpose.xlu0.b32.cont [8/16] 0.0, 128
        %1662 = vxpose.xlu0.b32.cont [9/16] 0.0, 128
        %1663 = vxpose.xlu0.b32.cont [10/16] 0.0, 128
        %1664 = vxpose.xlu0.b32.cont [11/16] 0.0, 128
        %1665 = vxpose.xlu0.b32.cont [12/16] 0.0, 128
        %1666 = vxpose.xlu0.b32.cont [13/16] 0.0, 128
        %1667 = vxpose.xlu0.b32.cont [14/16] 0.0, 128
        %1668 = vxpose.xlu0.b32.cont [15/16] 0.0, 128
        %1669 = vxpose.xlu0.b32.end [16/16] 0.0, 128
        %v1670 = vpop.trf.xlu0
        %v1671 = vpop.trf.xlu0
        %v1672 = vpop.trf.xlu0
        %v1673 = vpop.trf.xlu0
        %v1674 = vpop.trf.xlu0
        %v1675 = vpop.trf.xlu0
        %v1676 = vpop.trf.xlu0
        %v1677 = vpop.trf.xlu0
        %v1678 = vpop.trf.xlu0
        %v1679 = vpop.trf.xlu0
        %v1680 = vpop.trf.xlu0
        %v1681 = vpop.trf.xlu0
        %v1682 = vpop.trf.xlu0
        %v1683 = vpop.trf.xlu0
        %v1684 = vpop.trf.xlu0
        %v1685 = vpop.trf.xlu0
        %1686 = vxpose.xlu0.b32.start [1/16] %v964, 128
        %1687 = vxpose.xlu0.b32.cont [2/16] 0.0, 128
        %1688 = vxpose.xlu0.b32.cont [3/16] 0.0, 128
        %1689 = vxpose.xlu0.b32.cont [4/16] 0.0, 128
        %1690 = vxpose.xlu0.b32.cont [5/16] 0.0, 128
        %1691 = vxpose.xlu0.b32.cont [6/16] 0.0, 128
        %1692 = vxpose.xlu0.b32.cont [7/16] 0.0, 128
        %1693 = vxpose.xlu0.b32.cont [8/16] 0.0, 128
        %1694 = vxpose.xlu0.b32.cont [9/16] 0.0, 128
        %1695 = vxpose.xlu0.b32.cont [10/16] 0.0, 128
        %1696 = vxpose.xlu0.b32.cont [11/16] 0.0, 128
        %1697 = vxpose.xlu0.b32.cont [12/16] 0.0, 128
        %1698 = vxpose.xlu0.b32.cont [13/16] 0.0, 128
        %1699 = vxpose.xlu0.b32.cont [14/16] 0.0, 128
        %1700 = vxpose.xlu0.b32.cont [15/16] 0.0, 128
        %1701 = vxpose.xlu0.b32.end [16/16] 0.0, 128
        %v1702 = vpop.trf.xlu0
        %v1703 = vpop.trf.xlu0
        %v1704 = vpop.trf.xlu0
        %v1705 = vpop.trf.xlu0
        %v1706 = vpop.trf.xlu0
        %v1707 = vpop.trf.xlu0
        %v1708 = vpop.trf.xlu0
        %v1709 = vpop.trf.xlu0
        %v1710 = vpop.trf.xlu0
        %v1711 = vpop.trf.xlu0
        %v1712 = vpop.trf.xlu0
        %v1713 = vpop.trf.xlu0
        %v1714 = vpop.trf.xlu0
        %v1715 = vpop.trf.xlu0
        %v1716 = vpop.trf.xlu0
        %v1717 = vpop.trf.xlu0
        %1718 = vxpose.xlu0.b32.start [1/16] %v965, 128
        %1719 = vxpose.xlu0.b32.cont [2/16] 0.0, 128
        %1720 = vxpose.xlu0.b32.cont [3/16] 0.0, 128
        %1721 = vxpose.xlu0.b32.cont [4/16] 0.0, 128
        %1722 = vxpose.xlu0.b32.cont [5/16] 0.0, 128
        %1723 = vxpose.xlu0.b32.cont [6/16] 0.0, 128
        %1724 = vxpose.xlu0.b32.cont [7/16] 0.0, 128
        %1725 = vxpose.xlu0.b32.cont [8/16] 0.0, 128
        %1726 = vxpose.xlu0.b32.cont [9/16] 0.0, 128
        %1727 = vxpose.xlu0.b32.cont [10/16] 0.0, 128
        %1728 = vxpose.xlu0.b32.cont [11/16] 0.0, 128
        %1729 = vxpose.xlu0.b32.cont [12/16] 0.0, 128
        %1730 = vxpose.xlu0.b32.cont [13/16] 0.0, 128
        %1731 = vxpose.xlu0.b32.cont [14/16] 0.0, 128
        %1732 = vxpose.xlu0.b32.cont [15/16] 0.0, 128
        %1733 = vxpose.xlu0.b32.end [16/16] 0.0, 128
        %v1734 = vpop.trf.xlu0
        %v1735 = vpop.trf.xlu0
        %v1736 = vpop.trf.xlu0
        %v1737 = vpop.trf.xlu0
        %v1738 = vpop.trf.xlu0
        %v1739 = vpop.trf.xlu0
        %v1740 = vpop.trf.xlu0
        %v1741 = vpop.trf.xlu0
        %v1742 = vpop.trf.xlu0
        %v1743 = vpop.trf.xlu0
        %v1744 = vpop.trf.xlu0
        %v1745 = vpop.trf.xlu0
        %v1746 = vpop.trf.xlu0
        %v1747 = vpop.trf.xlu0
        %v1748 = vpop.trf.xlu0
        %v1749 = vpop.trf.xlu0
        %1750 = vxpose.xlu0.b32.start [1/16] %v1094, 128
        %1751 = vxpose.xlu0.b32.cont [2/16] 0.0, 128
        %1752 = vxpose.xlu0.b32.cont [3/16] 0.0, 128
        %1753 = vxpose.xlu0.b32.cont [4/16] 0.0, 128
        %1754 = vxpose.xlu0.b32.cont [5/16] 0.0, 128
        %1755 = vxpose.xlu0.b32.cont [6/16] 0.0, 128
        %1756 = vxpose.xlu0.b32.cont [7/16] 0.0, 128
        %1757 = vxpose.xlu0.b32.cont [8/16] 0.0, 128
        %1758 = vxpose.xlu0.b32.cont [9/16] 0.0, 128
        %1759 = vxpose.xlu0.b32.cont [10/16] 0.0, 128
        %1760 = vxpose.xlu0.b32.cont [11/16] 0.0, 128
        %1761 = vxpose.xlu0.b32.cont [12/16] 0.0, 128
        %1762 = vxpose.xlu0.b32.cont [13/16] 0.0, 128
        %1763 = vxpose.xlu0.b32.cont [14/16] 0.0, 128
        %1764 = vxpose.xlu0.b32.cont [15/16] 0.0, 128
        %1765 = vxpose.xlu0.b32.end [16/16] 0.0, 128
        %v1766 = vpop.trf.xlu0
        %v1767 = vpop.trf.xlu0
        %v1768 = vpop.trf.xlu0
        %v1769 = vpop.trf.xlu0
        %v1770 = vpop.trf.xlu0
        %v1771 = vpop.trf.xlu0
        %v1772 = vpop.trf.xlu0
        %v1773 = vpop.trf.xlu0
        %v1774 = vpop.trf.xlu0
        %v1775 = vpop.trf.xlu0
        %v1776 = vpop.trf.xlu0
        %v1777 = vpop.trf.xlu0
        %v1778 = vpop.trf.xlu0
        %v1779 = vpop.trf.xlu0
        %v1780 = vpop.trf.xlu0
        %v1781 = vpop.trf.xlu0
        %1782 = vxpose.xlu0.b32.start [1/16] %v1095, 128
        %1783 = vxpose.xlu0.b32.cont [2/16] 0.0, 128
        %1784 = vxpose.xlu0.b32.cont [3/16] 0.0, 128
        %1785 = vxpose.xlu0.b32.cont [4/16] 0.0, 128
        %1786 = vxpose.xlu0.b32.cont [5/16] 0.0, 128
        %1787 = vxpose.xlu0.b32.cont [6/16] 0.0, 128
        %1788 = vxpose.xlu0.b32.cont [7/16] 0.0, 128
        %1789 = vxpose.xlu0.b32.cont [8/16] 0.0, 128
        %1790 = vxpose.xlu0.b32.cont [9/16] 0.0, 128
        %1791 = vxpose.xlu0.b32.cont [10/16] 0.0, 128
        %1792 = vxpose.xlu0.b32.cont [11/16] 0.0, 128
        %1793 = vxpose.xlu0.b32.cont [12/16] 0.0, 128
        %1794 = vxpose.xlu0.b32.cont [13/16] 0.0, 128
        %1795 = vxpose.xlu0.b32.cont [14/16] 0.0, 128
        %1796 = vxpose.xlu0.b32.cont [15/16] 0.0, 128
        %1797 = vxpose.xlu0.b32.end [16/16] 0.0, 128
        %v1798 = vpop.trf.xlu0
        %v1799 = vpop.trf.xlu0
        %v1800 = vpop.trf.xlu0
        %v1801 = vpop.trf.xlu0
        %v1802 = vpop.trf.xlu0
        %v1803 = vpop.trf.xlu0
        %v1804 = vpop.trf.xlu0
        %v1805 = vpop.trf.xlu0
        %v1806 = vpop.trf.xlu0
        %v1807 = vpop.trf.xlu0
        %v1808 = vpop.trf.xlu0
        %v1809 = vpop.trf.xlu0
        %v1810 = vpop.trf.xlu0
        %v1811 = vpop.trf.xlu0
        %v1812 = vpop.trf.xlu0
        %v1813 = vpop.trf.xlu0
        %1814 = vxpose.xlu0.b32.start [1/16] %v1096, 128
        %1815 = vxpose.xlu0.b32.cont [2/16] 0.0, 128
        %1816 = vxpose.xlu0.b32.cont [3/16] 0.0, 128
        %1817 = vxpose.xlu0.b32.cont [4/16] 0.0, 128
        %1818 = vxpose.xlu0.b32.cont [5/16] 0.0, 128
        %1819 = vxpose.xlu0.b32.cont [6/16] 0.0, 128
        %1820 = vxpose.xlu0.b32.cont [7/16] 0.0, 128
        %1821 = vxpose.xlu0.b32.cont [8/16] 0.0, 128
        %1822 = vxpose.xlu0.b32.cont [9/16] 0.0, 128
        %1823 = vxpose.xlu0.b32.cont [10/16] 0.0, 128
        %1824 = vxpose.xlu0.b32.cont [11/16] 0.0, 128
        %1825 = vxpose.xlu0.b32.cont [12/16] 0.0, 128
        %1826 = vxpose.xlu0.b32.cont [13/16] 0.0, 128
        %1827 = vxpose.xlu0.b32.cont [14/16] 0.0, 128
        %1828 = vxpose.xlu0.b32.cont [15/16] 0.0, 128
        %1829 = vxpose.xlu0.b32.end [16/16] 0.0, 128
        %v1830 = vpop.trf.xlu0
        %v1831 = vpop.trf.xlu0
        %v1832 = vpop.trf.xlu0
        %v1833 = vpop.trf.xlu0
        %v1834 = vpop.trf.xlu0
        %v1835 = vpop.trf.xlu0
        %v1836 = vpop.trf.xlu0
        %v1837 = vpop.trf.xlu0
        %v1838 = vpop.trf.xlu0
        %v1839 = vpop.trf.xlu0
        %v1840 = vpop.trf.xlu0
        %v1841 = vpop.trf.xlu0
        %v1842 = vpop.trf.xlu0
        %v1843 = vpop.trf.xlu0
        %v1844 = vpop.trf.xlu0
        %v1845 = vpop.trf.xlu0
        %1846 = vxpose.xlu0.b32.start [1/16] %v1097, 128
        %1847 = vxpose.xlu0.b32.cont [2/16] 0.0, 128
        %1848 = vxpose.xlu0.b32.cont [3/16] 0.0, 128
        %1849 = vxpose.xlu0.b32.cont [4/16] 0.0, 128
        %1850 = vxpose.xlu0.b32.cont [5/16] 0.0, 128
        %1851 = vxpose.xlu0.b32.cont [6/16] 0.0, 128
        %1852 = vxpose.xlu0.b32.cont [7/16] 0.0, 128
        %1853 = vxpose.xlu0.b32.cont [8/16] 0.0, 128
        %1854 = vxpose.xlu0.b32.cont [9/16] 0.0, 128
        %1855 = vxpose.xlu0.b32.cont [10/16] 0.0, 128
        %1856 = vxpose.xlu0.b32.cont [11/16] 0.0, 128
        %1857 = vxpose.xlu0.b32.cont [12/16] 0.0, 128
        %1858 = vxpose.xlu0.b32.cont [13/16] 0.0, 128
        %1859 = vxpose.xlu0.b32.cont [14/16] 0.0, 128
        %1860 = vxpose.xlu0.b32.cont [15/16] 0.0, 128
        %1861 = vxpose.xlu0.b32.end [16/16] 0.0, 128
        %v1862 = vpop.trf.xlu0
        %v1863 = vpop.trf.xlu0
        %v1864 = vpop.trf.xlu0
        %v1865 = vpop.trf.xlu0
        %v1866 = vpop.trf.xlu0
        %v1867 = vpop.trf.xlu0
        %v1868 = vpop.trf.xlu0
        %v1869 = vpop.trf.xlu0
        %v1870 = vpop.trf.xlu0
        %v1871 = vpop.trf.xlu0
        %v1872 = vpop.trf.xlu0
        %v1873 = vpop.trf.xlu0
        %v1874 = vpop.trf.xlu0
        %v1875 = vpop.trf.xlu0
        %v1876 = vpop.trf.xlu0
        %v1877 = vpop.trf.xlu0
        %1878 = vxpose.xlu0.b32.start [1/16] %v1098, 128
        %1879 = vxpose.xlu0.b32.cont [2/16] 0.0, 128
        %1880 = vxpose.xlu0.b32.cont [3/16] 0.0, 128
        %1881 = vxpose.xlu0.b32.cont [4/16] 0.0, 128
        %1882 = vxpose.xlu0.b32.cont [5/16] 0.0, 128
        %1883 = vxpose.xlu0.b32.cont [6/16] 0.0, 128
        %1884 = vxpose.xlu0.b32.cont [7/16] 0.0, 128
        %1885 = vxpose.xlu0.b32.cont [8/16] 0.0, 128
        %1886 = vxpose.xlu0.b32.cont [9/16] 0.0, 128
        %1887 = vxpose.xlu0.b32.cont [10/16] 0.0, 128
        %1888 = vxpose.xlu0.b32.cont [11/16] 0.0, 128
        %1889 = vxpose.xlu0.b32.cont [12/16] 0.0, 128
        %1890 = vxpose.xlu0.b32.cont [13/16] 0.0, 128
        %1891 = vxpose.xlu0.b32.cont [14/16] 0.0, 128
        %1892 = vxpose.xlu0.b32.cont [15/16] 0.0, 128
        %1893 = vxpose.xlu0.b32.end [16/16] 0.0, 128
        %v1894 = vpop.trf.xlu0
        %v1895 = vpop.trf.xlu0
        %v1896 = vpop.trf.xlu0
        %v1897 = vpop.trf.xlu0
        %v1898 = vpop.trf.xlu0
        %v1899 = vpop.trf.xlu0
        %v1900 = vpop.trf.xlu0
        %v1901 = vpop.trf.xlu0
        %v1902 = vpop.trf.xlu0
        %v1903 = vpop.trf.xlu0
        %v1904 = vpop.trf.xlu0
        %v1905 = vpop.trf.xlu0
        %v1906 = vpop.trf.xlu0
        %v1907 = vpop.trf.xlu0
        %v1908 = vpop.trf.xlu0
        %v1909 = vpop.trf.xlu0
        %1910 = vxpose.xlu0.b32.start [1/16] %v1099, 128
        %1911 = vxpose.xlu0.b32.cont [2/16] 0.0, 128
        %1912 = vxpose.xlu0.b32.cont [3/16] 0.0, 128
        %1913 = vxpose.xlu0.b32.cont [4/16] 0.0, 128
        %1914 = vxpose.xlu0.b32.cont [5/16] 0.0, 128
        %1915 = vxpose.xlu0.b32.cont [6/16] 0.0, 128
        %1916 = vxpose.xlu0.b32.cont [7/16] 0.0, 128
        %1917 = vxpose.xlu0.b32.cont [8/16] 0.0, 128
        %1918 = vxpose.xlu0.b32.cont [9/16] 0.0, 128
        %1919 = vxpose.xlu0.b32.cont [10/16] 0.0, 128
        %1920 = vxpose.xlu0.b32.cont [11/16] 0.0, 128
        %1921 = vxpose.xlu0.b32.cont [12/16] 0.0, 128
        %1922 = vxpose.xlu0.b32.cont [13/16] 0.0, 128
        %1923 = vxpose.xlu0.b32.cont [14/16] 0.0, 128
        %1924 = vxpose.xlu0.b32.cont [15/16] 0.0, 128
        %1925 = vxpose.xlu0.b32.end [16/16] 0.0, 128
        %v1926 = vpop.trf.xlu0
        %v1927 = vpop.trf.xlu0
        %v1928 = vpop.trf.xlu0
        %v1929 = vpop.trf.xlu0
        %v1930 = vpop.trf.xlu0
        %v1931 = vpop.trf.xlu0
        %v1932 = vpop.trf.xlu0
        %v1933 = vpop.trf.xlu0
        %v1934 = vpop.trf.xlu0
        %v1935 = vpop.trf.xlu0
        %v1936 = vpop.trf.xlu0
        %v1937 = vpop.trf.xlu0
        %v1938 = vpop.trf.xlu0
        %v1939 = vpop.trf.xlu0
        %v1940 = vpop.trf.xlu0
        %v1941 = vpop.trf.xlu0
        %1942 = vxpose.xlu0.b32.start [1/16] %v1100, 128
        %1943 = vxpose.xlu0.b32.cont [2/16] 0.0, 128
        %1944 = vxpose.xlu0.b32.cont [3/16] 0.0, 128
        %1945 = vxpose.xlu0.b32.cont [4/16] 0.0, 128
        %1946 = vxpose.xlu0.b32.cont [5/16] 0.0, 128
        %1947 = vxpose.xlu0.b32.cont [6/16] 0.0, 128
        %1948 = vxpose.xlu0.b32.cont [7/16] 0.0, 128
        %1949 = vxpose.xlu0.b32.cont [8/16] 0.0, 128
        %1950 = vxpose.xlu0.b32.cont [9/16] 0.0, 128
        %1951 = vxpose.xlu0.b32.cont [10/16] 0.0, 128
        %1952 = vxpose.xlu0.b32.cont [11/16] 0.0, 128
        %1953 = vxpose.xlu0.b32.cont [12/16] 0.0, 128
        %1954 = vxpose.xlu0.b32.cont [13/16] 0.0, 128
        %1955 = vxpose.xlu0.b32.cont [14/16] 0.0, 128
        %1956 = vxpose.xlu0.b32.cont [15/16] 0.0, 128
        %1957 = vxpose.xlu0.b32.end [16/16] 0.0, 128
        %v1958 = vpop.trf.xlu0
        %v1959 = vpop.trf.xlu0
        %v1960 = vpop.trf.xlu0
        %v1961 = vpop.trf.xlu0
        %v1962 = vpop.trf.xlu0
        %v1963 = vpop.trf.xlu0
        %v1964 = vpop.trf.xlu0
        %v1965 = vpop.trf.xlu0
        %v1966 = vpop.trf.xlu0
        %v1967 = vpop.trf.xlu0
        %v1968 = vpop.trf.xlu0
        %v1969 = vpop.trf.xlu0
        %v1970 = vpop.trf.xlu0
        %v1971 = vpop.trf.xlu0
        %v1972 = vpop.trf.xlu0
        %v1973 = vpop.trf.xlu0
        %1974 = vxpose.xlu0.b32.start [1/16] %v1101, 128
        %1975 = vxpose.xlu0.b32.cont [2/16] 0.0, 128
        %1976 = vxpose.xlu0.b32.cont [3/16] 0.0, 128
        %1977 = vxpose.xlu0.b32.cont [4/16] 0.0, 128
        %1978 = vxpose.xlu0.b32.cont [5/16] 0.0, 128
        %1979 = vxpose.xlu0.b32.cont [6/16] 0.0, 128
        %1980 = vxpose.xlu0.b32.cont [7/16] 0.0, 128
        %1981 = vxpose.xlu0.b32.cont [8/16] 0.0, 128
        %1982 = vxpose.xlu0.b32.cont [9/16] 0.0, 128
        %1983 = vxpose.xlu0.b32.cont [10/16] 0.0, 128
        %1984 = vxpose.xlu0.b32.cont [11/16] 0.0, 128
        %1985 = vxpose.xlu0.b32.cont [12/16] 0.0, 128
        %1986 = vxpose.xlu0.b32.cont [13/16] 0.0, 128
        %1987 = vxpose.xlu0.b32.cont [14/16] 0.0, 128
        %1988 = vxpose.xlu0.b32.cont [15/16] 0.0, 128
        %1989 = vxpose.xlu0.b32.end [16/16] 0.0, 128
        %v1990 = vpop.trf.xlu0
        %v1991 = vpop.trf.xlu0
        %v1992 = vpop.trf.xlu0
        %v1993 = vpop.trf.xlu0
        %v1994 = vpop.trf.xlu0
        %v1995 = vpop.trf.xlu0
        %v1996 = vpop.trf.xlu0
        %v1997 = vpop.trf.xlu0
        %v1998 = vpop.trf.xlu0
        %v1999 = vpop.trf.xlu0
        %v2000 = vpop.trf.xlu0
        %v2001 = vpop.trf.xlu0
        %v2002 = vpop.trf.xlu0
        %v2003 = vpop.trf.xlu0
        %v2004 = vpop.trf.xlu0
        %v2005 = vpop.trf.xlu0
        %2006 = vxpose.xlu0.b32.start [1/16] %v1230, 128
        %2007 = vxpose.xlu0.b32.cont [2/16] 0.0, 128
        %2008 = vxpose.xlu0.b32.cont [3/16] 0.0, 128
        %2009 = vxpose.xlu0.b32.cont [4/16] 0.0, 128
        %2010 = vxpose.xlu0.b32.cont [5/16] 0.0, 128
        %2011 = vxpose.xlu0.b32.cont [6/16] 0.0, 128
        %2012 = vxpose.xlu0.b32.cont [7/16] 0.0, 128
        %2013 = vxpose.xlu0.b32.cont [8/16] 0.0, 128
        %2014 = vxpose.xlu0.b32.cont [9/16] 0.0, 128
        %2015 = vxpose.xlu0.b32.cont [10/16] 0.0, 128
        %2016 = vxpose.xlu0.b32.cont [11/16] 0.0, 128
        %2017 = vxpose.xlu0.b32.cont [12/16] 0.0, 128
        %2018 = vxpose.xlu0.b32.cont [13/16] 0.0, 128
        %2019 = vxpose.xlu0.b32.cont [14/16] 0.0, 128
        %2020 = vxpose.xlu0.b32.cont [15/16] 0.0, 128
        %2021 = vxpose.xlu0.b32.end [16/16] 0.0, 128
        %v2022 = vpop.trf.xlu0
        %v2023 = vpop.trf.xlu0
        %v2024 = vpop.trf.xlu0
        %v2025 = vpop.trf.xlu0
        %v2026 = vpop.trf.xlu0
        %v2027 = vpop.trf.xlu0
        %v2028 = vpop.trf.xlu0
        %v2029 = vpop.trf.xlu0
        %v2030 = vpop.trf.xlu0
        %v2031 = vpop.trf.xlu0
        %v2032 = vpop.trf.xlu0
        %v2033 = vpop.trf.xlu0
        %v2034 = vpop.trf.xlu0
        %v2035 = vpop.trf.xlu0
        %v2036 = vpop.trf.xlu0
        %v2037 = vpop.trf.xlu0
        %2038 = vxpose.xlu0.b32.start [1/16] %v1231, 128
        %2039 = vxpose.xlu0.b32.cont [2/16] 0.0, 128
        %2040 = vxpose.xlu0.b32.cont [3/16] 0.0, 128
        %2041 = vxpose.xlu0.b32.cont [4/16] 0.0, 128
        %2042 = vxpose.xlu0.b32.cont [5/16] 0.0, 128
        %2043 = vxpose.xlu0.b32.cont [6/16] 0.0, 128
        %2044 = vxpose.xlu0.b32.cont [7/16] 0.0, 128
        %2045 = vxpose.xlu0.b32.cont [8/16] 0.0, 128
        %2046 = vxpose.xlu0.b32.cont [9/16] 0.0, 128
        %2047 = vxpose.xlu0.b32.cont [10/16] 0.0, 128
        %2048 = vxpose.xlu0.b32.cont [11/16] 0.0, 128
        %2049 = vxpose.xlu0.b32.cont [12/16] 0.0, 128
        %2050 = vxpose.xlu0.b32.cont [13/16] 0.0, 128
        %2051 = vxpose.xlu0.b32.cont [14/16] 0.0, 128
        %2052 = vxpose.xlu0.b32.cont [15/16] 0.0, 128
        %2053 = vxpose.xlu0.b32.end [16/16] 0.0, 128
        %v2054 = vpop.trf.xlu0
        %v2055 = vpop.trf.xlu0
        %v2056 = vpop.trf.xlu0
        %v2057 = vpop.trf.xlu0
        %v2058 = vpop.trf.xlu0
        %v2059 = vpop.trf.xlu0
        %v2060 = vpop.trf.xlu0
        %v2061 = vpop.trf.xlu0
        %v2062 = vpop.trf.xlu0
        %v2063 = vpop.trf.xlu0
        %v2064 = vpop.trf.xlu0
        %v2065 = vpop.trf.xlu0
        %v2066 = vpop.trf.xlu0
        %v2067 = vpop.trf.xlu0
        %v2068 = vpop.trf.xlu0
        %v2069 = vpop.trf.xlu0
        %2070 = vxpose.xlu0.b32.start [1/16] %v1232, 128
        %2071 = vxpose.xlu0.b32.cont [2/16] 0.0, 128
        %2072 = vxpose.xlu0.b32.cont [3/16] 0.0, 128
        %2073 = vxpose.xlu0.b32.cont [4/16] 0.0, 128
        %2074 = vxpose.xlu0.b32.cont [5/16] 0.0, 128
        %2075 = vxpose.xlu0.b32.cont [6/16] 0.0, 128
        %2076 = vxpose.xlu0.b32.cont [7/16] 0.0, 128
        %2077 = vxpose.xlu0.b32.cont [8/16] 0.0, 128
        %2078 = vxpose.xlu0.b32.cont [9/16] 0.0, 128
        %2079 = vxpose.xlu0.b32.cont [10/16] 0.0, 128
        %2080 = vxpose.xlu0.b32.cont [11/16] 0.0, 128
        %2081 = vxpose.xlu0.b32.cont [12/16] 0.0, 128
        %2082 = vxpose.xlu0.b32.cont [13/16] 0.0, 128
        %2083 = vxpose.xlu0.b32.cont [14/16] 0.0, 128
        %2084 = vxpose.xlu0.b32.cont [15/16] 0.0, 128
        %2085 = vxpose.xlu0.b32.end [16/16] 0.0, 128
        %v2086 = vpop.trf.xlu0
        %v2087 = vpop.trf.xlu0
        %v2088 = vpop.trf.xlu0
        %v2089 = vpop.trf.xlu0
        %v2090 = vpop.trf.xlu0
        %v2091 = vpop.trf.xlu0
        %v2092 = vpop.trf.xlu0
        %v2093 = vpop.trf.xlu0
        %v2094 = vpop.trf.xlu0
        %v2095 = vpop.trf.xlu0
        %v2096 = vpop.trf.xlu0
        %v2097 = vpop.trf.xlu0
        %v2098 = vpop.trf.xlu0
        %v2099 = vpop.trf.xlu0
        %v2100 = vpop.trf.xlu0
        %v2101 = vpop.trf.xlu0
        %2102 = vxpose.xlu0.b32.start [1/16] %v1233, 128
        %2103 = vxpose.xlu0.b32.cont [2/16] 0.0, 128
        %2104 = vxpose.xlu0.b32.cont [3/16] 0.0, 128
        %2105 = vxpose.xlu0.b32.cont [4/16] 0.0, 128
        %2106 = vxpose.xlu0.b32.cont [5/16] 0.0, 128
        %2107 = vxpose.xlu0.b32.cont [6/16] 0.0, 128
        %2108 = vxpose.xlu0.b32.cont [7/16] 0.0, 128
        %2109 = vxpose.xlu0.b32.cont [8/16] 0.0, 128
        %2110 = vxpose.xlu0.b32.cont [9/16] 0.0, 128
        %2111 = vxpose.xlu0.b32.cont [10/16] 0.0, 128
        %2112 = vxpose.xlu0.b32.cont [11/16] 0.0, 128
        %2113 = vxpose.xlu0.b32.cont [12/16] 0.0, 128
        %2114 = vxpose.xlu0.b32.cont [13/16] 0.0, 128
        %2115 = vxpose.xlu0.b32.cont [14/16] 0.0, 128
        %2116 = vxpose.xlu0.b32.cont [15/16] 0.0, 128
        %2117 = vxpose.xlu0.b32.end [16/16] 0.0, 128
        %v2118 = vpop.trf.xlu0
        %v2119 = vpop.trf.xlu0
        %v2120 = vpop.trf.xlu0
        %v2121 = vpop.trf.xlu0
        %v2122 = vpop.trf.xlu0
        %v2123 = vpop.trf.xlu0
        %v2124 = vpop.trf.xlu0
        %v2125 = vpop.trf.xlu0
        %v2126 = vpop.trf.xlu0
        %v2127 = vpop.trf.xlu0
        %v2128 = vpop.trf.xlu0
        %v2129 = vpop.trf.xlu0
        %v2130 = vpop.trf.xlu0
        %v2131 = vpop.trf.xlu0
        %v2132 = vpop.trf.xlu0
        %v2133 = vpop.trf.xlu0
        %2134 = vxpose.xlu0.b32.start [1/16] %v1234, 128
        %2135 = vxpose.xlu0.b32.cont [2/16] 0.0, 128
        %2136 = vxpose.xlu0.b32.cont [3/16] 0.0, 128
        %2137 = vxpose.xlu0.b32.cont [4/16] 0.0, 128
        %2138 = vxpose.xlu0.b32.cont [5/16] 0.0, 128
        %2139 = vxpose.xlu0.b32.cont [6/16] 0.0, 128
        %2140 = vxpose.xlu0.b32.cont [7/16] 0.0, 128
        %2141 = vxpose.xlu0.b32.cont [8/16] 0.0, 128
        %2142 = vxpose.xlu0.b32.cont [9/16] 0.0, 128
        %2143 = vxpose.xlu0.b32.cont [10/16] 0.0, 128
        %2144 = vxpose.xlu0.b32.cont [11/16] 0.0, 128
        %2145 = vxpose.xlu0.b32.cont [12/16] 0.0, 128
        %2146 = vxpose.xlu0.b32.cont [13/16] 0.0, 128
        %2147 = vxpose.xlu0.b32.cont [14/16] 0.0, 128
        %2148 = vxpose.xlu0.b32.cont [15/16] 0.0, 128
        %2149 = vxpose.xlu0.b32.end [16/16] 0.0, 128
        %v2150 = vpop.trf.xlu0
        %v2151 = vpop.trf.xlu0
        %v2152 = vpop.trf.xlu0
        %v2153 = vpop.trf.xlu0
        %v2154 = vpop.trf.xlu0
        %v2155 = vpop.trf.xlu0
        %v2156 = vpop.trf.xlu0
        %v2157 = vpop.trf.xlu0
        %v2158 = vpop.trf.xlu0
        %v2159 = vpop.trf.xlu0
        %v2160 = vpop.trf.xlu0
        %v2161 = vpop.trf.xlu0
        %v2162 = vpop.trf.xlu0
        %v2163 = vpop.trf.xlu0
        %v2164 = vpop.trf.xlu0
        %v2165 = vpop.trf.xlu0
        %2166 = vxpose.xlu0.b32.start [1/16] %v1235, 128
        %2167 = vxpose.xlu0.b32.cont [2/16] 0.0, 128
        %2168 = vxpose.xlu0.b32.cont [3/16] 0.0, 128
        %2169 = vxpose.xlu0.b32.cont [4/16] 0.0, 128
        %2170 = vxpose.xlu0.b32.cont [5/16] 0.0, 128
        %2171 = vxpose.xlu0.b32.cont [6/16] 0.0, 128
        %2172 = vxpose.xlu0.b32.cont [7/16] 0.0, 128
        %2173 = vxpose.xlu0.b32.cont [8/16] 0.0, 128
        %2174 = vxpose.xlu0.b32.cont [9/16] 0.0, 128
        %2175 = vxpose.xlu0.b32.cont [10/16] 0.0, 128
        %2176 = vxpose.xlu0.b32.cont [11/16] 0.0, 128
        %2177 = vxpose.xlu0.b32.cont [12/16] 0.0, 128
        %2178 = vxpose.xlu0.b32.cont [13/16] 0.0, 128
        %2179 = vxpose.xlu0.b32.cont [14/16] 0.0, 128
        %2180 = vxpose.xlu0.b32.cont [15/16] 0.0, 128
        %2181 = vxpose.xlu0.b32.end [16/16] 0.0, 128
        %v2182 = vpop.trf.xlu0
        %v2183 = vpop.trf.xlu0
        %v2184 = vpop.trf.xlu0
        %v2185 = vpop.trf.xlu0
        %v2186 = vpop.trf.xlu0
        %v2187 = vpop.trf.xlu0
        %v2188 = vpop.trf.xlu0
        %v2189 = vpop.trf.xlu0
        %v2190 = vpop.trf.xlu0
        %v2191 = vpop.trf.xlu0
        %v2192 = vpop.trf.xlu0
        %v2193 = vpop.trf.xlu0
        %v2194 = vpop.trf.xlu0
        %v2195 = vpop.trf.xlu0
        %v2196 = vpop.trf.xlu0
        %v2197 = vpop.trf.xlu0
        %2198 = vxpose.xlu0.b32.start [1/16] %v1236, 128
        %2199 = vxpose.xlu0.b32.cont [2/16] 0.0, 128
        %2200 = vxpose.xlu0.b32.cont [3/16] 0.0, 128
        %2201 = vxpose.xlu0.b32.cont [4/16] 0.0, 128
        %2202 = vxpose.xlu0.b32.cont [5/16] 0.0, 128
        %2203 = vxpose.xlu0.b32.cont [6/16] 0.0, 128
        %2204 = vxpose.xlu0.b32.cont [7/16] 0.0, 128
        %2205 = vxpose.xlu0.b32.cont [8/16] 0.0, 128
        %2206 = vxpose.xlu0.b32.cont [9/16] 0.0, 128
        %2207 = vxpose.xlu0.b32.cont [10/16] 0.0, 128
        %2208 = vxpose.xlu0.b32.cont [11/16] 0.0, 128
        %2209 = vxpose.xlu0.b32.cont [12/16] 0.0, 128
        %2210 = vxpose.xlu0.b32.cont [13/16] 0.0, 128
        %2211 = vxpose.xlu0.b32.cont [14/16] 0.0, 128
        %2212 = vxpose.xlu0.b32.cont [15/16] 0.0, 128
        %2213 = vxpose.xlu0.b32.end [16/16] 0.0, 128
        %v2214 = vpop.trf.xlu0
        %v2215 = vpop.trf.xlu0
        %v2216 = vpop.trf.xlu0
        %v2217 = vpop.trf.xlu0
        %v2218 = vpop.trf.xlu0
        %v2219 = vpop.trf.xlu0
        %v2220 = vpop.trf.xlu0
        %v2221 = vpop.trf.xlu0
        %v2222 = vpop.trf.xlu0
        %v2223 = vpop.trf.xlu0
        %v2224 = vpop.trf.xlu0
        %v2225 = vpop.trf.xlu0
        %v2226 = vpop.trf.xlu0
        %v2227 = vpop.trf.xlu0
        %v2228 = vpop.trf.xlu0
        %v2229 = vpop.trf.xlu0
        %2230 = vxpose.xlu0.b32.start [1/16] %v1237, 128
        %2231 = vxpose.xlu0.b32.cont [2/16] 0.0, 128
        %2232 = vxpose.xlu0.b32.cont [3/16] 0.0, 128
        %2233 = vxpose.xlu0.b32.cont [4/16] 0.0, 128
        %2234 = vxpose.xlu0.b32.cont [5/16] 0.0, 128
        %2235 = vxpose.xlu0.b32.cont [6/16] 0.0, 128
        %2236 = vxpose.xlu0.b32.cont [7/16] 0.0, 128
        %2237 = vxpose.xlu0.b32.cont [8/16] 0.0, 128
        %2238 = vxpose.xlu0.b32.cont [9/16] 0.0, 128
        %2239 = vxpose.xlu0.b32.cont [10/16] 0.0, 128
        %2240 = vxpose.xlu0.b32.cont [11/16] 0.0, 128
        %2241 = vxpose.xlu0.b32.cont [12/16] 0.0, 128
        %2242 = vxpose.xlu0.b32.cont [13/16] 0.0, 128
        %2243 = vxpose.xlu0.b32.cont [14/16] 0.0, 128
        %2244 = vxpose.xlu0.b32.cont [15/16] 0.0, 128
        %2245 = vxpose.xlu0.b32.end [16/16] 0.0, 128
        %v2246 = vpop.trf.xlu0
        %v2247 = vpop.trf.xlu0
        %v2248 = vpop.trf.xlu0
        %v2249 = vpop.trf.xlu0
        %v2250 = vpop.trf.xlu0
        %v2251 = vpop.trf.xlu0
        %v2252 = vpop.trf.xlu0
        %v2253 = vpop.trf.xlu0
        %v2254 = vpop.trf.xlu0
        %v2255 = vpop.trf.xlu0
        %v2256 = vpop.trf.xlu0
        %v2257 = vpop.trf.xlu0
        %v2258 = vpop.trf.xlu0
        %v2259 = vpop.trf.xlu0
        %v2260 = vpop.trf.xlu0
        %v2261 = vpop.trf.xlu0
        %v2262 = vcombine.low %v1254, %v1318
        %v2264 = vunpack.c.l.s4 1983009808
        %v2265 = vunpack.c.0.s8 %v2264
        %v2266 = vlaneseq
        %v2267 = vshrl.u32 %v2266, 7
        %v2268 = vsub.s32 %v2265, %v2267
        %v2269 = vrot.slane %v2262, %v2268
        %v2270 = vcombine.low %v1286, %v1350
        %v2272 = vunpack.c.l.s4 1983009808
        %v2273 = vunpack.c.0.s8 %v2272
        %v2274 = vlaneseq
        %v2275 = vshrl.u32 %v2274, 7
        %v2276 = vsub.s32 %v2273, %v2275
        %v2277 = vrot.slane %v2270, %v2276
        %v2278 = vcombine.low %v1382, %v1446
        %v2280 = vunpack.c.l.s4 1983009808
        %v2281 = vunpack.c.0.s8 %v2280
        %v2282 = vlaneseq
        %v2283 = vshrl.u32 %v2282, 7
        %v2284 = vsub.s32 %v2281, %v2283
        %v2285 = vrot.slane %v2278, %v2284
        %v2286 = vcombine.low %v1414, %v1478
        %v2288 = vunpack.c.l.s4 1983009808
        %v2289 = vunpack.c.0.s8 %v2288
        %v2290 = vlaneseq
        %v2291 = vshrl.u32 %v2290, 7
        %v2292 = vsub.s32 %v2289, %v2291
        %v2293 = vrot.slane %v2286, %v2292
        %v2294 = vcombine.low %v2269, %v2277
        %v2295 = vcombine.high %v2269, %v2277
        %v2297 = vunpack.c.l.s4 1934713408
        %v2298 = vunpack.c.0.s8 %v2297
        %v2299 = vlaneseq
        %v2300 = vshrl.u32 %v2299, 7
        %v2301 = vsub.s32 %v2298, %v2300
        %v2302 = vrot.slane %v2294, %v2301
        %v2304 = vunpack.c.l.s4 1934713408
        %v2305 = vunpack.c.0.s8 %v2304
        %v2306 = vlaneseq
        %v2307 = vshrl.u32 %v2306, 7
        %v2308 = vsub.s32 %v2305, %v2307
        %v2309 = vrot.slane %v2295, %v2308
        %v2310 = vcombine.low %v2285, %v2293
        %v2311 = vcombine.high %v2285, %v2293
        %v2313 = vunpack.c.l.s4 1934713408
        %v2314 = vunpack.c.0.s8 %v2313
        %v2315 = vlaneseq
        %v2316 = vshrl.u32 %v2315, 7
        %v2317 = vsub.s32 %v2314, %v2316
        %v2318 = vrot.slane %v2310, %v2317
        %v2320 = vunpack.c.l.s4 1934713408
        %v2321 = vunpack.c.0.s8 %v2320
        %v2322 = vlaneseq
        %v2323 = vshrl.u32 %v2322, 7
        %v2324 = vsub.s32 %v2321, %v2323
        %v2325 = vrot.slane %v2311, %v2324
        %v2326 = vcombine.low %v2302, %v2318
        %v2327 = vcombine.high %v2302, %v2318
        %v2328 = vcombine.low %v2309, %v2325
        %v2329 = vcombine.high %v2309, %v2325
        %v2330 = vcombine.low %v1510, %v1574
        %v2332 = vunpack.c.l.s4 1983009808
        %v2333 = vunpack.c.0.s8 %v2332
        %v2334 = vlaneseq
        %v2335 = vshrl.u32 %v2334, 7
        %v2336 = vsub.s32 %v2333, %v2335
        %v2337 = vrot.slane %v2330, %v2336
        %v2338 = vcombine.low %v1542, %v1606
        %v2340 = vunpack.c.l.s4 1983009808
        %v2341 = vunpack.c.0.s8 %v2340
        %v2342 = vlaneseq
        %v2343 = vshrl.u32 %v2342, 7
        %v2344 = vsub.s32 %v2341, %v2343
        %v2345 = vrot.slane %v2338, %v2344
        %v2346 = vcombine.low %v1638, %v1702
        %v2348 = vunpack.c.l.s4 1983009808
        %v2349 = vunpack.c.0.s8 %v2348
        %v2350 = vlaneseq
        %v2351 = vshrl.u32 %v2350, 7
        %v2352 = vsub.s32 %v2349, %v2351
        %v2353 = vrot.slane %v2346, %v2352
        %v2354 = vcombine.low %v1670, %v1734
        %v2356 = vunpack.c.l.s4 1983009808
        %v2357 = vunpack.c.0.s8 %v2356
        %v2358 = vlaneseq
        %v2359 = vshrl.u32 %v2358, 7
        %v2360 = vsub.s32 %v2357, %v2359
        %v2361 = vrot.slane %v2354, %v2360
        %v2362 = vcombine.low %v2337, %v2345
        %v2363 = vcombine.high %v2337, %v2345
        %v2365 = vunpack.c.l.s4 1934713408
        %v2366 = vunpack.c.0.s8 %v2365
        %v2367 = vlaneseq
        %v2368 = vshrl.u32 %v2367, 7
        %v2369 = vsub.s32 %v2366, %v2368
        %v2370 = vrot.slane %v2362, %v2369
        %v2372 = vunpack.c.l.s4 1934713408
        %v2373 = vunpack.c.0.s8 %v2372
        %v2374 = vlaneseq
        %v2375 = vshrl.u32 %v2374, 7
        %v2376 = vsub.s32 %v2373, %v2375
        %v2377 = vrot.slane %v2363, %v2376
        %v2378 = vcombine.low %v2353, %v2361
        %v2379 = vcombine.high %v2353, %v2361
        %v2381 = vunpack.c.l.s4 1934713408
        %v2382 = vunpack.c.0.s8 %v2381
        %v2383 = vlaneseq
        %v2384 = vshrl.u32 %v2383, 7
        %v2385 = vsub.s32 %v2382, %v2384
        %v2386 = vrot.slane %v2378, %v2385
        %v2388 = vunpack.c.l.s4 1934713408
        %v2389 = vunpack.c.0.s8 %v2388
        %v2390 = vlaneseq
        %v2391 = vshrl.u32 %v2390, 7
        %v2392 = vsub.s32 %v2389, %v2391
        %v2393 = vrot.slane %v2379, %v2392
        %v2394 = vcombine.low %v2370, %v2386
        %v2395 = vcombine.high %v2370, %v2386
        %v2396 = vcombine.low %v2377, %v2393
        %v2397 = vcombine.high %v2377, %v2393
        %v2398 = vcombine.low %v1766, %v1830
        %v2400 = vunpack.c.l.s4 1983009808
        %v2401 = vunpack.c.0.s8 %v2400
        %v2402 = vlaneseq
        %v2403 = vshrl.u32 %v2402, 7
        %v2404 = vsub.s32 %v2401, %v2403
        %v2405 = vrot.slane %v2398, %v2404
        %v2406 = vcombine.low %v1798, %v1862
        %v2408 = vunpack.c.l.s4 1983009808
        %v2409 = vunpack.c.0.s8 %v2408
        %v2410 = vlaneseq
        %v2411 = vshrl.u32 %v2410, 7
        %v2412 = vsub.s32 %v2409, %v2411
        %v2413 = vrot.slane %v2406, %v2412
        %v2414 = vcombine.low %v1894, %v1958
        %v2416 = vunpack.c.l.s4 1983009808
        %v2417 = vunpack.c.0.s8 %v2416
        %v2418 = vlaneseq
        %v2419 = vshrl.u32 %v2418, 7
        %v2420 = vsub.s32 %v2417, %v2419
        %v2421 = vrot.slane %v2414, %v2420
        %v2422 = vcombine.low %v1926, %v1990
        %v2424 = vunpack.c.l.s4 1983009808
        %v2425 = vunpack.c.0.s8 %v2424
        %v2426 = vlaneseq
        %v2427 = vshrl.u32 %v2426, 7
        %v2428 = vsub.s32 %v2425, %v2427
        %v2429 = vrot.slane %v2422, %v2428
        %v2430 = vcombine.low %v2405, %v2413
        %v2431 = vcombine.high %v2405, %v2413
        %v2433 = vunpack.c.l.s4 1934713408
        %v2434 = vunpack.c.0.s8 %v2433
        %v2435 = vlaneseq
        %v2436 = vshrl.u32 %v2435, 7
        %v2437 = vsub.s32 %v2434, %v2436
        %v2438 = vrot.slane %v2430, %v2437
        %v2440 = vunpack.c.l.s4 1934713408
        %v2441 = vunpack.c.0.s8 %v2440
        %v2442 = vlaneseq
        %v2443 = vshrl.u32 %v2442, 7
        %v2444 = vsub.s32 %v2441, %v2443
        %v2445 = vrot.slane %v2431, %v2444
        %v2446 = vcombine.low %v2421, %v2429
        %v2447 = vcombine.high %v2421, %v2429
        %v2449 = vunpack.c.l.s4 1934713408
        %v2450 = vunpack.c.0.s8 %v2449
        %v2451 = vlaneseq
        %v2452 = vshrl.u32 %v2451, 7
        %v2453 = vsub.s32 %v2450, %v2452
        %v2454 = vrot.slane %v2446, %v2453
        %v2456 = vunpack.c.l.s4 1934713408
        %v2457 = vunpack.c.0.s8 %v2456
        %v2458 = vlaneseq
        %v2459 = vshrl.u32 %v2458, 7
        %v2460 = vsub.s32 %v2457, %v2459
        %v2461 = vrot.slane %v2447, %v2460
        %v2462 = vcombine.low %v2438, %v2454
        %v2463 = vcombine.high %v2438, %v2454
        %v2464 = vcombine.low %v2445, %v2461
        %v2465 = vcombine.high %v2445, %v2461
        %v2466 = vcombine.low %v2022, %v2086
        %v2468 = vunpack.c.l.s4 1983009808
        %v2469 = vunpack.c.0.s8 %v2468
        %v2470 = vlaneseq
        %v2471 = vshrl.u32 %v2470, 7
        %v2472 = vsub.s32 %v2469, %v2471
        %v2473 = vrot.slane %v2466, %v2472
        %v2474 = vcombine.low %v2054, %v2118
        %v2476 = vunpack.c.l.s4 1983009808
        %v2477 = vunpack.c.0.s8 %v2476
        %v2478 = vlaneseq
        %v2479 = vshrl.u32 %v2478, 7
        %v2480 = vsub.s32 %v2477, %v2479
        %v2481 = vrot.slane %v2474, %v2480
        %v2482 = vcombine.low %v2150, %v2214
        %v2484 = vunpack.c.l.s4 1983009808
        %v2485 = vunpack.c.0.s8 %v2484
        %v2486 = vlaneseq
        %v2487 = vshrl.u32 %v2486, 7
        %v2488 = vsub.s32 %v2485, %v2487
        %v2489 = vrot.slane %v2482, %v2488
        %v2490 = vcombine.low %v2182, %v2246
        %v2492 = vunpack.c.l.s4 1983009808
        %v2493 = vunpack.c.0.s8 %v2492
        %v2494 = vlaneseq
        %v2495 = vshrl.u32 %v2494, 7
        %v2496 = vsub.s32 %v2493, %v2495
        %v2497 = vrot.slane %v2490, %v2496
        %v2498 = vcombine.low %v2473, %v2481
        %v2499 = vcombine.high %v2473, %v2481
        %v2501 = vunpack.c.l.s4 1934713408
        %v2502 = vunpack.c.0.s8 %v2501
        %v2503 = vlaneseq
        %v2504 = vshrl.u32 %v2503, 7
        %v2505 = vsub.s32 %v2502, %v2504
        %v2506 = vrot.slane %v2498, %v2505
        %v2508 = vunpack.c.l.s4 1934713408
        %v2509 = vunpack.c.0.s8 %v2508
        %v2510 = vlaneseq
        %v2511 = vshrl.u32 %v2510, 7
        %v2512 = vsub.s32 %v2509, %v2511
        %v2513 = vrot.slane %v2499, %v2512
        %v2514 = vcombine.low %v2489, %v2497
        %v2515 = vcombine.high %v2489, %v2497
        %v2517 = vunpack.c.l.s4 1934713408
        %v2518 = vunpack.c.0.s8 %v2517
        %v2519 = vlaneseq
        %v2520 = vshrl.u32 %v2519, 7
        %v2521 = vsub.s32 %v2518, %v2520
        %v2522 = vrot.slane %v2514, %v2521
        %v2524 = vunpack.c.l.s4 1934713408
        %v2525 = vunpack.c.0.s8 %v2524
        %v2526 = vlaneseq
        %v2527 = vshrl.u32 %v2526, 7
        %v2528 = vsub.s32 %v2525, %v2527
        %v2529 = vrot.slane %v2515, %v2528
        %v2530 = vcombine.low %v2506, %v2522
        %v2531 = vcombine.high %v2506, %v2522
        %v2532 = vcombine.low %v2513, %v2529
        %v2533 = vcombine.high %v2513, %v2529
        %vm2534 = vcmask 261120
        %v2536 = vsel %vm2534, %v434, 0
        %2538 = vmatprep.subr.mxu0 0.0
        %2539 = vmatpush1.msra.mxu0 %v2326
        %2540 = vmatprep.subr.mxu0 0.0
        %2541 = vmatpush1.msra.mxu0 %v2394
        %2542 = vmatprep.subr.mxu0 0.0
        %2543 = vmatpush1.msra.mxu0 %v2462
        %2544 = vmatprep.subr.mxu0 0.0
        %2545 = vmatpush1.msra.mxu0 %v2530
        %2546 = vmatprep.subr.mxu0 0.0
        %2547 = vmatpush1.msra.mxu0 0.0
        %2548 = vmatprep.subr.mxu0 0.0
        %2549 = vmatpush1.msra.mxu0 0.0
        %2550 = vmatprep.subr.mxu0 0.0
        %2551 = vmatpush1.msra.mxu0 0.0
        %2552 = vmatprep.subr.mxu0 0.0
        %2553 = vmatpush1.msra.mxu0 0.0
        %2554 = vmatprep.subr.mxu0 0.0
        %2555 = vmatpush1.msra.mxu0 0.0
        %2556 = vmatprep.subr.mxu0 0.0
        %2557 = vmatpush1.msra.mxu0 0.0
        %2558 = vmatprep.subr.mxu0 0.0
        %2559 = vmatpush1.msra.mxu0 0.0
        %2560 = vmatprep.subr.mxu0 0.0
        %2561 = vmatpush1.msra.mxu0 0.0
        %2562 = vmatprep.subr.mxu0 0.0
        %2563 = vmatpush1.msra.mxu0 0.0
        %2564 = vmatprep.subr.mxu0 0.0
        %2565 = vmatpush1.msra.mxu0 0.0
        %2566 = vmatprep.subr.mxu0 0.0
        %2567 = vmatpush1.msra.mxu0 0.0
        %2568 = vmatprep.subr.mxu0 0.0
        %2569 = vmatpush1.msra.mxu0 0.0
        %2570 = vmatprep.subr.mxu0 0.0
        %2571 = vmatpush1.msra.mxu0 0.0
        %2572 = vmatprep.subr.mxu0 0.0
        %2573 = vmatpush1.msra.mxu0 0.0
        %2574 = vmatprep.subr.mxu0 0.0
        %2575 = vmatpush1.msra.mxu0 0.0
        %2576 = vmatprep.subr.mxu0 0.0
        %2577 = vmatpush1.msra.mxu0 0.0
        %2578 = vmatprep.subr.mxu0 0.0
        %2579 = vmatpush1.msra.mxu0 0.0
        %2580 = vmatprep.subr.mxu0 0.0
        %2581 = vmatpush1.msra.mxu0 0.0
        %2582 = vmatprep.subr.mxu0 0.0
        %2583 = vmatpush1.msra.mxu0 0.0
        %2584 = vmatprep.subr.mxu0 0.0
        %2585 = vmatpush1.msra.mxu0 0.0
        %2586 = vmatprep.subr.mxu0 0.0
        %2587 = vmatpush1.msra.mxu0 0.0
        %2588 = vmatprep.subr.mxu0 0.0
        %2589 = vmatpush1.msra.mxu0 0.0
        %2590 = vmatprep.subr.mxu0 0.0
        %2591 = vmatpush1.msra.mxu0 0.0
        %2592 = vmatprep.subr.mxu0 0.0
        %2593 = vmatpush1.msra.mxu0 0.0
        %2594 = vmatprep.subr.mxu0 0.0
        %2595 = vmatpush1.msra.mxu0 0.0
        %2596 = vmatprep.subr.mxu0 0.0
        %2597 = vmatpush1.msra.mxu0 0.0
        %2598 = vmatprep.subr.mxu0 0.0
        %2599 = vmatpush1.msra.mxu0 0.0
        %2600 = vmatprep.subr.mxu0 0.0
        %2601 = vmatpush1.msra.mxu0 0.0
        %2602 = vmatprep.mubr.f32.mxu0 0.0
        %2603 = vmatmul.mubr.f32.gmra.mrb[0].mxu0 %v2536
        %v2604 = vpop.f32.mrb[0].mxu0
        %v2605 = vadd.f32 0.0, %v2604
        %v2606 = vpop.f32.mrb[0].mxu0
        %2607 = vdwg.mxu0
        %v2609 = vsel %vm2534, %v435, 0
        %2611 = vmatprep.subr.mxu0 0.0
        %2612 = vmatpush1.msra.mxu0 %v2327
        %2613 = vmatprep.subr.mxu0 0.0
        %2614 = vmatpush1.msra.mxu0 %v2395
        %2615 = vmatprep.subr.mxu0 0.0
        %2616 = vmatpush1.msra.mxu0 %v2463
        %2617 = vmatprep.subr.mxu0 0.0
        %2618 = vmatpush1.msra.mxu0 %v2531
        %2619 = vmatprep.subr.mxu0 0.0
        %2620 = vmatpush1.msra.mxu0 0.0
        %2621 = vmatprep.subr.mxu0 0.0
        %2622 = vmatpush1.msra.mxu0 0.0
        %2623 = vmatprep.subr.mxu0 0.0
        %2624 = vmatpush1.msra.mxu0 0.0
        %2625 = vmatprep.subr.mxu0 0.0
        %2626 = vmatpush1.msra.mxu0 0.0
        %2627 = vmatprep.subr.mxu0 0.0
        %2628 = vmatpush1.msra.mxu0 0.0
        %2629 = vmatprep.subr.mxu0 0.0
        %2630 = vmatpush1.msra.mxu0 0.0
        %2631 = vmatprep.subr.mxu0 0.0
        %2632 = vmatpush1.msra.mxu0 0.0
        %2633 = vmatprep.subr.mxu0 0.0
        %2634 = vmatpush1.msra.mxu0 0.0
        %2635 = vmatprep.subr.mxu0 0.0
        %2636 = vmatpush1.msra.mxu0 0.0
        %2637 = vmatprep.subr.mxu0 0.0
        %2638 = vmatpush1.msra.mxu0 0.0
        %2639 = vmatprep.subr.mxu0 0.0
        %2640 = vmatpush1.msra.mxu0 0.0
        %2641 = vmatprep.subr.mxu0 0.0
        %2642 = vmatpush1.msra.mxu0 0.0
        %2643 = vmatprep.subr.mxu0 0.0
        %2644 = vmatpush1.msra.mxu0 0.0
        %2645 = vmatprep.subr.mxu0 0.0
        %2646 = vmatpush1.msra.mxu0 0.0
        %2647 = vmatprep.subr.mxu0 0.0
        %2648 = vmatpush1.msra.mxu0 0.0
        %2649 = vmatprep.subr.mxu0 0.0
        %2650 = vmatpush1.msra.mxu0 0.0
        %2651 = vmatprep.subr.mxu0 0.0
        %2652 = vmatpush1.msra.mxu0 0.0
        %2653 = vmatprep.subr.mxu0 0.0
        %2654 = vmatpush1.msra.mxu0 0.0
        %2655 = vmatprep.subr.mxu0 0.0
        %2656 = vmatpush1.msra.mxu0 0.0
        %2657 = vmatprep.subr.mxu0 0.0
        %2658 = vmatpush1.msra.mxu0 0.0
        %2659 = vmatprep.subr.mxu0 0.0
        %2660 = vmatpush1.msra.mxu0 0.0
        %2661 = vmatprep.subr.mxu0 0.0
        %2662 = vmatpush1.msra.mxu0 0.0
        %2663 = vmatprep.subr.mxu0 0.0
        %2664 = vmatpush1.msra.mxu0 0.0
        %2665 = vmatprep.subr.mxu0 0.0
        %2666 = vmatpush1.msra.mxu0 0.0
        %2667 = vmatprep.subr.mxu0 0.0
        %2668 = vmatpush1.msra.mxu0 0.0
        %2669 = vmatprep.subr.mxu0 0.0
        %2670 = vmatpush1.msra.mxu0 0.0
        %2671 = vmatprep.subr.mxu0 0.0
        %2672 = vmatpush1.msra.mxu0 0.0
        %2673 = vmatprep.subr.mxu0 0.0
        %2674 = vmatpush1.msra.mxu0 0.0
        %2675 = vmatprep.mubr.f32.mxu0 0.0
        %2676 = vmatmul.mubr.f32.gmra.mrb[0].mxu0 %v2609
        %v2677 = vpop.f32.mrb[0].mxu0
        %v2678 = vadd.f32 0.0, %v2677
        %v2679 = vpop.f32.mrb[0].mxu0
        %2680 = vdwg.mxu0
        %v2682 = vsel %vm2534, %v436, 0
        %2684 = vmatprep.subr.mxu0 0.0
        %2685 = vmatpush1.msra.mxu0 %v2328
        %2686 = vmatprep.subr.mxu0 0.0
        %2687 = vmatpush1.msra.mxu0 %v2396
        %2688 = vmatprep.subr.mxu0 0.0
        %2689 = vmatpush1.msra.mxu0 %v2464
        %2690 = vmatprep.subr.mxu0 0.0
        %2691 = vmatpush1.msra.mxu0 %v2532
        %2692 = vmatprep.subr.mxu0 0.0
        %2693 = vmatpush1.msra.mxu0 0.0
        %2694 = vmatprep.subr.mxu0 0.0
        %2695 = vmatpush1.msra.mxu0 0.0
        %2696 = vmatprep.subr.mxu0 0.0
        %2697 = vmatpush1.msra.mxu0 0.0
        %2698 = vmatprep.subr.mxu0 0.0
        %2699 = vmatpush1.msra.mxu0 0.0
        %2700 = vmatprep.subr.mxu0 0.0
        %2701 = vmatpush1.msra.mxu0 0.0
        %2702 = vmatprep.subr.mxu0 0.0
        %2703 = vmatpush1.msra.mxu0 0.0
        %2704 = vmatprep.subr.mxu0 0.0
        %2705 = vmatpush1.msra.mxu0 0.0
        %2706 = vmatprep.subr.mxu0 0.0
        %2707 = vmatpush1.msra.mxu0 0.0
        %2708 = vmatprep.subr.mxu0 0.0
        %2709 = vmatpush1.msra.mxu0 0.0
        %2710 = vmatprep.subr.mxu0 0.0
        %2711 = vmatpush1.msra.mxu0 0.0
        %2712 = vmatprep.subr.mxu0 0.0
        %2713 = vmatpush1.msra.mxu0 0.0
        %2714 = vmatprep.subr.mxu0 0.0
        %2715 = vmatpush1.msra.mxu0 0.0
        %2716 = vmatprep.subr.mxu0 0.0
        %2717 = vmatpush1.msra.mxu0 0.0
        %2718 = vmatprep.subr.mxu0 0.0
        %2719 = vmatpush1.msra.mxu0 0.0
        %2720 = vmatprep.subr.mxu0 0.0
        %2721 = vmatpush1.msra.mxu0 0.0
        %2722 = vmatprep.subr.mxu0 0.0
        %2723 = vmatpush1.msra.mxu0 0.0
        %2724 = vmatprep.subr.mxu0 0.0
        %2725 = vmatpush1.msra.mxu0 0.0
        %2726 = vmatprep.subr.mxu0 0.0
        %2727 = vmatpush1.msra.mxu0 0.0
        %2728 = vmatprep.subr.mxu0 0.0
        %2729 = vmatpush1.msra.mxu0 0.0
        %2730 = vmatprep.subr.mxu0 0.0
        %2731 = vmatpush1.msra.mxu0 0.0
        %2732 = vmatprep.subr.mxu0 0.0
        %2733 = vmatpush1.msra.mxu0 0.0
        %2734 = vmatprep.subr.mxu0 0.0
        %2735 = vmatpush1.msra.mxu0 0.0
        %2736 = vmatprep.subr.mxu0 0.0
        %2737 = vmatpush1.msra.mxu0 0.0
        %2738 = vmatprep.subr.mxu0 0.0
        %2739 = vmatpush1.msra.mxu0 0.0
        %2740 = vmatprep.subr.mxu0 0.0
        %2741 = vmatpush1.msra.mxu0 0.0
        %2742 = vmatprep.subr.mxu0 0.0
        %2743 = vmatpush1.msra.mxu0 0.0
        %2744 = vmatprep.subr.mxu0 0.0
        %2745 = vmatpush1.msra.mxu0 0.0
        %2746 = vmatprep.subr.mxu0 0.0
        %2747 = vmatpush1.msra.mxu0 0.0
        %2748 = vmatprep.mubr.f32.mxu0 0.0
        %2749 = vmatmul.mubr.f32.gmra.mrb[0].mxu0 %v2682
        %v2750 = vpop.f32.mrb[0].mxu0
        %v2751 = vadd.f32 0.0, %v2750
        %v2752 = vpop.f32.mrb[0].mxu0
        %2753 = vdwg.mxu0
        %v2755 = vsel %vm2534, %v437, 0
        %2757 = vmatprep.subr.mxu0 0.0
        %2758 = vmatpush1.msra.mxu0 %v2329
        %2759 = vmatprep.subr.mxu0 0.0
        %2760 = vmatpush1.msra.mxu0 %v2397
        %2761 = vmatprep.subr.mxu0 0.0
        %2762 = vmatpush1.msra.mxu0 %v2465
        %2763 = vmatprep.subr.mxu0 0.0
        %2764 = vmatpush1.msra.mxu0 %v2533
        %2765 = vmatprep.subr.mxu0 0.0
        %2766 = vmatpush1.msra.mxu0 0.0
        %2767 = vmatprep.subr.mxu0 0.0
        %2768 = vmatpush1.msra.mxu0 0.0
        %2769 = vmatprep.subr.mxu0 0.0
        %2770 = vmatpush1.msra.mxu0 0.0
        %2771 = vmatprep.subr.mxu0 0.0
        %2772 = vmatpush1.msra.mxu0 0.0
        %2773 = vmatprep.subr.mxu0 0.0
        %2774 = vmatpush1.msra.mxu0 0.0
        %2775 = vmatprep.subr.mxu0 0.0
        %2776 = vmatpush1.msra.mxu0 0.0
        %2777 = vmatprep.subr.mxu0 0.0
        %2778 = vmatpush1.msra.mxu0 0.0
        %2779 = vmatprep.subr.mxu0 0.0
        %2780 = vmatpush1.msra.mxu0 0.0
        %2781 = vmatprep.subr.mxu0 0.0
        %2782 = vmatpush1.msra.mxu0 0.0
        %2783 = vmatprep.subr.mxu0 0.0
        %2784 = vmatpush1.msra.mxu0 0.0
        %2785 = vmatprep.subr.mxu0 0.0
        %2786 = vmatpush1.msra.mxu0 0.0
        %2787 = vmatprep.subr.mxu0 0.0
        %2788 = vmatpush1.msra.mxu0 0.0
        %2789 = vmatprep.subr.mxu0 0.0
        %2790 = vmatpush1.msra.mxu0 0.0
        %2791 = vmatprep.subr.mxu0 0.0
        %2792 = vmatpush1.msra.mxu0 0.0
        %2793 = vmatprep.subr.mxu0 0.0
        %2794 = vmatpush1.msra.mxu0 0.0
        %2795 = vmatprep.subr.mxu0 0.0
        %2796 = vmatpush1.msra.mxu0 0.0
        %2797 = vmatprep.subr.mxu0 0.0
        %2798 = vmatpush1.msra.mxu0 0.0
        %2799 = vmatprep.subr.mxu0 0.0
        %2800 = vmatpush1.msra.mxu0 0.0
        %2801 = vmatprep.subr.mxu0 0.0
        %2802 = vmatpush1.msra.mxu0 0.0
        %2803 = vmatprep.subr.mxu0 0.0
        %2804 = vmatpush1.msra.mxu0 0.0
        %2805 = vmatprep.subr.mxu0 0.0
        %2806 = vmatpush1.msra.mxu0 0.0
        %2807 = vmatprep.subr.mxu0 0.0
        %2808 = vmatpush1.msra.mxu0 0.0
        %2809 = vmatprep.subr.mxu0 0.0
        %2810 = vmatpush1.msra.mxu0 0.0
        %2811 = vmatprep.subr.mxu0 0.0
        %2812 = vmatpush1.msra.mxu0 0.0
        %2813 = vmatprep.subr.mxu0 0.0
        %2814 = vmatpush1.msra.mxu0 0.0
        %2815 = vmatprep.subr.mxu0 0.0
        %2816 = vmatpush1.msra.mxu0 0.0
        %2817 = vmatprep.subr.mxu0 0.0
        %2818 = vmatpush1.msra.mxu0 0.0
        %2819 = vmatprep.subr.mxu0 0.0
        %2820 = vmatpush1.msra.mxu0 0.0
        %2821 = vmatprep.mubr.f32.mxu0 0.0
        %2822 = vmatmul.mubr.f32.gmra.mrb[0].mxu0 %v2755
        %v2823 = vpop.f32.mrb[0].mxu0
        %v2824 = vadd.f32 0.0, %v2823
        %v2825 = vpop.f32.mrb[0].mxu0
        %2826 = vdwg.mxu0
        %v2827 = vld [vmem:[#allocation2] sm:$0xff]
        %v2828 = vld [vmem:[#allocation2 + $0x8] sm:$0xff]
        %v2829 = vld [vmem:[#allocation2 + $0x10] sm:$0xff]
        %v2830 = vld [vmem:[#allocation2 + $0x18] sm:$0xff]
        %vm2831 = vcmask 64512
        %v2832 = vsel %vm2831, %v2605, -inf
        %2833 = vmax.xlane.f32.xlu0 %v2832
        %v2834 = vpop.xlane.xlu0 %2833
        %v2835 = vsel %vm2831, %v2678, -inf
        %2836 = vmax.xlane.f32.xlu0 %v2835
        %v2837 = vpop.xlane.xlu0 %2836
        %v2838 = vsel %vm2831, %v2751, -inf
        %2839 = vmax.xlane.f32.xlu0 %v2838
        %v2840 = vpop.xlane.xlu0 %2839
        %v2841 = vsel %vm2831, %v2824, -inf
        %2842 = vmax.xlane.f32.xlu0 %v2841
        %v2843 = vpop.xlane.xlu0 %2842
        %v2844 = vmax.f32 %v2827, %v2834
        %v2845 = vmax.f32 %v2828, %v2837
        %v2846 = vmax.f32 %v2829, %v2840
        %v2847 = vmax.f32 %v2830, %v2843
        %v2848 = vsub.f32 %v2827, %v2844
        %v2849 = vsub.f32 %v2828, %v2845
        %v2850 = vsub.f32 %v2829, %v2846
        %v2851 = vsub.f32 %v2830, %v2847
        %v2852 = vmul.f32 %v2848, 1.442695
        %v2853 = vpow.pop %v2852
        %v2854 = vmul.f32 %v2849, 1.442695
        %v2855 = vpow.pop %v2854
        %v2856 = vmul.f32 %v2850, 1.442695
        %v2857 = vpow.pop %v2856
        %v2858 = vmul.f32 %v2851, 1.442695
        %v2859 = vpow.pop %v2858
        %2861 = vset.pattern.permute.xlu0 0
        %2862 = vperm.xlu0 %2861, %v2844
        %v2863 = vpop.permute.xlu0 %2862
        %2866 = vset.pattern.permute.xlu0 0
        %2867 = vperm.xlu0 %2866, %v2845
        %v2868 = vpop.permute.xlu0 %2867
        %2871 = vset.pattern.permute.xlu0 0
        %2872 = vperm.xlu0 %2871, %v2846
        %v2873 = vpop.permute.xlu0 %2872
        %2876 = vset.pattern.permute.xlu0 0
        %2877 = vperm.xlu0 %2876, %v2847
        %v2878 = vpop.permute.xlu0 %2877
        %v2880 = vsub.f32 %v2605, %v2863
        %v2881 = vsub.f32 %v2678, %v2868
        %v2882 = vsub.f32 %v2751, %v2873
        %v2883 = vsub.f32 %v2824, %v2878
        %v2884 = vmul.f32 %v2880, 1.442695
        %v2885 = vpow.pop %v2884
        %v2886 = vmul.f32 %v2881, 1.442695
        %v2887 = vpow.pop %v2886
        %v2888 = vmul.f32 %v2882, 1.442695
        %v2889 = vpow.pop %v2888
        %v2890 = vmul.f32 %v2883, 1.442695
        %v2891 = vpow.pop %v2890
        %v2892 = vld [vmem:[#allocation3] sm:$0xff]
        %v2893 = vld [vmem:[#allocation3 + $0x8] sm:$0xff]
        %v2894 = vld [vmem:[#allocation3 + $0x10] sm:$0xff]
        %v2895 = vld [vmem:[#allocation3 + $0x18] sm:$0xff]
        %v2896 = vmul.f32 %v2853, %v2892
        %v2897 = vmul.f32 %v2855, %v2893
        %v2898 = vmul.f32 %v2857, %v2894
        %v2899 = vmul.f32 %v2859, %v2895
        %v2900 = vsel %vm2831, %v2885, 0.0
        %2901 = vadd.xlane.f32.xlu0 %v2900
        %v2902 = vpop.xlane.xlu0 %2901
        %v2903 = vsel %vm2831, %v2887, 0.0
        %2904 = vadd.xlane.f32.xlu0 %v2903
        %v2905 = vpop.xlane.xlu0 %2904
        %v2906 = vsel %vm2831, %v2889, 0.0
        %2907 = vadd.xlane.f32.xlu0 %v2906
        %v2908 = vpop.xlane.xlu0 %2907
        %v2909 = vsel %vm2831, %v2891, 0.0
        %2910 = vadd.xlane.f32.xlu0 %v2909
        %v2911 = vpop.xlane.xlu0 %2910
        %v2912 = vadd.f32 %v2896, %v2902
        %v2913 = vadd.f32 %v2897, %v2905
        %v2914 = vadd.f32 %v2898, %v2908
        %v2915 = vadd.f32 %v2899, %v2911
        %vm2916 = vcmask 7168
        %2917 = vst.msk [vmem:[#allocation3] sm:$0xff] %vm2916, %v2912
        %2918 = vst.msk [vmem:[#allocation3 + $0x8] sm:$0xff] %vm2916, %v2913
        %2919 = vst.msk [vmem:[#allocation3 + $0x10] sm:$0xff] %vm2916, %v2914
        %2920 = vst.msk [vmem:[#allocation3 + $0x18] sm:$0xff] %vm2916, %v2915
        %v2921 = vcombine.low %v362, %v364
        %v2923 = vunpack.c.l.s4 1983009808
        %v2924 = vunpack.c.0.s8 %v2923
        %v2925 = vlaneseq
        %v2926 = vshrl.u32 %v2925, 7
        %v2927 = vsub.s32 %v2924, %v2926
        %v2928 = vrot.slane %v2921, %v2927
        %v2929 = vcombine.low %v363, %v365
        %v2931 = vunpack.c.l.s4 1983009808
        %v2932 = vunpack.c.0.s8 %v2931
        %v2933 = vlaneseq
        %v2934 = vshrl.u32 %v2933, 7
        %v2935 = vsub.s32 %v2932, %v2934
        %v2936 = vrot.slane %v2929, %v2935
        %v2937 = vcombine.low %v366, %v368
        %v2939 = vunpack.c.l.s4 1983009808
        %v2940 = vunpack.c.0.s8 %v2939
        %v2941 = vlaneseq
        %v2942 = vshrl.u32 %v2941, 7
        %v2943 = vsub.s32 %v2940, %v2942
        %v2944 = vrot.slane %v2937, %v2943
        %v2945 = vcombine.low %v367, %v369
        %v2947 = vunpack.c.l.s4 1983009808
        %v2948 = vunpack.c.0.s8 %v2947
        %v2949 = vlaneseq
        %v2950 = vshrl.u32 %v2949, 7
        %v2951 = vsub.s32 %v2948, %v2950
        %v2952 = vrot.slane %v2945, %v2951
        %v2953 = vcombine.low %v2928, %v2936
        %v2954 = vcombine.high %v2928, %v2936
        %v2956 = vunpack.c.l.s4 1934713408
        %v2957 = vunpack.c.0.s8 %v2956
        %v2958 = vlaneseq
        %v2959 = vshrl.u32 %v2958, 7
        %v2960 = vsub.s32 %v2957, %v2959
        %v2961 = vrot.slane %v2953, %v2960
        %v2963 = vunpack.c.l.s4 1934713408
        %v2964 = vunpack.c.0.s8 %v2963
        %v2965 = vlaneseq
        %v2966 = vshrl.u32 %v2965, 7
        %v2967 = vsub.s32 %v2964, %v2966
        %v2968 = vrot.slane %v2954, %v2967
        %v2969 = vcombine.low %v2944, %v2952
        %v2970 = vcombine.high %v2944, %v2952
        %v2972 = vunpack.c.l.s4 1934713408
        %v2973 = vunpack.c.0.s8 %v2972
        %v2974 = vlaneseq
        %v2975 = vshrl.u32 %v2974, 7
        %v2976 = vsub.s32 %v2973, %v2975
        %v2977 = vrot.slane %v2969, %v2976
        %v2979 = vunpack.c.l.s4 1934713408
        %v2980 = vunpack.c.0.s8 %v2979
        %v2981 = vlaneseq
        %v2982 = vshrl.u32 %v2981, 7
        %v2983 = vsub.s32 %v2980, %v2982
        %v2984 = vrot.slane %v2970, %v2983
        %v2985 = vcombine.low %v2961, %v2977
        %v2986 = vcombine.high %v2961, %v2977
        %v2987 = vcombine.low %v2968, %v2984
        %v2988 = vcombine.high %v2968, %v2984
        %v2990 = vsel %vm2831, %v2885, 0
        %2992 = vmatprep.subr.mxu0 0.0
        %2993 = vmatpush1.msra.mxu0 %v2985
        %2994 = vmatprep.subr.mxu0 0.0
        %2995 = vmatpush1.msra.mxu0 0.0
        %2996 = vmatprep.subr.mxu0 0.0
        %2997 = vmatpush1.msra.mxu0 0.0
        %2998 = vmatprep.subr.mxu0 0.0
        %2999 = vmatpush1.msra.mxu0 0.0
        %3000 = vmatprep.subr.mxu0 0.0
        %3001 = vmatpush1.msra.mxu0 0.0
        %3002 = vmatprep.subr.mxu0 0.0
        %3003 = vmatpush1.msra.mxu0 0.0
        %3004 = vmatprep.subr.mxu0 0.0
        %3005 = vmatpush1.msra.mxu0 0.0
        %3006 = vmatprep.subr.mxu0 0.0
        %3007 = vmatpush1.msra.mxu0 0.0
        %3008 = vmatprep.subr.mxu0 0.0
        %3009 = vmatpush1.msra.mxu0 0.0
        %3010 = vmatprep.subr.mxu0 0.0
        %3011 = vmatpush1.msra.mxu0 0.0
        %3012 = vmatprep.subr.mxu0 0.0
        %3013 = vmatpush1.msra.mxu0 0.0
        %3014 = vmatprep.subr.mxu0 0.0
        %3015 = vmatpush1.msra.mxu0 0.0
        %3016 = vmatprep.subr.mxu0 0.0
        %3017 = vmatpush1.msra.mxu0 0.0
        %3018 = vmatprep.subr.mxu0 0.0
        %3019 = vmatpush1.msra.mxu0 0.0
        %3020 = vmatprep.subr.mxu0 0.0
        %3021 = vmatpush1.msra.mxu0 0.0
        %3022 = vmatprep.subr.mxu0 0.0
        %3023 = vmatpush1.msra.mxu0 0.0
        %3024 = vmatprep.subr.mxu0 0.0
        %3025 = vmatpush1.msra.mxu0 0.0
        %3026 = vmatprep.subr.mxu0 0.0
        %3027 = vmatpush1.msra.mxu0 0.0
        %3028 = vmatprep.subr.mxu0 0.0
        %3029 = vmatpush1.msra.mxu0 0.0
        %3030 = vmatprep.subr.mxu0 0.0
        %3031 = vmatpush1.msra.mxu0 0.0
        %3032 = vmatprep.subr.mxu0 0.0
        %3033 = vmatpush1.msra.mxu0 0.0
        %3034 = vmatprep.subr.mxu0 0.0
        %3035 = vmatpush1.msra.mxu0 0.0
        %3036 = vmatprep.subr.mxu0 0.0
        %3037 = vmatpush1.msra.mxu0 0.0
        %3038 = vmatprep.subr.mxu0 0.0
        %3039 = vmatpush1.msra.mxu0 0.0
        %3040 = vmatprep.subr.mxu0 0.0
        %3041 = vmatpush1.msra.mxu0 0.0
        %3042 = vmatprep.subr.mxu0 0.0
        %3043 = vmatpush1.msra.mxu0 0.0
        %3044 = vmatprep.subr.mxu0 0.0
        %3045 = vmatpush1.msra.mxu0 0.0
        %3046 = vmatprep.subr.mxu0 0.0
        %3047 = vmatpush1.msra.mxu0 0.0
        %3048 = vmatprep.subr.mxu0 0.0
        %3049 = vmatpush1.msra.mxu0 0.0
        %3050 = vmatprep.subr.mxu0 0.0
        %3051 = vmatpush1.msra.mxu0 0.0
        %3052 = vmatprep.subr.mxu0 0.0
        %3053 = vmatpush1.msra.mxu0 0.0
        %3054 = vmatprep.subr.mxu0 0.0
        %3055 = vmatpush1.msra.mxu0 0.0
        %3056 = vmatprep.mubr.f32.mxu0 0.0
        %3057 = vmatmul.mubr.f32.gmra.mrb[0].mxu0 %v2990
        %v3058 = vpop.f32.mrb[0].mxu0
        %v3059 = vadd.f32 0.0, %v3058
        %v3060 = vpop.f32.mrb[0].mxu0
        %3061 = vdwg.mxu0
        %v3063 = vsel %vm2831, %v2887, 0
        %3065 = vmatprep.subr.mxu0 0.0
        %3066 = vmatpush1.msra.mxu0 %v2986
        %3067 = vmatprep.subr.mxu0 0.0
        %3068 = vmatpush1.msra.mxu0 0.0
        %3069 = vmatprep.subr.mxu0 0.0
        %3070 = vmatpush1.msra.mxu0 0.0
        %3071 = vmatprep.subr.mxu0 0.0
        %3072 = vmatpush1.msra.mxu0 0.0
        %3073 = vmatprep.subr.mxu0 0.0
        %3074 = vmatpush1.msra.mxu0 0.0
        %3075 = vmatprep.subr.mxu0 0.0
        %3076 = vmatpush1.msra.mxu0 0.0
        %3077 = vmatprep.subr.mxu0 0.0
        %3078 = vmatpush1.msra.mxu0 0.0
        %3079 = vmatprep.subr.mxu0 0.0
        %3080 = vmatpush1.msra.mxu0 0.0
        %3081 = vmatprep.subr.mxu0 0.0
        %3082 = vmatpush1.msra.mxu0 0.0
        %3083 = vmatprep.subr.mxu0 0.0
        %3084 = vmatpush1.msra.mxu0 0.0
        %3085 = vmatprep.subr.mxu0 0.0
        %3086 = vmatpush1.msra.mxu0 0.0
        %3087 = vmatprep.subr.mxu0 0.0
        %3088 = vmatpush1.msra.mxu0 0.0
        %3089 = vmatprep.subr.mxu0 0.0
        %3090 = vmatpush1.msra.mxu0 0.0
        %3091 = vmatprep.subr.mxu0 0.0
        %3092 = vmatpush1.msra.mxu0 0.0
        %3093 = vmatprep.subr.mxu0 0.0
        %3094 = vmatpush1.msra.mxu0 0.0
        %3095 = vmatprep.subr.mxu0 0.0
        %3096 = vmatpush1.msra.mxu0 0.0
        %3097 = vmatprep.subr.mxu0 0.0
        %3098 = vmatpush1.msra.mxu0 0.0
        %3099 = vmatprep.subr.mxu0 0.0
        %3100 = vmatpush1.msra.mxu0 0.0
        %3101 = vmatprep.subr.mxu0 0.0
        %3102 = vmatpush1.msra.mxu0 0.0
        %3103 = vmatprep.subr.mxu0 0.0
        %3104 = vmatpush1.msra.mxu0 0.0
        %3105 = vmatprep.subr.mxu0 0.0
        %3106 = vmatpush1.msra.mxu0 0.0
        %3107 = vmatprep.subr.mxu0 0.0
        %3108 = vmatpush1.msra.mxu0 0.0
        %3109 = vmatprep.subr.mxu0 0.0
        %3110 = vmatpush1.msra.mxu0 0.0
        %3111 = vmatprep.subr.mxu0 0.0
        %3112 = vmatpush1.msra.mxu0 0.0
        %3113 = vmatprep.subr.mxu0 0.0
        %3114 = vmatpush1.msra.mxu0 0.0
        %3115 = vmatprep.subr.mxu0 0.0
        %3116 = vmatpush1.msra.mxu0 0.0
        %3117 = vmatprep.subr.mxu0 0.0
        %3118 = vmatpush1.msra.mxu0 0.0
        %3119 = vmatprep.subr.mxu0 0.0
        %3120 = vmatpush1.msra.mxu0 0.0
        %3121 = vmatprep.subr.mxu0 0.0
        %3122 = vmatpush1.msra.mxu0 0.0
        %3123 = vmatprep.subr.mxu0 0.0
        %3124 = vmatpush1.msra.mxu0 0.0
        %3125 = vmatprep.subr.mxu0 0.0
        %3126 = vmatpush1.msra.mxu0 0.0
        %3127 = vmatprep.subr.mxu0 0.0
        %3128 = vmatpush1.msra.mxu0 0.0
        %3129 = vmatprep.mubr.f32.mxu0 0.0
        %3130 = vmatmul.mubr.f32.gmra.mrb[0].mxu0 %v3063
        %v3131 = vpop.f32.mrb[0].mxu0
        %v3132 = vadd.f32 0.0, %v3131
        %v3133 = vpop.f32.mrb[0].mxu0
        %3134 = vdwg.mxu0
        %v3136 = vsel %vm2831, %v2889, 0
        %3138 = vmatprep.subr.mxu0 0.0
        %3139 = vmatpush1.msra.mxu0 %v2987
        %3140 = vmatprep.subr.mxu0 0.0
        %3141 = vmatpush1.msra.mxu0 0.0
        %3142 = vmatprep.subr.mxu0 0.0
        %3143 = vmatpush1.msra.mxu0 0.0
        %3144 = vmatprep.subr.mxu0 0.0
        %3145 = vmatpush1.msra.mxu0 0.0
        %3146 = vmatprep.subr.mxu0 0.0
        %3147 = vmatpush1.msra.mxu0 0.0
        %3148 = vmatprep.subr.mxu0 0.0
        %3149 = vmatpush1.msra.mxu0 0.0
        %3150 = vmatprep.subr.mxu0 0.0
        %3151 = vmatpush1.msra.mxu0 0.0
        %3152 = vmatprep.subr.mxu0 0.0
        %3153 = vmatpush1.msra.mxu0 0.0
        %3154 = vmatprep.subr.mxu0 0.0
        %3155 = vmatpush1.msra.mxu0 0.0
        %3156 = vmatprep.subr.mxu0 0.0
        %3157 = vmatpush1.msra.mxu0 0.0
        %3158 = vmatprep.subr.mxu0 0.0
        %3159 = vmatpush1.msra.mxu0 0.0
        %3160 = vmatprep.subr.mxu0 0.0
        %3161 = vmatpush1.msra.mxu0 0.0
        %3162 = vmatprep.subr.mxu0 0.0
        %3163 = vmatpush1.msra.mxu0 0.0
        %3164 = vmatprep.subr.mxu0 0.0
        %3165 = vmatpush1.msra.mxu0 0.0
        %3166 = vmatprep.subr.mxu0 0.0
        %3167 = vmatpush1.msra.mxu0 0.0
        %3168 = vmatprep.subr.mxu0 0.0
        %3169 = vmatpush1.msra.mxu0 0.0
        %3170 = vmatprep.subr.mxu0 0.0
        %3171 = vmatpush1.msra.mxu0 0.0
        %3172 = vmatprep.subr.mxu0 0.0
        %3173 = vmatpush1.msra.mxu0 0.0
        %3174 = vmatprep.subr.mxu0 0.0
        %3175 = vmatpush1.msra.mxu0 0.0
        %3176 = vmatprep.subr.mxu0 0.0
        %3177 = vmatpush1.msra.mxu0 0.0
        %3178 = vmatprep.subr.mxu0 0.0
        %3179 = vmatpush1.msra.mxu0 0.0
        %3180 = vmatprep.subr.mxu0 0.0
        %3181 = vmatpush1.msra.mxu0 0.0
        %3182 = vmatprep.subr.mxu0 0.0
        %3183 = vmatpush1.msra.mxu0 0.0
        %3184 = vmatprep.subr.mxu0 0.0
        %3185 = vmatpush1.msra.mxu0 0.0
        %3186 = vmatprep.subr.mxu0 0.0
        %3187 = vmatpush1.msra.mxu0 0.0
        %3188 = vmatprep.subr.mxu0 0.0
        %3189 = vmatpush1.msra.mxu0 0.0
        %3190 = vmatprep.subr.mxu0 0.0
        %3191 = vmatpush1.msra.mxu0 0.0
        %3192 = vmatprep.subr.mxu0 0.0
        %3193 = vmatpush1.msra.mxu0 0.0
        %3194 = vmatprep.subr.mxu0 0.0
        %3195 = vmatpush1.msra.mxu0 0.0
        %3196 = vmatprep.subr.mxu0 0.0
        %3197 = vmatpush1.msra.mxu0 0.0
        %3198 = vmatprep.subr.mxu0 0.0
        %3199 = vmatpush1.msra.mxu0 0.0
        %3200 = vmatprep.subr.mxu0 0.0
        %3201 = vmatpush1.msra.mxu0 0.0
        %3202 = vmatprep.mubr.f32.mxu0 0.0
        %3203 = vmatmul.mubr.f32.gmra.mrb[0].mxu0 %v3136
        %v3204 = vpop.f32.mrb[0].mxu0
        %v3205 = vadd.f32 0.0, %v3204
        %v3206 = vpop.f32.mrb[0].mxu0
        %3207 = vdwg.mxu0
        %v3209 = vsel %vm2831, %v2891, 0
        %3211 = vmatprep.subr.mxu0 0.0
        %3212 = vmatpush1.msra.mxu0 %v2988
        %3213 = vmatprep.subr.mxu0 0.0
        %3214 = vmatpush1.msra.mxu0 0.0
        %3215 = vmatprep.subr.mxu0 0.0
        %3216 = vmatpush1.msra.mxu0 0.0
        %3217 = vmatprep.subr.mxu0 0.0
        %3218 = vmatpush1.msra.mxu0 0.0
        %3219 = vmatprep.subr.mxu0 0.0
        %3220 = vmatpush1.msra.mxu0 0.0
        %3221 = vmatprep.subr.mxu0 0.0
        %3222 = vmatpush1.msra.mxu0 0.0
        %3223 = vmatprep.subr.mxu0 0.0
        %3224 = vmatpush1.msra.mxu0 0.0
        %3225 = vmatprep.subr.mxu0 0.0
        %3226 = vmatpush1.msra.mxu0 0.0
        %3227 = vmatprep.subr.mxu0 0.0
        %3228 = vmatpush1.msra.mxu0 0.0
        %3229 = vmatprep.subr.mxu0 0.0
        %3230 = vmatpush1.msra.mxu0 0.0
        %3231 = vmatprep.subr.mxu0 0.0
        %3232 = vmatpush1.msra.mxu0 0.0
        %3233 = vmatprep.subr.mxu0 0.0
        %3234 = vmatpush1.msra.mxu0 0.0
        %3235 = vmatprep.subr.mxu0 0.0
        %3236 = vmatpush1.msra.mxu0 0.0
        %3237 = vmatprep.subr.mxu0 0.0
        %3238 = vmatpush1.msra.mxu0 0.0
        %3239 = vmatprep.subr.mxu0 0.0
        %3240 = vmatpush1.msra.mxu0 0.0
        %3241 = vmatprep.subr.mxu0 0.0
        %3242 = vmatpush1.msra.mxu0 0.0
        %3243 = vmatprep.subr.mxu0 0.0
        %3244 = vmatpush1.msra.mxu0 0.0
        %3245 = vmatprep.subr.mxu0 0.0
        %3246 = vmatpush1.msra.mxu0 0.0
        %3247 = vmatprep.subr.mxu0 0.0
        %3248 = vmatpush1.msra.mxu0 0.0
        %3249 = vmatprep.subr.mxu0 0.0
        %3250 = vmatpush1.msra.mxu0 0.0
        %3251 = vmatprep.subr.mxu0 0.0
        %3252 = vmatpush1.msra.mxu0 0.0
        %3253 = vmatprep.subr.mxu0 0.0
        %3254 = vmatpush1.msra.mxu0 0.0
        %3255 = vmatprep.subr.mxu0 0.0
        %3256 = vmatpush1.msra.mxu0 0.0
        %3257 = vmatprep.subr.mxu0 0.0
        %3258 = vmatpush1.msra.mxu0 0.0
        %3259 = vmatprep.subr.mxu0 0.0
        %3260 = vmatpush1.msra.mxu0 0.0
        %3261 = vmatprep.subr.mxu0 0.0
        %3262 = vmatpush1.msra.mxu0 0.0
        %3263 = vmatprep.subr.mxu0 0.0
        %3264 = vmatpush1.msra.mxu0 0.0
        %3265 = vmatprep.subr.mxu0 0.0
        %3266 = vmatpush1.msra.mxu0 0.0
        %3267 = vmatprep.subr.mxu0 0.0
        %3268 = vmatpush1.msra.mxu0 0.0
        %3269 = vmatprep.subr.mxu0 0.0
        %3270 = vmatpush1.msra.mxu0 0.0
        %3271 = vmatprep.subr.mxu0 0.0
        %3272 = vmatpush1.msra.mxu0 0.0
        %3273 = vmatprep.subr.mxu0 0.0
        %3274 = vmatpush1.msra.mxu0 0.0
        %3275 = vmatprep.mubr.f32.mxu0 0.0
        %3276 = vmatmul.mubr.f32.gmra.mrb[0].mxu0 %v3209
        %v3277 = vpop.f32.mrb[0].mxu0
        %v3278 = vadd.f32 0.0, %v3277
        %v3279 = vpop.f32.mrb[0].mxu0
        %3280 = vdwg.mxu0
        %v3281 = vld [vmem:[#allocation4] sm:$0xff]
        %v3282 = vld [vmem:[#allocation4 + $0x8] sm:$0xff]
        %v3283 = vld [vmem:[#allocation4 + $0x10] sm:$0xff]
        %v3284 = vld [vmem:[#allocation4 + $0x18] sm:$0xff]
        %3286 = vset.pattern.permute.xlu0 0
        %3287 = vperm.xlu0 %3286, %v2853
        %v3288 = vpop.permute.xlu0 %3287
        %3291 = vset.pattern.permute.xlu0 0
        %3292 = vperm.xlu0 %3291, %v2855
        %v3293 = vpop.permute.xlu0 %3292
        %3296 = vset.pattern.permute.xlu0 0
        %3297 = vperm.xlu0 %3296, %v2857
        %v3298 = vpop.permute.xlu0 %3297
        %3301 = vset.pattern.permute.xlu0 0
        %3302 = vperm.xlu0 %3301, %v2859
        %v3303 = vpop.permute.xlu0 %3302
        %v3305 = vmul.f32 %v3288, %v3281
        %v3306 = vmul.f32 %v3293, %v3282
        %v3307 = vmul.f32 %v3298, %v3283
        %v3308 = vmul.f32 %v3303, %v3284
        %v3309 = vadd.f32 %v3305, %v3059
        %v3310 = vadd.f32 %v3306, %v3132
        %v3311 = vadd.f32 %v3307, %v3205
        %v3312 = vadd.f32 %v3308, %v3278
        %3313 = vst.msk [vmem:[#allocation4] sm:$0xff] %vm2534, %v3309
        %3314 = vst.msk [vmem:[#allocation4 + $0x8] sm:$0xff] %vm2534, %v3310
        %3315 = vst.msk [vmem:[#allocation4 + $0x10] sm:$0xff] %vm2534, %v3311
        %3316 = vst.msk [vmem:[#allocation4 + $0x18] sm:$0xff] %vm2534, %v3312
        %3317 = vst.msk [vmem:[#allocation2] sm:$0xff] %vm2916, %v2844
        %3318 = vst.msk [vmem:[#allocation2 + $0x8] sm:$0xff] %vm2916, %v2845
        %3319 = vst.msk [vmem:[#allocation2 + $0x10] sm:$0xff] %vm2916, %v2846
        %3320 = vst.msk [vmem:[#allocation2 + $0x18] sm:$0xff] %vm2916, %v2847
        // Predicated region
        $region49: #{tpu_custom_call.1} parent=31 // pred_check
          %p3321 = pneg %p320
        $region50: #{tpu_custom_call.1} parent=31 // pred_check_branch
          %3323 = sbr.rel (%p3321) target = $region52
        $region51: #{tpu_custom_call.1} parent=31 // pred_region
          %v3324 = vld [vmem:[#allocation3] sm:$0xff]
          %v3325 = vld [vmem:[#allocation3 + $0x8] sm:$0xff]
          %v3326 = vld [vmem:[#allocation3 + $0x10] sm:$0xff]
          %v3327 = vld [vmem:[#allocation3 + $0x18] sm:$0xff]
          %v3328 = vrcp.pop %v3324
          %v3329 = vrcp.pop %v3325
          %v3330 = vrcp.pop %v3326
          %v3331 = vrcp.pop %v3327
          %v3332 = vld [vmem:[#allocation4] sm:$0xff]
          %v3333 = vld [vmem:[#allocation4 + $0x8] sm:$0xff]
          %v3334 = vld [vmem:[#allocation4 + $0x10] sm:$0xff]
          %v3335 = vld [vmem:[#allocation4 + $0x18] sm:$0xff]
          %3337 = vset.pattern.permute.xlu0 0
          %3338 = vperm.xlu0 %3337, %v3328
          %v3339 = vpop.permute.xlu0 %3338
          %3342 = vset.pattern.permute.xlu0 0
          %3343 = vperm.xlu0 %3342, %v3329
          %v3344 = vpop.permute.xlu0 %3343
          %3347 = vset.pattern.permute.xlu0 0
          %3348 = vperm.xlu0 %3347, %v3330
          %v3349 = vpop.permute.xlu0 %3348
          %3352 = vset.pattern.permute.xlu0 0
          %3353 = vperm.xlu0 %3352, %v3331
          %v3354 = vpop.permute.xlu0 %3353
          %v3356 = vmul.f32 %v3332, %v3339
          %v3357 = vmul.f32 %v3333, %v3344
          %v3358 = vmul.f32 %v3334, %v3349
          %v3359 = vmul.f32 %v3335, %v3354
          %v3360 = vcombine.low %v3356, %v3358
          %v3361 = vcombine.high %v3356, %v3358
          %v3363 = vunpack.c.l.s4 1983009808
          %v3364 = vunpack.c.0.s8 %v3363
          %v3365 = vlaneseq
          %v3366 = vshrl.u32 %v3365, 7
          %v3367 = vsub.s32 %v3364, %v3366
          %v3368 = vrot.slane %v3360, %v3367
          %v3370 = vunpack.c.l.s4 1983009808
          %v3371 = vunpack.c.0.s8 %v3370
          %v3372 = vlaneseq
          %v3373 = vshrl.u32 %v3372, 7
          %v3374 = vsub.s32 %v3371, %v3373
          %v3375 = vrot.slane %v3361, %v3374
          %v3376 = vcombine.low %v3357, %v3359
          %v3377 = vcombine.high %v3357, %v3359
          %v3379 = vunpack.c.l.s4 1983009808
          %v3380 = vunpack.c.0.s8 %v3379
          %v3381 = vlaneseq
          %v3382 = vshrl.u32 %v3381, 7
          %v3383 = vsub.s32 %v3380, %v3382
          %v3384 = vrot.slane %v3376, %v3383
          %v3386 = vunpack.c.l.s4 1983009808
          %v3387 = vunpack.c.0.s8 %v3386
          %v3388 = vlaneseq
          %v3389 = vshrl.u32 %v3388, 7
          %v3390 = vsub.s32 %v3387, %v3389
          %v3391 = vrot.slane %v3377, %v3390
          %v3392 = vcombine.low %v3368, %v3384
          %v3393 = vcombine.high %v3368, %v3384
          %v3395 = vunpack.c.l.s4 1934713408
          %v3396 = vunpack.c.0.s8 %v3395
          %v3397 = vlaneseq
          %v3398 = vshrl.u32 %v3397, 7
          %v3399 = vsub.s32 %v3396, %v3398
          %v3400 = vrot.slane %v3392, %v3399
          %v3402 = vunpack.c.l.s4 1934713408
          %v3403 = vunpack.c.0.s8 %v3402
          %v3404 = vlaneseq
          %v3405 = vshrl.u32 %v3404, 7
          %v3406 = vsub.s32 %v3403, %v3405
          %v3407 = vrot.slane %v3393, %v3406
          %v3408 = vcombine.low %v3375, %v3391
          %v3409 = vcombine.high %v3375, %v3391
          %v3411 = vunpack.c.l.s4 1934713408
          %v3412 = vunpack.c.0.s8 %v3411
          %v3413 = vlaneseq
          %v3414 = vshrl.u32 %v3413, 7
          %v3415 = vsub.s32 %v3412, %v3414
          %v3416 = vrot.slane %v3408, %v3415
          %v3418 = vunpack.c.l.s4 1934713408
          %v3419 = vunpack.c.0.s8 %v3418
          %v3420 = vlaneseq
          %v3421 = vshrl.u32 %v3420, 7
          %v3422 = vsub.s32 %v3419, %v3421
          %v3423 = vrot.slane %v3409, %v3422
          %v3424 = vcombine.high %v3400, 0.0
          %v3425 = vcombine.high %v3407, 0.0
          %v3426 = vcombine.high %v3416, 0.0
          %v3427 = vcombine.high %v3423, 0.0
          %v3428 = vcombine.low %v3400, %v3407
          %v3430 = vunpack.c.l.s4 1983009808
          %v3431 = vunpack.c.0.s8 %v3430
          %v3432 = vlaneseq
          %v3433 = vshrl.u32 %v3432, 7
          %v3434 = vsub.s32 %v3431, %v3433
          %v3435 = vrot.slane %v3428, %v3434
          %v3436 = vcombine.low %v3424, %v3425
          %v3438 = vunpack.c.l.s4 1983009808
          %v3439 = vunpack.c.0.s8 %v3438
          %v3440 = vlaneseq
          %v3441 = vshrl.u32 %v3440, 7
          %v3442 = vsub.s32 %v3439, %v3441
          %v3443 = vrot.slane %v3436, %v3442
          %v3444 = vcombine.low %v3416, %v3423
          %v3446 = vunpack.c.l.s4 1983009808
          %v3447 = vunpack.c.0.s8 %v3446
          %v3448 = vlaneseq
          %v3449 = vshrl.u32 %v3448, 7
          %v3450 = vsub.s32 %v3447, %v3449
          %v3451 = vrot.slane %v3444, %v3450
          %v3452 = vcombine.low %v3426, %v3427
          %v3454 = vunpack.c.l.s4 1983009808
          %v3455 = vunpack.c.0.s8 %v3454
          %v3456 = vlaneseq
          %v3457 = vshrl.u32 %v3456, 7
          %v3458 = vsub.s32 %v3455, %v3457
          %v3459 = vrot.slane %v3452, %v3458
          %v3460 = vcombine.low %v3435, %v3443
          %v3461 = vcombine.high %v3435, %v3443
          %v3463 = vunpack.c.l.s4 1934713408
          %v3464 = vunpack.c.0.s8 %v3463
          %v3465 = vlaneseq
          %v3466 = vshrl.u32 %v3465, 7
          %v3467 = vsub.s32 %v3464, %v3466
          %v3468 = vrot.slane %v3460, %v3467
          %v3470 = vunpack.c.l.s4 1934713408
          %v3471 = vunpack.c.0.s8 %v3470
          %v3472 = vlaneseq
          %v3473 = vshrl.u32 %v3472, 7
          %v3474 = vsub.s32 %v3471, %v3473
          %v3475 = vrot.slane %v3461, %v3474
          %v3476 = vcombine.low %v3451, %v3459
          %v3477 = vcombine.high %v3451, %v3459
          %v3479 = vunpack.c.l.s4 1934713408
          %v3480 = vunpack.c.0.s8 %v3479
          %v3481 = vlaneseq
          %v3482 = vshrl.u32 %v3481, 7
          %v3483 = vsub.s32 %v3480, %v3482
          %v3484 = vrot.slane %v3476, %v3483
          %v3486 = vunpack.c.l.s4 1934713408
          %v3487 = vunpack.c.0.s8 %v3486
          %v3488 = vlaneseq
          %v3489 = vshrl.u32 %v3488, 7
          %v3490 = vsub.s32 %v3487, %v3489
          %v3491 = vrot.slane %v3477, %v3490
          %v3492 = vcombine.low %v3468, %v3484
          %v3493 = vcombine.high %v3468, %v3484
          %v3494 = vcombine.low %v3475, %v3491
          %v3495 = vcombine.high %v3475, %v3491
          %3497 = vrot.lane.b32.xlu0 %v3493, 32
          %v3498 = vpop.permute.xlu0 %3497
          %3501 = vrot.lane.b32.xlu0 %v3494, 64
          %v3502 = vpop.permute.xlu0 %3501
          %3505 = vrot.lane.b32.xlu0 %v3495, 96
          %v3506 = vpop.permute.xlu0 %3505
          %v3508 = vsel %vm2534, %v3492, %v3498
          %vm3509 = vcmask 523264
          %v3510 = vsel %vm3509, %v3508, %v3502
          %vm3511 = vcmask 785408
          %v3512 = vsel %vm3511, %v3510, %v3506
          %3513 = vst [vmem:[%s316] sm:$0xff] %v3512
        $region52: #{tpu_custom_call.1} parent=31 // pred_fallthru
          _
        %s3514 = sand.u32 %s151, 1
        %s3515 = scalar_lea.sflag [#allocation7], %s3514
        %s3516 = sand.u32 %s151, 1
        %s3517 = smul.addr %s3516, 8
        %s3518 = scalar_lea.vmem [#allocation11], %s3517
        // Predicated region
        $region53: #{tpu_custom_call.1} parent=31 // pred_check
          %p3519 = pneg %p161
        $region54: #{tpu_custom_call.1} parent=31 // pred_check_branch
          %3521 = sbr.rel (%p3519) target = $region56
        $region55: #{tpu_custom_call.1} parent=31 // pred_region
          %s3523 = ssub.s32 128, 128
          %3524 = vsyncadd %s3515, %s3523
          %s3525 = sadd.s32 %s30, %s31
          %s3526 = sadd.s32 %s3525, %s29
          %s3527 = smul.addr %s3526, 128
          %s3528 = scalar_lea.hbm %s3, %s3527
          %s3530 = sshll.u32 %s3518, 4
          %s3531 = int_to_ptr.vmem [resolvable:$true] %s3530
          %3533 = dma.vmem_to_hbm [thread:$0]  %s3531, 128, %s3528, %s3515
        $region56: #{tpu_custom_call.1} parent=31 // pred_fallthru
          _
      $region32: #{tpu_custom_call.1} parent=5 // pred_fallthru
        _
      %p3534 = scmp.le.s32.totalorder 2, %s18
      // Predicated region
      $region57: #{tpu_custom_call.1} parent=5 // pred_check
        %p3535 = pneg %p3534
      $region58: #{tpu_custom_call.1} parent=5 // pred_check_branch
        %3537 = sbr.rel (%p3535) target = $region60
      $region59: #{tpu_custom_call.1} parent=5 // pred_region
        %s3538 = ssub.s32 %s18, 2
        // Predicated region
        $region61: #{tpu_custom_call.1} parent=59 // pred_check
          %p3539 = pneg %p167
        $region62: #{tpu_custom_call.1} parent=59 // pred_check_branch
          %3541 = sbr.rel (%p3539) target = $region64
        $region63: #{tpu_custom_call.1} parent=59 // pred_region
          %s3542 = sand.u32 %s152, 1
          %s3543 = scalar_lea.sflag [#allocation7], %s3542
          %s3544 = sand.u32 %s152, 1
          %s3545 = smul.addr %s3544, 8
          %s3546 = scalar_lea.vmem [#allocation11], %s3545
          %3547 = dma.done %s3543, 128
        $region64: #{tpu_custom_call.1} parent=59 // pred_fallthru
          _
      $region60: #{tpu_custom_call.1} parent=5 // pred_fallthru
        _
    $region6: #{tpu_custom_call.1} parent=1 // loop_footer
      %s22 = sadd.s32 1, %s18
    $region7: #{tpu_custom_call.1} parent=1 // loop_footer_branch
      %17 = sbr.rel target = $region3
    $region8: #{tpu_custom_call.1} parent=1 // loop_exit
      _
    %3548 = vsyncpa [#allocation6], 1
    %s3549 = scalar_lea.sflag [#allocation6], 1
    %3550 = vsyncpa %s3549, 1
    %3551 = vsyncpa [#allocation9], 1
    %s3552 = scalar_lea.sflag [#allocation9], 1
    %3553 = vsyncpa %s3552, 1
    %3554 = vsyncpa [#allocation7], 1
    %s3555 = scalar_lea.sflag [#allocation7], 1
    %3556 = vsyncpa %s3555, 1

// kernel: tpu_custom_call.1
$region0: #{tpu_custom_call.1}
  #allocation0 [shape = 'u32[]', space=smem, size = 0x4, offset = 0x4, fixed_abs, tag = 'smem constant byte address 0x4 - core index']
  #allocation1 [shape = 'u32[144,128]{1,0:T(1,128)}', space=vmem, size = 0x12000, scoped, tag = 'internal scratch']
  #allocation2 [shape = 'f32[4,8,1]{2,1,0:T(8,128)}', space=vmem, size = 0x4000, scoped, tag = 'scratch operand']
  #allocation3 [shape = 'f32[4,8,1]{2,1,0:T(8,128)}', space=vmem, size = 0x4000, scoped, tag = 'scratch operand']
  #allocation4 [shape = 'f32[4,8,32]{2,1,0:T(8,128)}', space=vmem, size = 0x4000, scoped, tag = 'scratch operand']
  %s0 = inlined_call_operand.hbm [shape: f32[2,8,4,32], index: 0, kind: input, shape index: {}]
  %s1 = inlined_call_operand.hbm [shape: f32[2,8,4,32], index: 1, kind: input, shape index: {}]
  %s2 = inlined_call_operand.hbm [shape: f32[2,8,4,32], index: 2, kind: input, shape index: {}]
  %s3 = inlined_call_operand.hbm [shape: f32[2,8,128], index: 3, kind: output, shape index: {}]
  %s4 = sld [smem:[#allocation0]]
  $region65: #{tpu_custom_call.1} parent=0
    _
  %s6 = ssub.s32 1, %s4
  %s7 = scalar_select 0, %s6, %s4
  $region1: #{tpu_custom_call.1} parent=0
    #allocation5 [shape = 'u8[32768]{0}', space=vmem, size = 0x8000, scoped, tag = 'input window, operand 0']
    #allocation6 [shape = 's32[2]{0}', space=sflag, size = 0x8, scoped, tag = 'scoped memory for tpu_custom_call.1']
    #allocation7 [shape = 's32[2]{0}', space=sflag, size = 0x8, scoped, tag = 'scoped memory for tpu_custom_call.1']
    #allocation8 [shape = 'u8[32768]{0}', space=vmem, size = 0x8000, scoped, tag = 'input window, operand 1']
    #allocation9 [shape = 's32[2]{0}', space=sflag, size = 0x8, scoped, tag = 'scoped memory for tpu_custom_call.1']
    #allocation10 [shape = 'u8[32768]{0}', space=vmem, size = 0x8000, scoped, tag = 'input window, operand 2']
    #allocation11 [shape = 'u8[8192]{0}', space=vmem, size = 0x2000, scoped, tag = 'output window, operand 0']
    %8 = vsyncpa [#allocation6], 0
    %s9 = scalar_lea.sflag [#allocation6], 1
    %10 = vsyncpa %s9, 0
    %11 = vsyncpa [#allocation9], 0
    %s12 = scalar_lea.sflag [#allocation9], 1
    %13 = vsyncpa %s12, 0
    %14 = vsyncpa [#allocation7], 0
    %s15 = scalar_lea.sflag [#allocation7], 1
    %16 = vsyncpa %s15, 0
    loop: start=0, step=1, limit=4
    $region2: #{tpu_custom_call.1} parent=1 // loop_pre_header
      _
    $region3: #{tpu_custom_call.1} parent=1 // loop_header
      %s18 = sphi 0, %s22
      %p19 = scmp.ge.s32.totalorder %s18, 4
      %s25 = sphi 0, %s51
      %s26 = sphi 0, %s47
      %s27 = sphi 0, %s43
      %s28 = sphi 0, %s39
      %s29 = sphi 0, %s25
      %s30 = sphi 0, %s26
      %s31 = sphi 0, %s27
      %s32 = sphi 0, %s28
      %s33 = sphi 0, %s29
      %s34 = sphi 0, %s30
      %s35 = sphi 0, %s31
      %s36 = sphi 0, %s32
      %s58 = sphi 0, %s60
      %s61 = sphi 0, %s58
      %s62 = sphi 0, %s61
      %s78 = sphi 0, %s62
      %s88 = sphi 0, %s90
      %s91 = sphi 0, %s88
      %s92 = sphi 0, %s91
      %s108 = sphi 0, %s92
      %s118 = sphi 0, %s120
      %s121 = sphi 0, %s118
      %s122 = sphi 0, %s121
      %s138 = sphi 0, %s122
      %s148 = sphi 0, %s150
      %s151 = sphi 0, %s148
      %s152 = sphi 0, %s151
      %s168 = sphi 0, %s152
    $region4: #{tpu_custom_call.1} parent=1 // loop_header_branch
      %21 = sbr.rel (%p19) target = $region8
    $region5: #{tpu_custom_call.1} parent=1 // loop_body
      %s23 = ssub.s32 %s18, 1
      %s24 = ssub.s32 %s18, 2
      %s37 = sadd.s32 1, %s28
      %p38 = scmp.ge.s32.totalorder %s37, 1
      %s39 = scalar_select %p38, 0, %s37
      %s40 = sadd.s32 1, %s27
      %s41 = scalar_select %p38, %s40, %s27
      %p42 = scmp.ge.s32.totalorder %s41, 1
      %s43 = scalar_select %p42, 0, %s41
      %s44 = sadd.s32 1, %s26
      %s45 = scalar_select %p42, %s44, %s26
      %p46 = scmp.ge.s32.totalorder %s45, 1
      %s47 = scalar_select %p46, 0, %s45
      %s48 = sadd.s32 1, %s25
      %s49 = scalar_select %p46, %s48, %s25
      %p50 = scmp.ge.s32.totalorder %s49, 2
      %s51 = scalar_select %p50, 0, %s49
      %s52 = ssub.s32 %s25, %s51
      %s53 = ssub.s32 %s27, %s43
      %s54 = sor.u32 %s52, %s53
      %s55 = ssub.s32 %s26, %s47
      %s56 = sor.u32 %s54, %s55
      %p57 = scmp.eq.s32.totalorder %s56, 0
      %s59 = sadd.s32 %s58, 1
      %s60 = scalar_select %p57, %s58, %s59
      %p63 = pneg %p57
      %p64 = scmp.eq.s32.totalorder %s18, 1
      %p65 = por %p63, %p64
      %p66 = scmp.ne.s32.totalorder %s58, %s61
      %p67 = scmp.eq.s32.totalorder %s18, 0
      %p68 = por %p66, %p67
      %p69 = scmp.ne.s32.totalorder %s58, %s61
      %p70 = scmp.eq.s32.totalorder %s23, 1
      %p71 = por %p69, %p70
      %p72 = scmp.ne.s32.totalorder %s61, %s62
      %p73 = scmp.eq.s32.totalorder %s23, 0
      %p74 = por %p72, %p73
      %p75 = scmp.ne.s32.totalorder %s61, %s62
      %p76 = scmp.eq.s32.totalorder %s24, 1
      %p77 = por %p75, %p76
      %p79 = scmp.ne.s32.totalorder %s62, %s78
      %p80 = scmp.eq.s32.totalorder %s24, 0
      %p81 = por %p79, %p80
      %s82 = ssub.s32 %s25, %s51
      %s83 = ssub.s32 %s28, %s39
      %s84 = sor.u32 %s82, %s83
      %s85 = ssub.s32 %s26, %s47
      %s86 = sor.u32 %s84, %s85
      %p87 = scmp.eq.s32.totalorder %s86, 0
      %s89 = sadd.s32 %s88, 1
      %s90 = scalar_select %p87, %s88, %s89
      %p93 = pneg %p87
      %p94 = scmp.eq.s32.totalorder %s18, 1
      %p95 = por %p93, %p94
      %p96 = scmp.ne.s32.totalorder %s88, %s91
      %p97 = scmp.eq.s32.totalorder %s18, 0
      %p98 = por %p96, %p97
      %p99 = scmp.ne.s32.totalorder %s88, %s91
      %p100 = scmp.eq.s32.totalorder %s23, 1
      %p101 = por %p99, %p100
      %p102 = scmp.ne.s32.totalorder %s91, %s92
      %p103 = scmp.eq.s32.totalorder %s23, 0
      %p104 = por %p102, %p103
      %p105 = scmp.ne.s32.totalorder %s91, %s92
      %p106 = scmp.eq.s32.totalorder %s24, 1
      %p107 = por %p105, %p106
      %p109 = scmp.ne.s32.totalorder %s92, %s108
      %p110 = scmp.eq.s32.totalorder %s24, 0
      %p111 = por %p109, %p110
      %s112 = ssub.s32 %s25, %s51
      %s113 = ssub.s32 %s28, %s39
      %s114 = sor.u32 %s112, %s113
      %s115 = ssub.s32 %s26, %s47
      %s116 = sor.u32 %s114, %s115
      %p117 = scmp.eq.s32.totalorder %s116, 0
      %s119 = sadd.s32 %s118, 1
      %s120 = scalar_select %p117, %s118, %s119
      %p123 = pneg %p117
      %p124 = scmp.eq.s32.totalorder %s18, 1
      %p125 = por %p123, %p124
      %p126 = scmp.ne.s32.totalorder %s118, %s121
      %p127 = scmp.eq.s32.totalorder %s18, 0
      %p128 = por %p126, %p127
      %p129 = scmp.ne.s32.totalorder %s118, %s121
      %p130 = scmp.eq.s32.totalorder %s23, 1
      %p131 = por %p129, %p130
      %p132 = scmp.ne.s32.totalorder %s121, %s122
      %p133 = scmp.eq.s32.totalorder %s23, 0
      %p134 = por %p132, %p133
      %p135 = scmp.ne.s32.totalorder %s121, %s122
      %p136 = scmp.eq.s32.totalorder %s24, 1
      %p137 = por %p135, %p136
      %p139 = scmp.ne.s32.totalorder %s122, %s138
      %p140 = scmp.eq.s32.totalorder %s24, 0
      %p141 = por %p139, %p140
      %s142 = ssub.s32 %s25, %s51
      %s143 = ssub.s32 %s27, %s43
      %s144 = sor.u32 %s142, %s143
      %s145 = ssub.s32 %s26, %s47
      %s146 = sor.u32 %s144, %s145
      %p147 = scmp.eq.s32.totalorder %s146, 0
      %s149 = sadd.s32 %s148, 1
      %s150 = scalar_select %p147, %s148, %s149
      %p153 = pneg %p147
      %p154 = scmp.eq.s32.totalorder %s18, 1
      %p155 = por %p153, %p154
      %p156 = scmp.ne.s32.totalorder %s148, %s151
      %p157 = scmp.eq.s32.totalorder %s18, 0
      %p158 = por %p156, %p157
      %p159 = scmp.ne.s32.totalorder %s148, %s151
      %p160 = scmp.eq.s32.totalorder %s23, 1
      %p161 = por %p159, %p160
      %p162 = scmp.ne.s32.totalorder %s151, %s152
      %p163 = scmp.eq.s32.totalorder %s23, 0
      %p164 = por %p162, %p163
      %p165 = scmp.ne.s32.totalorder %s151, %s152
      %p166 = scmp.eq.s32.totalorder %s24, 1
      %p167 = por %p165, %p166
      %p169 = scmp.ne.s32.totalorder %s152, %s168
      %p170 = scmp.eq.s32.totalorder %s24, 0
      %p171 = por %p169, %p170
      %p172 = scmp.le.s32.totalorder 1, %s18
      %p173 = scmp.lt.s32.totalorder %s18, 3
      %p174 = pnand %p172, %p173
      %p175 = pneg %p174
      // Predicated region
      $region9: #{tpu_custom_call.1} parent=5 // pred_check
        _
      $region10: #{tpu_custom_call.1} parent=5 // pred_check_branch
        %177 = sbr.rel (%p174) target = $region12
      $region11: #{tpu_custom_call.1} parent=5 // pred_region
        %s178 = ssub.s32 %s18, 1
      $region12: #{tpu_custom_call.1} parent=5 // pred_fallthru
        _
      %p179 = scmp.lt.s32.totalorder %s18, 2
      // Predicated region
      $region13: #{tpu_custom_call.1} parent=5 // pred_check
        %p180 = pneg %p179
      $region14: #{tpu_custom_call.1} parent=5 // pred_check_branch
        %182 = sbr.rel (%p180) target = $region16
      $region15: #{tpu_custom_call.1} parent=5 // pred_region
        // Predicated region
        $region17: #{tpu_custom_call.1} parent=15 // pred_check
          %p183 = pneg %p68
        $region18: #{tpu_custom_call.1} parent=15 // pred_check_branch
          %185 = sbr.rel (%p183) target = $region20
        $region19: #{tpu_custom_call.1} parent=15 // pred_region
          %s186 = sand.u32 %s58, 1
          %s187 = scalar_lea.sflag [#allocation6], %s186
          %s188 = sand.u32 %s58, 1
          %s189 = smul.addr %s188, 32
          %s190 = scalar_lea.vmem [#allocation5], %s189
          %s191 = smul.u32 8, %s27
          %s193 = ssub.s32 512, 512
          %194 = vsyncadd %s187, %s193
          %s195 = sadd.s32 %s26, %s191
          %s196 = smul.addr %s25, 8
          %s197 = sadd.s32 %s195, %s196
          %s198 = smul.addr %s197, 64
          %s199 = scalar_lea.hbm %s0, %s198
          %s200 = sshll.u32 %s190, 4
          %s201 = int_to_ptr.vmem [resolvable:$true] %s200
          %206 = dma.hbm_to_vmem [thread:$0]  %s199, 512, %s201, %s187, 64, 64, 4
        $region20: #{tpu_custom_call.1} parent=15 // pred_fallthru
          _
        // Predicated region
        $region21: #{tpu_custom_call.1} parent=15 // pred_check
          %p207 = pneg %p98
        $region22: #{tpu_custom_call.1} parent=15 // pred_check_branch
          %209 = sbr.rel (%p207) target = $region24
        $region23: #{tpu_custom_call.1} parent=15 // pred_region
          %s210 = sand.u32 %s18, 1
          %s211 = scalar_lea.sflag [#allocation9], %s210
          %s212 = sand.u32 %s88, 1
          %s213 = smul.addr %s212, 32
          %s214 = scalar_lea.vmem [#allocation8], %s213
          %s215 = smul.u32 8, %s28
          %s217 = ssub.s32 512, 512
          %218 = vsyncadd %s211, %s217
          %s219 = sadd.s32 %s26, %s215
          %s220 = smul.addr %s25, 8
          %s221 = sadd.s32 %s219, %s220
          %s222 = smul.addr %s221, 64
          %s223 = scalar_lea.hbm %s1, %s222
          %s224 = sshll.u32 %s214, 4
          %s225 = int_to_ptr.vmem [resolvable:$true] %s224
          %230 = dma.hbm_to_vmem [thread:$0]  %s223, 512, %s225, %s211, 64, 64, 4
        $region24: #{tpu_custom_call.1} parent=15 // pred_fallthru
          _
        // Predicated region
        $region25: #{tpu_custom_call.1} parent=15 // pred_check
          %p231 = pneg %p128
        $region26: #{tpu_custom_call.1} parent=15 // pred_check_branch
          %233 = sbr.rel (%p231) target = $region28
        $region27: #{tpu_custom_call.1} parent=15 // pred_region
          %s234 = sand.u32 %s18, 1
          %s235 = scalar_lea.sflag [#allocation9], %s234
          %s236 = sand.u32 %s118, 1
          %s237 = smul.addr %s236, 32
          %s238 = scalar_lea.vmem [#allocation10], %s237
          %s239 = smul.u32 8, %s28
          %s241 = ssub.s32 512, 512
          %242 = vsyncadd %s235, %s241
          %s243 = sadd.s32 %s26, %s239
          %s244 = smul.addr %s25, 8
          %s245 = sadd.s32 %s243, %s244
          %s246 = smul.addr %s245, 64
          %s247 = scalar_lea.hbm %s2, %s246
          %s248 = sshll.u32 %s238, 4
          %s249 = int_to_ptr.vmem [resolvable:$true] %s248
          %254 = dma.hbm_to_vmem [thread:$0]  %s247, 512, %s249, %s235, 64, 64, 4
        $region28: #{tpu_custom_call.1} parent=15 // pred_fallthru
          _
      $region16: #{tpu_custom_call.1} parent=5 // pred_fallthru
        _
      %p255 = scmp.le.s32.totalorder 1, %s18
      %p256 = scmp.lt.s32.totalorder %s18, 3
      %p257 = pnand %p255, %p256
      %p258 = pneg %p257
      // Predicated region
      $region29: #{tpu_custom_call.1} parent=5 // pred_check
        _
      $region30: #{tpu_custom_call.1} parent=5 // pred_check_branch
        %260 = sbr.rel (%p257) target = $region32
      $region31: #{tpu_custom_call.1} parent=5 // pred_region
        %s261 = ssub.s32 %s18, 1
        %s262 = sand.u32 %s61, 1
        %s263 = scalar_lea.sflag [#allocation6], %s262
        %s264 = sand.u32 %s61, 1
        %s265 = smul.addr %s264, 32
        %s266 = scalar_lea.vmem [#allocation5], %s265
        // Predicated region
        $region33: #{tpu_custom_call.1} parent=31 // pred_check
          %p267 = pneg %p74
        $region34: #{tpu_custom_call.1} parent=31 // pred_check_branch
          %269 = sbr.rel (%p267) target = $region36
        $region35: #{tpu_custom_call.1} parent=31 // pred_region
          %270 = dma.done %s263, 512
        $region36: #{tpu_custom_call.1} parent=31 // pred_fallthru
          _
        %s271 = sand.u32 %s23, 1
        %s272 = scalar_lea.sflag [#allocation9], %s271
        %s273 = sand.u32 %s91, 1
        %s274 = smul.addr %s273, 32
        %s275 = scalar_lea.vmem [#allocation8], %s274
        // Predicated region
        $region37: #{tpu_custom_call.1} parent=31 // pred_check
          %p276 = pneg %p104
        $region38: #{tpu_custom_call.1} parent=31 // pred_check_branch
          %278 = sbr.rel (%p276) target = $region40
        $region39: #{tpu_custom_call.1} parent=31 // pred_region
          %279 = dma.done %s272, 512
        $region40: #{tpu_custom_call.1} parent=31 // pred_fallthru
          _
        %s280 = sand.u32 %s23, 1
        %s281 = scalar_lea.sflag [#allocation9], %s280
        %s282 = sand.u32 %s121, 1
        %s283 = smul.addr %s282, 32
        %s284 = scalar_lea.vmem [#allocation10], %s283
        // Predicated region
        $region41: #{tpu_custom_call.1} parent=31 // pred_check
          %p285 = pneg %p134
        $region42: #{tpu_custom_call.1} parent=31 // pred_check_branch
          %287 = sbr.rel (%p285) target = $region44
        $region43: #{tpu_custom_call.1} parent=31 // pred_region
          %288 = dma.done %s281, 512
        $region44: #{tpu_custom_call.1} parent=31 // pred_fallthru
          _
        %s289 = sand.u32 %s61, 1
        %s290 = scalar_lea.sflag [#allocation6], %s289
        %s291 = sand.u32 %s61, 1
        %s292 = smul.addr %s291, 32
        %s293 = scalar_lea.vmem [#allocation5], %s292
        %p294 = pneg %p74
        %p295 = pneg %p71
        %s296 = sand.u32 %s23, 1
        %s297 = scalar_lea.sflag [#allocation9], %s296
        %s298 = sand.u32 %s91, 1
        %s299 = smul.addr %s298, 32
        %s300 = scalar_lea.vmem [#allocation8], %s299
        %p301 = pneg %p104
        %p302 = pneg %p101
        %s303 = sand.u32 %s23, 1
        %s304 = scalar_lea.sflag [#allocation9], %s303
        %s305 = sand.u32 %s121, 1
        %s306 = smul.addr %s305, 32
        %s307 = scalar_lea.vmem [#allocation10], %s306
        %p308 = pneg %p134
        %p309 = pneg %p131
        %p310 = pneg %p164
        %p311 = pneg %p161
        %s312 = sand.u32 %s151, 1
        %s313 = scalar_lea.sflag [#allocation7], %s312
        %s314 = sand.u32 %s151, 1
        %s315 = smul.addr %s314, 8
        %s316 = scalar_lea.vmem [#allocation11], %s315
        %s317 = smul.u32 8, %s31
        %s318 = smul.u32 8, %s32
        %s319 = smul.u32 8, %s32
        %p320 = scmp.eq.s32.totalorder %s32, 0
        // Predicated region
        $region45: #{tpu_custom_call.1} parent=31 // pred_check
          %p321 = pneg %p320
        $region46: #{tpu_custom_call.1} parent=31 // pred_check_branch
          %323 = sbr.rel (%p321) target = $region48
        $region47: #{tpu_custom_call.1} parent=31 // pred_region
          %vm324 = vcmask 7168
          %325 = vst.msk [vmem:[#allocation2] sm:$0xff] %vm324, -inf
          %326 = vst.msk [vmem:[#allocation2 + $0x8] sm:$0xff] %vm324, -inf
          %327 = vst.msk [vmem:[#allocation2 + $0x10] sm:$0xff] %vm324, -inf
          %328 = vst.msk [vmem:[#allocation2 + $0x18] sm:$0xff] %vm324, -inf
          %329 = vst.msk [vmem:[#allocation3] sm:$0xff] %vm324, 0.0
          %330 = vst.msk [vmem:[#allocation3 + $0x8] sm:$0xff] %vm324, 0.0
          %331 = vst.msk [vmem:[#allocation3 + $0x10] sm:$0xff] %vm324, 0.0
          %332 = vst.msk [vmem:[#allocation3 + $0x18] sm:$0xff] %vm324, 0.0
          %vm333 = vcmask 261120
          %334 = vst.msk [vmem:[#allocation4] sm:$0xff] %vm333, 0.0
          %335 = vst.msk [vmem:[#allocation4 + $0x8] sm:$0xff] %vm333, 0.0
          %336 = vst.msk [vmem:[#allocation4 + $0x10] sm:$0xff] %vm333, 0.0
          %337 = vst.msk [vmem:[#allocation4 + $0x18] sm:$0xff] %vm333, 0.0
        $region48: #{tpu_custom_call.1} parent=31 // pred_fallthru
          _
        %v338 = vld [vmem:[%s266] sm:$0xf]
        %v339 = vld [vmem:[%s266 + $0x4] sm:$0xf]
        %v340 = vld [vmem:[%s266 + $0x8] sm:$0xf]
        %v341 = vld [vmem:[%s266 + $0xc] sm:$0xf]
        %v342 = vld [vmem:[%s266 + $0x10] sm:$0xf]
        %v343 = vld [vmem:[%s266 + $0x14] sm:$0xf]
        %v344 = vld [vmem:[%s266 + $0x18] sm:$0xf]
        %v345 = vld [vmem:[%s266 + $0x1c] sm:$0xf]
        %v346 = vmul.f32 %v338, 0.17677669
        %v347 = vmul.f32 %v339, 0.17677669
        %v348 = vmul.f32 %v340, 0.17677669
        %v349 = vmul.f32 %v341, 0.17677669
        %v350 = vmul.f32 %v342, 0.17677669
        %v351 = vmul.f32 %v343, 0.17677669
        %v352 = vmul.f32 %v344, 0.17677669
        %v353 = vmul.f32 %v345, 0.17677669
        %v354 = vld [vmem:[%s275] sm:$0xf]
        %v355 = vld [vmem:[%s275 + $0x4] sm:$0xf]
        %v356 = vld [vmem:[%s275 + $0x8] sm:$0xf]
        %v357 = vld [vmem:[%s275 + $0xc] sm:$0xf]
        %v358 = vld [vmem:[%s275 + $0x10] sm:$0xf]
        %v359 = vld [vmem:[%s275 + $0x14] sm:$0xf]
        %v360 = vld [vmem:[%s275 + $0x18] sm:$0xf]
        %v361 = vld [vmem:[%s275 + $0x1c] sm:$0xf]
        %v362 = vld [vmem:[%s284] sm:$0xf]
        %v363 = vld [vmem:[%s284 + $0x4] sm:$0xf]
        %v364 = vld [vmem:[%s284 + $0x8] sm:$0xf]
        %v365 = vld [vmem:[%s284 + $0xc] sm:$0xf]
        %v366 = vld [vmem:[%s284 + $0x10] sm:$0xf]
        %v367 = vld [vmem:[%s284 + $0x14] sm:$0xf]
        %v368 = vld [vmem:[%s284 + $0x18] sm:$0xf]
        %v369 = vld [vmem:[%s284 + $0x1c] sm:$0xf]
        %v370 = vcombine.low %v346, %v348
        %v372 = vunpack.c.l.s4 1983009808
        %v373 = vunpack.c.0.s8 %v372
        %v374 = vlaneseq
        %v375 = vshrl.u32 %v374, 7
        %v376 = vsub.s32 %v373, %v375
        %v377 = vrot.slane %v370, %v376
        %v378 = vcombine.low %v347, %v349
        %v380 = vunpack.c.l.s4 1983009808
        %v381 = vunpack.c.0.s8 %v380
        %v382 = vlaneseq
        %v383 = vshrl.u32 %v382, 7
        %v384 = vsub.s32 %v381, %v383
        %v385 = vrot.slane %v378, %v384
        %v386 = vcombine.low %v350, %v352
        %v388 = vunpack.c.l.s4 1983009808
        %v389 = vunpack.c.0.s8 %v388
        %v390 = vlaneseq
        %v391 = vshrl.u32 %v390, 7
        %v392 = vsub.s32 %v389, %v391
        %v393 = vrot.slane %v386, %v392
        %v394 = vcombine.low %v351, %v353
        %v396 = vunpack.c.l.s4 1983009808
        %v397 = vunpack.c.0.s8 %v396
        %v398 = vlaneseq
        %v399 = vshrl.u32 %v398, 7
        %v400 = vsub.s32 %v397, %v399
        %v401 = vrot.slane %v394, %v400
        %v402 = vcombine.low %v377, %v385
        %v403 = vcombine.high %v377, %v385
        %v405 = vunpack.c.l.s4 1934713408
        %v406 = vunpack.c.0.s8 %v405
        %v407 = vlaneseq
        %v408 = vshrl.u32 %v407, 7
        %v409 = vsub.s32 %v406, %v408
        %v410 = vrot.slane %v402, %v409
        %v412 = vunpack.c.l.s4 1934713408
        %v413 = vunpack.c.0.s8 %v412
        %v414 = vlaneseq
        %v415 = vshrl.u32 %v414, 7
        %v416 = vsub.s32 %v413, %v415
        %v417 = vrot.slane %v403, %v416
        %v418 = vcombine.low %v393, %v401
        %v419 = vcombine.high %v393, %v401
        %v421 = vunpack.c.l.s4 1934713408
        %v422 = vunpack.c.0.s8 %v421
        %v423 = vlaneseq
        %v424 = vshrl.u32 %v423, 7
        %v425 = vsub.s32 %v422, %v424
        %v426 = vrot.slane %v418, %v425
        %v428 = vunpack.c.l.s4 1934713408
        %v429 = vunpack.c.0.s8 %v428
        %v430 = vlaneseq
        %v431 = vshrl.u32 %v430, 7
        %v432 = vsub.s32 %v429, %v431
        %v433 = vrot.slane %v419, %v432
        %v434 = vcombine.low %v410, %v426
        %v435 = vcombine.high %v410, %v426
        %v436 = vcombine.low %v417, %v433
        %v437 = vcombine.high %v417, %v433
        %v438 = vcombine.low %v354, %v356
        %v440 = vunpack.c.l.s4 1983009808
        %v441 = vunpack.c.0.s8 %v440
        %v442 = vlaneseq
        %v443 = vshrl.u32 %v442, 7
        %v444 = vsub.s32 %v441, %v443
        %v445 = vrot.slane %v438, %v444
        %v446 = vcombine.low %v355, %v357
        %v448 = vunpack.c.l.s4 1983009808
        %v449 = vunpack.c.0.s8 %v448
        %v450 = vlaneseq
        %v451 = vshrl.u32 %v450, 7
        %v452 = vsub.s32 %v449, %v451
        %v453 = vrot.slane %v446, %v452
        %v454 = vcombine.low %v358, %v360
        %v456 = vunpack.c.l.s4 1983009808
        %v457 = vunpack.c.0.s8 %v456
        %v458 = vlaneseq
        %v459 = vshrl.u32 %v458, 7
        %v460 = vsub.s32 %v457, %v459
        %v461 = vrot.slane %v454, %v460
        %v462 = vcombine.low %v359, %v361
        %v464 = vunpack.c.l.s4 1983009808
        %v465 = vunpack.c.0.s8 %v464
        %v466 = vlaneseq
        %v467 = vshrl.u32 %v466, 7
        %v468 = vsub.s32 %v465, %v467
        %v469 = vrot.slane %v462, %v468
        %v470 = vcombine.low %v445, %v453
        %v471 = vcombine.high %v445, %v453
        %v473 = vunpack.c.l.s4 1934713408
        %v474 = vunpack.c.0.s8 %v473
        %v475 = vlaneseq
        %v476 = vshrl.u32 %v475, 7
        %v477 = vsub.s32 %v474, %v476
        %v478 = vrot.slane %v470, %v477
        %v480 = vunpack.c.l.s4 1934713408
        %v481 = vunpack.c.0.s8 %v480
        %v482 = vlaneseq
        %v483 = vshrl.u32 %v482, 7
        %v484 = vsub.s32 %v481, %v483
        %v485 = vrot.slane %v471, %v484
        %v486 = vcombine.low %v461, %v469
        %v487 = vcombine.high %v461, %v469
        %v489 = vunpack.c.l.s4 1934713408
        %v490 = vunpack.c.0.s8 %v489
        %v491 = vlaneseq
        %v492 = vshrl.u32 %v491, 7
        %v493 = vsub.s32 %v490, %v492
        %v494 = vrot.slane %v486, %v493
        %v496 = vunpack.c.l.s4 1934713408
        %v497 = vunpack.c.0.s8 %v496
        %v498 = vlaneseq
        %v499 = vshrl.u32 %v498, 7
        %v500 = vsub.s32 %v497, %v499
        %v501 = vrot.slane %v487, %v500
        %v502 = vcombine.low %v478, %v494
        %v503 = vcombine.high %v478, %v494
        %v504 = vcombine.low %v485, %v501
        %v505 = vcombine.high %v485, %v501
        %vm506 = vcmask 261120
        %v508 = vsel %vm506, %v434, 0
        %v511 = vsel %vm506, %v502, 0
        %513 = vmatprep.subr.mxu0 0.0
        %514 = vmatpush1.xpose.msra.mxu0 %v511
        %515 = vmatprep.subr.mxu0 0.0
        %516 = vmatpush1.xpose.msra.mxu0 0.0
        %517 = vmatprep.subr.mxu0 0.0
        %518 = vmatpush1.xpose.msra.mxu0 0.0
        %519 = vmatprep.subr.mxu0 0.0
        %520 = vmatpush1.xpose.msra.mxu0 0.0
        %521 = vmatprep.subr.mxu0 0.0
        %522 = vmatpush1.xpose.msra.mxu0 0.0
        %523 = vmatprep.subr.mxu0 0.0
        %524 = vmatpush1.xpose.msra.mxu0 0.0
        %525 = vmatprep.subr.mxu0 0.0
        %526 = vmatpush1.xpose.msra.mxu0 0.0
        %527 = vmatprep.subr.mxu0 0.0
        %528 = vmatpush1.xpose.msra.mxu0 0.0
        %529 = vmatprep.subr.mxu0 0.0
        %530 = vmatpush1.xpose.msra.mxu0 0.0
        %531 = vmatprep.subr.mxu0 0.0
        %532 = vmatpush1.xpose.msra.mxu0 0.0
        %533 = vmatprep.subr.mxu0 0.0
        %534 = vmatpush1.xpose.msra.mxu0 0.0
        %535 = vmatprep.subr.mxu0 0.0
        %536 = vmatpush1.xpose.msra.mxu0 0.0
        %537 = vmatprep.subr.mxu0 0.0
        %538 = vmatpush1.xpose.msra.mxu0 0.0
        %539 = vmatprep.subr.mxu0 0.0
        %540 = vmatpush1.xpose.msra.mxu0 0.0
        %541 = vmatprep.subr.mxu0 0.0
        %542 = vmatpush1.xpose.msra.mxu0 0.0
        %543 = vmatprep.subr.mxu0 0.0
        %544 = vmatpush1.xpose.msra.mxu0 0.0
        %545 = vmatprep.subr.mxu0 0.0
        %546 = vmatpush1.xpose.msra.mxu0 0.0
        %547 = vmatprep.subr.mxu0 0.0
        %548 = vmatpush1.xpose.msra.mxu0 0.0
        %549 = vmatprep.subr.mxu0 0.0
        %550 = vmatpush1.xpose.msra.mxu0 0.0
        %551 = vmatprep.subr.mxu0 0.0
        %552 = vmatpush1.xpose.msra.mxu0 0.0
        %553 = vmatprep.subr.mxu0 0.0
        %554 = vmatpush1.xpose.msra.mxu0 0.0
        %555 = vmatprep.subr.mxu0 0.0
        %556 = vmatpush1.xpose.msra.mxu0 0.0
        %557 = vmatprep.subr.mxu0 0.0
        %558 = vmatpush1.xpose.msra.mxu0 0.0
        %559 = vmatprep.subr.mxu0 0.0
        %560 = vmatpush1.xpose.msra.mxu0 0.0
        %561 = vmatprep.subr.mxu0 0.0
        %562 = vmatpush1.xpose.msra.mxu0 0.0
        %563 = vmatprep.subr.mxu0 0.0
        %564 = vmatpush1.xpose.msra.mxu0 0.0
        %565 = vmatprep.subr.mxu0 0.0
        %566 = vmatpush1.xpose.msra.mxu0 0.0
        %567 = vmatprep.subr.mxu0 0.0
        %568 = vmatpush1.xpose.msra.mxu0 0.0
        %569 = vmatprep.subr.mxu0 0.0
        %570 = vmatpush1.xpose.msra.mxu0 0.0
        %571 = vmatprep.subr.mxu0 0.0
        %572 = vmatpush1.xpose.msra.mxu0 0.0
        %573 = vmatprep.subr.mxu0 0.0
        %574 = vmatpush1.xpose.msra.mxu0 0.0
        %575 = vmatprep.subr.mxu0 0.0
        %576 = vmatpush1.xpose.msra.mxu0 0.0
        %577 = vmatprep.mubr.f32.mxu0 0.0
        %578 = vmatmul.mubr.f32.gmra.mrb[0].mxu0 %v508
        %v579 = vpop.f32.mrb[0].mxu0
        %v580 = vadd.f32 0.0, %v579
        %v581 = vpop.f32.mrb[0].mxu0
        %582 = vdwg.mxu0
        %v584 = vsel %vm506, %v435, 0
        %v587 = vsel %vm506, %v503, 0
        %589 = vmatprep.subr.mxu0 0.0
        %590 = vmatpush1.xpose.msra.mxu0 %v587
        %591 = vmatprep.subr.mxu0 0.0
        %592 = vmatpush1.xpose.msra.mxu0 0.0
        %593 = vmatprep.subr.mxu0 0.0
        %594 = vmatpush1.xpose.msra.mxu0 0.0
        %595 = vmatprep.subr.mxu0 0.0
        %596 = vmatpush1.xpose.msra.mxu0 0.0
        %597 = vmatprep.subr.mxu0 0.0
        %598 = vmatpush1.xpose.msra.mxu0 0.0
        %599 = vmatprep.subr.mxu0 0.0
        %600 = vmatpush1.xpose.msra.mxu0 0.0
        %601 = vmatprep.subr.mxu0 0.0
        %602 = vmatpush1.xpose.msra.mxu0 0.0
        %603 = vmatprep.subr.mxu0 0.0
        %604 = vmatpush1.xpose.msra.mxu0 0.0
        %605 = vmatprep.subr.mxu0 0.0
        %606 = vmatpush1.xpose.msra.mxu0 0.0
        %607 = vmatprep.subr.mxu0 0.0
        %608 = vmatpush1.xpose.msra.mxu0 0.0
        %609 = vmatprep.subr.mxu0 0.0
        %610 = vmatpush1.xpose.msra.mxu0 0.0
        %611 = vmatprep.subr.mxu0 0.0
        %612 = vmatpush1.xpose.msra.mxu0 0.0
        %613 = vmatprep.subr.mxu0 0.0
        %614 = vmatpush1.xpose.msra.mxu0 0.0
        %615 = vmatprep.subr.mxu0 0.0
        %616 = vmatpush1.xpose.msra.mxu0 0.0
        %617 = vmatprep.subr.mxu0 0.0
        %618 = vmatpush1.xpose.msra.mxu0 0.0
        %619 = vmatprep.subr.mxu0 0.0
        %620 = vmatpush1.xpose.msra.mxu0 0.0
        %621 = vmatprep.subr.mxu0 0.0
        %622 = vmatpush1.xpose.msra.mxu0 0.0
        %623 = vmatprep.subr.mxu0 0.0
        %624 = vmatpush1.xpose.msra.mxu0 0.0
        %625 = vmatprep.subr.mxu0 0.0
        %626 = vmatpush1.xpose.msra.mxu0 0.0
        %627 = vmatprep.subr.mxu0 0.0
        %628 = vmatpush1.xpose.msra.mxu0 0.0
        %629 = vmatprep.subr.mxu0 0.0
        %630 = vmatpush1.xpose.msra.mxu0 0.0
        %631 = vmatprep.subr.mxu0 0.0
        %632 = vmatpush1.xpose.msra.mxu0 0.0
        %633 = vmatprep.subr.mxu0 0.0
        %634 = vmatpush1.xpose.msra.mxu0 0.0
        %635 = vmatprep.subr.mxu0 0.0
        %636 = vmatpush1.xpose.msra.mxu0 0.0
        %637 = vmatprep.subr.mxu0 0.0
        %638 = vmatpush1.xpose.msra.mxu0 0.0
        %639 = vmatprep.subr.mxu0 0.0
        %640 = vmatpush1.xpose.msra.mxu0 0.0
        %641 = vmatprep.subr.mxu0 0.0
        %642 = vmatpush1.xpose.msra.mxu0 0.0
        %643 = vmatprep.subr.mxu0 0.0
        %644 = vmatpush1.xpose.msra.mxu0 0.0
        %645 = vmatprep.subr.mxu0 0.0
        %646 = vmatpush1.xpose.msra.mxu0 0.0
        %647 = vmatprep.subr.mxu0 0.0
        %648 = vmatpush1.xpose.msra.mxu0 0.0
        %649 = vmatprep.subr.mxu0 0.0
        %650 = vmatpush1.xpose.msra.mxu0 0.0
        %651 = vmatprep.subr.mxu0 0.0
        %652 = vmatpush1.xpose.msra.mxu0 0.0
        %653 = vmatprep.mubr.f32.mxu0 0.0
        %654 = vmatmul.mubr.f32.gmra.mrb[0].mxu0 %v584
        %v655 = vpop.f32.mrb[0].mxu0
        %v656 = vadd.f32 0.0, %v655
        %v657 = vpop.f32.mrb[0].mxu0
        %658 = vdwg.mxu0
        %v660 = vsel %vm506, %v436, 0
        %v663 = vsel %vm506, %v504, 0
        %665 = vmatprep.subr.mxu0 0.0
        %666 = vmatpush1.xpose.msra.mxu0 %v663
        %667 = vmatprep.subr.mxu0 0.0
        %668 = vmatpush1.xpose.msra.mxu0 0.0
        %669 = vmatprep.subr.mxu0 0.0
        %670 = vmatpush1.xpose.msra.mxu0 0.0
        %671 = vmatprep.subr.mxu0 0.0
        %672 = vmatpush1.xpose.msra.mxu0 0.0
        %673 = vmatprep.subr.mxu0 0.0
        %674 = vmatpush1.xpose.msra.mxu0 0.0
        %675 = vmatprep.subr.mxu0 0.0
        %676 = vmatpush1.xpose.msra.mxu0 0.0
        %677 = vmatprep.subr.mxu0 0.0
        %678 = vmatpush1.xpose.msra.mxu0 0.0
        %679 = vmatprep.subr.mxu0 0.0
        %680 = vmatpush1.xpose.msra.mxu0 0.0
        %681 = vmatprep.subr.mxu0 0.0
        %682 = vmatpush1.xpose.msra.mxu0 0.0
        %683 = vmatprep.subr.mxu0 0.0
        %684 = vmatpush1.xpose.msra.mxu0 0.0
        %685 = vmatprep.subr.mxu0 0.0
        %686 = vmatpush1.xpose.msra.mxu0 0.0
        %687 = vmatprep.subr.mxu0 0.0
        %688 = vmatpush1.xpose.msra.mxu0 0.0
        %689 = vmatprep.subr.mxu0 0.0
        %690 = vmatpush1.xpose.msra.mxu0 0.0
        %691 = vmatprep.subr.mxu0 0.0
        %692 = vmatpush1.xpose.msra.mxu0 0.0
        %693 = vmatprep.subr.mxu0 0.0
        %694 = vmatpush1.xpose.msra.mxu0 0.0
        %695 = vmatprep.subr.mxu0 0.0
        %696 = vmatpush1.xpose.msra.mxu0 0.0
        %697 = vmatprep.subr.mxu0 0.0
        %698 = vmatpush1.xpose.msra.mxu0 0.0
        %699 = vmatprep.subr.mxu0 0.0
        %700 = vmatpush1.xpose.msra.mxu0 0.0
        %701 = vmatprep.subr.mxu0 0.0
        %702 = vmatpush1.xpose.msra.mxu0 0.0
        %703 = vmatprep.subr.mxu0 0.0
        %704 = vmatpush1.xpose.msra.mxu0 0.0
        %705 = vmatprep.subr.mxu0 0.0
        %706 = vmatpush1.xpose.msra.mxu0 0.0
        %707 = vmatprep.subr.mxu0 0.0
        %708 = vmatpush1.xpose.msra.mxu0 0.0
        %709 = vmatprep.subr.mxu0 0.0
        %710 = vmatpush1.xpose.msra.mxu0 0.0
        %711 = vmatprep.subr.mxu0 0.0
        %712 = vmatpush1.xpose.msra.mxu0 0.0
        %713 = vmatprep.subr.mxu0 0.0
        %714 = vmatpush1.xpose.msra.mxu0 0.0
        %715 = vmatprep.subr.mxu0 0.0
        %716 = vmatpush1.xpose.msra.mxu0 0.0
        %717 = vmatprep.subr.mxu0 0.0
        %718 = vmatpush1.xpose.msra.mxu0 0.0
        %719 = vmatprep.subr.mxu0 0.0
        %720 = vmatpush1.xpose.msra.mxu0 0.0
        %721 = vmatprep.subr.mxu0 0.0
        %722 = vmatpush1.xpose.msra.mxu0 0.0
        %723 = vmatprep.subr.mxu0 0.0
        %724 = vmatpush1.xpose.msra.mxu0 0.0
        %725 = vmatprep.subr.mxu0 0.0
        %726 = vmatpush1.xpose.msra.mxu0 0.0
        %727 = vmatprep.subr.mxu0 0.0
        %728 = vmatpush1.xpose.msra.mxu0 0.0
        %729 = vmatprep.mubr.f32.mxu0 0.0
        %730 = vmatmul.mubr.f32.gmra.mrb[0].mxu0 %v660
        %v731 = vpop.f32.mrb[0].mxu0
        %v732 = vadd.f32 0.0, %v731
        %v733 = vpop.f32.mrb[0].mxu0
        %734 = vdwg.mxu0
        %v736 = vsel %vm506, %v437, 0
        %v739 = vsel %vm506, %v505, 0
        %741 = vmatprep.subr.mxu0 0.0
        %742 = vmatpush1.xpose.msra.mxu0 %v739
        %743 = vmatprep.subr.mxu0 0.0
        %744 = vmatpush1.xpose.msra.mxu0 0.0
        %745 = vmatprep.subr.mxu0 0.0
        %746 = vmatpush1.xpose.msra.mxu0 0.0
        %747 = vmatprep.subr.mxu0 0.0
        %748 = vmatpush1.xpose.msra.mxu0 0.0
        %749 = vmatprep.subr.mxu0 0.0
        %750 = vmatpush1.xpose.msra.mxu0 0.0
        %751 = vmatprep.subr.mxu0 0.0
        %752 = vmatpush1.xpose.msra.mxu0 0.0
        %753 = vmatprep.subr.mxu0 0.0
        %754 = vmatpush1.xpose.msra.mxu0 0.0
        %755 = vmatprep.subr.mxu0 0.0
        %756 = vmatpush1.xpose.msra.mxu0 0.0
        %757 = vmatprep.subr.mxu0 0.0
        %758 = vmatpush1.xpose.msra.mxu0 0.0
        %759 = vmatprep.subr.mxu0 0.0
        %760 = vmatpush1.xpose.msra.mxu0 0.0
        %761 = vmatprep.subr.mxu0 0.0
        %762 = vmatpush1.xpose.msra.mxu0 0.0
        %763 = vmatprep.subr.mxu0 0.0
        %764 = vmatpush1.xpose.msra.mxu0 0.0
        %765 = vmatprep.subr.mxu0 0.0
        %766 = vmatpush1.xpose.msra.mxu0 0.0
        %767 = vmatprep.subr.mxu0 0.0
        %768 = vmatpush1.xpose.msra.mxu0 0.0
        %769 = vmatprep.subr.mxu0 0.0
        %770 = vmatpush1.xpose.msra.mxu0 0.0
        %771 = vmatprep.subr.mxu0 0.0
        %772 = vmatpush1.xpose.msra.mxu0 0.0
        %773 = vmatprep.subr.mxu0 0.0
        %774 = vmatpush1.xpose.msra.mxu0 0.0
        %775 = vmatprep.subr.mxu0 0.0
        %776 = vmatpush1.xpose.msra.mxu0 0.0
        %777 = vmatprep.subr.mxu0 0.0
        %778 = vmatpush1.xpose.msra.mxu0 0.0
        %779 = vmatprep.subr.mxu0 0.0
        %780 = vmatpush1.xpose.msra.mxu0 0.0
        %781 = vmatprep.subr.mxu0 0.0
        %782 = vmatpush1.xpose.msra.mxu0 0.0
        %783 = vmatprep.subr.mxu0 0.0
        %784 = vmatpush1.xpose.msra.mxu0 0.0
        %785 = vmatprep.subr.mxu0 0.0
        %786 = vmatpush1.xpose.msra.mxu0 0.0
        %787 = vmatprep.subr.mxu0 0.0
        %788 = vmatpush1.xpose.msra.mxu0 0.0
        %789 = vmatprep.subr.mxu0 0.0
        %790 = vmatpush1.xpose.msra.mxu0 0.0
        %791 = vmatprep.subr.mxu0 0.0
        %792 = vmatpush1.xpose.msra.mxu0 0.0
        %793 = vmatprep.subr.mxu0 0.0
        %794 = vmatpush1.xpose.msra.mxu0 0.0
        %795 = vmatprep.subr.mxu0 0.0
        %796 = vmatpush1.xpose.msra.mxu0 0.0
        %797 = vmatprep.subr.mxu0 0.0
        %798 = vmatpush1.xpose.msra.mxu0 0.0
        %799 = vmatprep.subr.mxu0 0.0
        %800 = vmatpush1.xpose.msra.mxu0 0.0
        %801 = vmatprep.subr.mxu0 0.0
        %802 = vmatpush1.xpose.msra.mxu0 0.0
        %803 = vmatprep.subr.mxu0 0.0
        %804 = vmatpush1.xpose.msra.mxu0 0.0
        %805 = vmatprep.mubr.f32.mxu0 0.0
        %806 = vmatmul.mubr.f32.gmra.mrb[0].mxu0 %v736
        %v807 = vpop.f32.mrb[0].mxu0
        %v808 = vadd.f32 0.0, %v807
        %v809 = vpop.f32.mrb[0].mxu0
        %810 = vdwg.mxu0
        %v811 = vld [vmem:[#allocation2] sm:$0xff]
        %v812 = vld [vmem:[#allocation2 + $0x8] sm:$0xff]
        %v813 = vld [vmem:[#allocation2 + $0x10] sm:$0xff]
        %v814 = vld [vmem:[#allocation2 + $0x18] sm:$0xff]
        %vm815 = vcmask 64512
        %v816 = vsel %vm815, %v580, -inf
        %817 = vmax.xlane.f32.xlu0 %v816
        %v818 = vpop.xlane.xlu0 %817
        %v819 = vsel %vm815, %v656, -inf
        %820 = vmax.xlane.f32.xlu0 %v819
        %v821 = vpop.xlane.xlu0 %820
        %v822 = vsel %vm815, %v732, -inf
        %823 = vmax.xlane.f32.xlu0 %v822
        %v824 = vpop.xlane.xlu0 %823
        %v825 = vsel %vm815, %v808, -inf
        %826 = vmax.xlane.f32.xlu0 %v825
        %v827 = vpop.xlane.xlu0 %826
        %v828 = vmax.f32 %v811, %v818
        %v829 = vmax.f32 %v812, %v821
        %v830 = vmax.f32 %v813, %v824
        %v831 = vmax.f32 %v814, %v827
        %v832 = vsub.f32 %v811, %v828
        %v833 = vsub.f32 %v812, %v829
        %v834 = vsub.f32 %v813, %v830
        %v835 = vsub.f32 %v814, %v831
        %v836 = vmul.f32 %v832, 1.442695
        %v837 = vpow.pop %v836
        %v838 = vmul.f32 %v833, 1.442695
        %v839 = vpow.pop %v838
        %v840 = vmul.f32 %v834, 1.442695
        %v841 = vpow.pop %v840
        %v842 = vmul.f32 %v835, 1.442695
        %v843 = vpow.pop %v842
        %845 = vset.pattern.permute.xlu0 0
        %846 = vperm.xlu0 %845, %v828
        %v847 = vpop.permute.xlu0 %846
        %850 = vset.pattern.permute.xlu0 0
        %851 = vperm.xlu0 %850, %v829
        %v852 = vpop.permute.xlu0 %851
        %855 = vset.pattern.permute.xlu0 0
        %856 = vperm.xlu0 %855, %v830
        %v857 = vpop.permute.xlu0 %856
        %860 = vset.pattern.permute.xlu0 0
        %861 = vperm.xlu0 %860, %v831
        %v862 = vpop.permute.xlu0 %861
        %v864 = vsub.f32 %v580, %v847
        %v865 = vsub.f32 %v656, %v852
        %v866 = vsub.f32 %v732, %v857
        %v867 = vsub.f32 %v808, %v862
        %v868 = vmul.f32 %v864, 1.442695
        %v869 = vpow.pop %v868
        %v870 = vmul.f32 %v865, 1.442695
        %v871 = vpow.pop %v870
        %v872 = vmul.f32 %v866, 1.442695
        %v873 = vpow.pop %v872
        %v874 = vmul.f32 %v867, 1.442695
        %v875 = vpow.pop %v874
        %v876 = vld [vmem:[#allocation3] sm:$0xff]
        %v877 = vld [vmem:[#allocation3 + $0x8] sm:$0xff]
        %v878 = vld [vmem:[#allocation3 + $0x10] sm:$0xff]
        %v879 = vld [vmem:[#allocation3 + $0x18] sm:$0xff]
        %v880 = vmul.f32 %v837, %v876
        %v881 = vmul.f32 %v839, %v877
        %v882 = vmul.f32 %v841, %v878
        %v883 = vmul.f32 %v843, %v879
        %v884 = vsel %vm815, %v869, 0.0
        %885 = vadd.xlane.f32.xlu0 %v884
        %v886 = vpop.xlane.xlu0 %885
        %v887 = vsel %vm815, %v871, 0.0
        %888 = vadd.xlane.f32.xlu0 %v887
        %v889 = vpop.xlane.xlu0 %888
        %v890 = vsel %vm815, %v873, 0.0
        %891 = vadd.xlane.f32.xlu0 %v890
        %v892 = vpop.xlane.xlu0 %891
        %v893 = vsel %vm815, %v875, 0.0
        %894 = vadd.xlane.f32.xlu0 %v893
        %v895 = vpop.xlane.xlu0 %894
        %v896 = vadd.f32 %v880, %v886
        %v897 = vadd.f32 %v881, %v889
        %v898 = vadd.f32 %v882, %v892
        %v899 = vadd.f32 %v883, %v895
        %vm900 = vcmask 7168
        %901 = vst.msk [vmem:[#allocation3] sm:$0xff] %vm900, %v896
        %902 = vst.msk [vmem:[#allocation3 + $0x8] sm:$0xff] %vm900, %v897
        %903 = vst.msk [vmem:[#allocation3 + $0x10] sm:$0xff] %vm900, %v898
        %904 = vst.msk [vmem:[#allocation3 + $0x18] sm:$0xff] %vm900, %v899
        %v905 = vcombine.low %v362, %v364
        %v907 = vunpack.c.l.s4 1983009808
        %v908 = vunpack.c.0.s8 %v907
        %v909 = vlaneseq
        %v910 = vshrl.u32 %v909, 7
        %v911 = vsub.s32 %v908, %v910
        %v912 = vrot.slane %v905, %v911
        %v913 = vcombine.low %v363, %v365
        %v915 = vunpack.c.l.s4 1983009808
        %v916 = vunpack.c.0.s8 %v915
        %v917 = vlaneseq
        %v918 = vshrl.u32 %v917, 7
        %v919 = vsub.s32 %v916, %v918
        %v920 = vrot.slane %v913, %v919
        %v921 = vcombine.low %v366, %v368
        %v923 = vunpack.c.l.s4 1983009808
        %v924 = vunpack.c.0.s8 %v923
        %v925 = vlaneseq
        %v926 = vshrl.u32 %v925, 7
        %v927 = vsub.s32 %v924, %v926
        %v928 = vrot.slane %v921, %v927
        %v929 = vcombine.low %v367, %v369
        %v931 = vunpack.c.l.s4 1983009808
        %v932 = vunpack.c.0.s8 %v931
        %v933 = vlaneseq
        %v934 = vshrl.u32 %v933, 7
        %v935 = vsub.s32 %v932, %v934
        %v936 = vrot.slane %v929, %v935
        %v937 = vcombine.low %v912, %v920
        %v938 = vcombine.high %v912, %v920
        %v940 = vunpack.c.l.s4 1934713408
        %v941 = vunpack.c.0.s8 %v940
        %v942 = vlaneseq
        %v943 = vshrl.u32 %v942, 7
        %v944 = vsub.s32 %v941, %v943
        %v945 = vrot.slane %v937, %v944
        %v947 = vunpack.c.l.s4 1934713408
        %v948 = vunpack.c.0.s8 %v947
        %v949 = vlaneseq
        %v950 = vshrl.u32 %v949, 7
        %v951 = vsub.s32 %v948, %v950
        %v952 = vrot.slane %v938, %v951
        %v953 = vcombine.low %v928, %v936
        %v954 = vcombine.high %v928, %v936
        %v956 = vunpack.c.l.s4 1934713408
        %v957 = vunpack.c.0.s8 %v956
        %v958 = vlaneseq
        %v959 = vshrl.u32 %v958, 7
        %v960 = vsub.s32 %v957, %v959
        %v961 = vrot.slane %v953, %v960
        %v963 = vunpack.c.l.s4 1934713408
        %v964 = vunpack.c.0.s8 %v963
        %v965 = vlaneseq
        %v966 = vshrl.u32 %v965, 7
        %v967 = vsub.s32 %v964, %v966
        %v968 = vrot.slane %v954, %v967
        %v969 = vcombine.low %v945, %v961
        %v970 = vcombine.high %v945, %v961
        %v971 = vcombine.low %v952, %v968
        %v972 = vcombine.high %v952, %v968
        %v974 = vsel %vm815, %v869, 0
        %976 = vmatprep.subr.mxu0 0.0
        %977 = vmatpush1.msra.mxu0 %v969
        %978 = vmatprep.subr.mxu0 0.0
        %979 = vmatpush1.msra.mxu0 0.0
        %980 = vmatprep.subr.mxu0 0.0
        %981 = vmatpush1.msra.mxu0 0.0
        %982 = vmatprep.subr.mxu0 0.0
        %983 = vmatpush1.msra.mxu0 0.0
        %984 = vmatprep.subr.mxu0 0.0
        %985 = vmatpush1.msra.mxu0 0.0
        %986 = vmatprep.subr.mxu0 0.0
        %987 = vmatpush1.msra.mxu0 0.0
        %988 = vmatprep.subr.mxu0 0.0
        %989 = vmatpush1.msra.mxu0 0.0
        %990 = vmatprep.subr.mxu0 0.0
        %991 = vmatpush1.msra.mxu0 0.0
        %992 = vmatprep.subr.mxu0 0.0
        %993 = vmatpush1.msra.mxu0 0.0
        %994 = vmatprep.subr.mxu0 0.0
        %995 = vmatpush1.msra.mxu0 0.0
        %996 = vmatprep.subr.mxu0 0.0
        %997 = vmatpush1.msra.mxu0 0.0
        %998 = vmatprep.subr.mxu0 0.0
        %999 = vmatpush1.msra.mxu0 0.0
        %1000 = vmatprep.subr.mxu0 0.0
        %1001 = vmatpush1.msra.mxu0 0.0
        %1002 = vmatprep.subr.mxu0 0.0
        %1003 = vmatpush1.msra.mxu0 0.0
        %1004 = vmatprep.subr.mxu0 0.0
        %1005 = vmatpush1.msra.mxu0 0.0
        %1006 = vmatprep.subr.mxu0 0.0
        %1007 = vmatpush1.msra.mxu0 0.0
        %1008 = vmatprep.subr.mxu0 0.0
        %1009 = vmatpush1.msra.mxu0 0.0
        %1010 = vmatprep.subr.mxu0 0.0
        %1011 = vmatpush1.msra.mxu0 0.0
        %1012 = vmatprep.subr.mxu0 0.0
        %1013 = vmatpush1.msra.mxu0 0.0
        %1014 = vmatprep.subr.mxu0 0.0
        %1015 = vmatpush1.msra.mxu0 0.0
        %1016 = vmatprep.subr.mxu0 0.0
        %1017 = vmatpush1.msra.mxu0 0.0
        %1018 = vmatprep.subr.mxu0 0.0
        %1019 = vmatpush1.msra.mxu0 0.0
        %1020 = vmatprep.subr.mxu0 0.0
        %1021 = vmatpush1.msra.mxu0 0.0
        %1022 = vmatprep.subr.mxu0 0.0
        %1023 = vmatpush1.msra.mxu0 0.0
        %1024 = vmatprep.subr.mxu0 0.0
        %1025 = vmatpush1.msra.mxu0 0.0
        %1026 = vmatprep.subr.mxu0 0.0
        %1027 = vmatpush1.msra.mxu0 0.0
        %1028 = vmatprep.subr.mxu0 0.0
        %1029 = vmatpush1.msra.mxu0 0.0
        %1030 = vmatprep.subr.mxu0 0.0
        %1031 = vmatpush1.msra.mxu0 0.0
        %1032 = vmatprep.subr.mxu0 0.0
        %1033 = vmatpush1.msra.mxu0 0.0
        %1034 = vmatprep.subr.mxu0 0.0
        %1035 = vmatpush1.msra.mxu0 0.0
        %1036 = vmatprep.subr.mxu0 0.0
        %1037 = vmatpush1.msra.mxu0 0.0
        %1038 = vmatprep.subr.mxu0 0.0
        %1039 = vmatpush1.msra.mxu0 0.0
        %1040 = vmatprep.mubr.f32.mxu0 0.0
        %1041 = vmatmul.mubr.f32.gmra.mrb[0].mxu0 %v974
        %v1042 = vpop.f32.mrb[0].mxu0
        %v1043 = vadd.f32 0.0, %v1042
        %v1044 = vpop.f32.mrb[0].mxu0
        %1045 = vdwg.mxu0
        %v1047 = vsel %vm815, %v871, 0
        %1049 = vmatprep.subr.mxu0 0.0
        %1050 = vmatpush1.msra.mxu0 %v970
        %1051 = vmatprep.subr.mxu0 0.0
        %1052 = vmatpush1.msra.mxu0 0.0
        %1053 = vmatprep.subr.mxu0 0.0
        %1054 = vmatpush1.msra.mxu0 0.0
        %1055 = vmatprep.subr.mxu0 0.0
        %1056 = vmatpush1.msra.mxu0 0.0
        %1057 = vmatprep.subr.mxu0 0.0
        %1058 = vmatpush1.msra.mxu0 0.0
        %1059 = vmatprep.subr.mxu0 0.0
        %1060 = vmatpush1.msra.mxu0 0.0
        %1061 = vmatprep.subr.mxu0 0.0
        %1062 = vmatpush1.msra.mxu0 0.0
        %1063 = vmatprep.subr.mxu0 0.0
        %1064 = vmatpush1.msra.mxu0 0.0
        %1065 = vmatprep.subr.mxu0 0.0
        %1066 = vmatpush1.msra.mxu0 0.0
        %1067 = vmatprep.subr.mxu0 0.0
        %1068 = vmatpush1.msra.mxu0 0.0
        %1069 = vmatprep.subr.mxu0 0.0
        %1070 = vmatpush1.msra.mxu0 0.0
        %1071 = vmatprep.subr.mxu0 0.0
        %1072 = vmatpush1.msra.mxu0 0.0
        %1073 = vmatprep.subr.mxu0 0.0
        %1074 = vmatpush1.msra.mxu0 0.0
        %1075 = vmatprep.subr.mxu0 0.0
        %1076 = vmatpush1.msra.mxu0 0.0
        %1077 = vmatprep.subr.mxu0 0.0
        %1078 = vmatpush1.msra.mxu0 0.0
        %1079 = vmatprep.subr.mxu0 0.0
        %1080 = vmatpush1.msra.mxu0 0.0
        %1081 = vmatprep.subr.mxu0 0.0
        %1082 = vmatpush1.msra.mxu0 0.0
        %1083 = vmatprep.subr.mxu0 0.0
        %1084 = vmatpush1.msra.mxu0 0.0
        %1085 = vmatprep.subr.mxu0 0.0
        %1086 = vmatpush1.msra.mxu0 0.0
        %1087 = vmatprep.subr.mxu0 0.0
        %1088 = vmatpush1.msra.mxu0 0.0
        %1089 = vmatprep.subr.mxu0 0.0
        %1090 = vmatpush1.msra.mxu0 0.0
        %1091 = vmatprep.subr.mxu0 0.0
        %1092 = vmatpush1.msra.mxu0 0.0
        %1093 = vmatprep.subr.mxu0 0.0
        %1094 = vmatpush1.msra.mxu0 0.0
        %1095 = vmatprep.subr.mxu0 0.0
        %1096 = vmatpush1.msra.mxu0 0.0
        %1097 = vmatprep.subr.mxu0 0.0
        %1098 = vmatpush1.msra.mxu0 0.0
        %1099 = vmatprep.subr.mxu0 0.0
        %1100 = vmatpush1.msra.mxu0 0.0
        %1101 = vmatprep.subr.mxu0 0.0
        %1102 = vmatpush1.msra.mxu0 0.0
        %1103 = vmatprep.subr.mxu0 0.0
        %1104 = vmatpush1.msra.mxu0 0.0
        %1105 = vmatprep.subr.mxu0 0.0
        %1106 = vmatpush1.msra.mxu0 0.0
        %1107 = vmatprep.subr.mxu0 0.0
        %1108 = vmatpush1.msra.mxu0 0.0
        %1109 = vmatprep.subr.mxu0 0.0
        %1110 = vmatpush1.msra.mxu0 0.0
        %1111 = vmatprep.subr.mxu0 0.0
        %1112 = vmatpush1.msra.mxu0 0.0
        %1113 = vmatprep.mubr.f32.mxu0 0.0
        %1114 = vmatmul.mubr.f32.gmra.mrb[0].mxu0 %v1047
        %v1115 = vpop.f32.mrb[0].mxu0
        %v1116 = vadd.f32 0.0, %v1115
        %v1117 = vpop.f32.mrb[0].mxu0
        %1118 = vdwg.mxu0
        %v1120 = vsel %vm815, %v873, 0
        %1122 = vmatprep.subr.mxu0 0.0
        %1123 = vmatpush1.msra.mxu0 %v971
        %1124 = vmatprep.subr.mxu0 0.0
        %1125 = vmatpush1.msra.mxu0 0.0
        %1126 = vmatprep.subr.mxu0 0.0
        %1127 = vmatpush1.msra.mxu0 0.0
        %1128 = vmatprep.subr.mxu0 0.0
        %1129 = vmatpush1.msra.mxu0 0.0
        %1130 = vmatprep.subr.mxu0 0.0
        %1131 = vmatpush1.msra.mxu0 0.0
        %1132 = vmatprep.subr.mxu0 0.0
        %1133 = vmatpush1.msra.mxu0 0.0
        %1134 = vmatprep.subr.mxu0 0.0
        %1135 = vmatpush1.msra.mxu0 0.0
        %1136 = vmatprep.subr.mxu0 0.0
        %1137 = vmatpush1.msra.mxu0 0.0
        %1138 = vmatprep.subr.mxu0 0.0
        %1139 = vmatpush1.msra.mxu0 0.0
        %1140 = vmatprep.subr.mxu0 0.0
        %1141 = vmatpush1.msra.mxu0 0.0
        %1142 = vmatprep.subr.mxu0 0.0
        %1143 = vmatpush1.msra.mxu0 0.0
        %1144 = vmatprep.subr.mxu0 0.0
        %1145 = vmatpush1.msra.mxu0 0.0
        %1146 = vmatprep.subr.mxu0 0.0
        %1147 = vmatpush1.msra.mxu0 0.0
        %1148 = vmatprep.subr.mxu0 0.0
        %1149 = vmatpush1.msra.mxu0 0.0
        %1150 = vmatprep.subr.mxu0 0.0
        %1151 = vmatpush1.msra.mxu0 0.0
        %1152 = vmatprep.subr.mxu0 0.0
        %1153 = vmatpush1.msra.mxu0 0.0
        %1154 = vmatprep.subr.mxu0 0.0
        %1155 = vmatpush1.msra.mxu0 0.0
        %1156 = vmatprep.subr.mxu0 0.0
        %1157 = vmatpush1.msra.mxu0 0.0
        %1158 = vmatprep.subr.mxu0 0.0
        %1159 = vmatpush1.msra.mxu0 0.0
        %1160 = vmatprep.subr.mxu0 0.0
        %1161 = vmatpush1.msra.mxu0 0.0
        %1162 = vmatprep.subr.mxu0 0.0
        %1163 = vmatpush1.msra.mxu0 0.0
        %1164 = vmatprep.subr.mxu0 0.0
        %1165 = vmatpush1.msra.mxu0 0.0
        %1166 = vmatprep.subr.mxu0 0.0
        %1167 = vmatpush1.msra.mxu0 0.0
        %1168 = vmatprep.subr.mxu0 0.0
        %1169 = vmatpush1.msra.mxu0 0.0
        %1170 = vmatprep.subr.mxu0 0.0
        %1171 = vmatpush1.msra.mxu0 0.0
        %1172 = vmatprep.subr.mxu0 0.0
        %1173 = vmatpush1.msra.mxu0 0.0
        %1174 = vmatprep.subr.mxu0 0.0
        %1175 = vmatpush1.msra.mxu0 0.0
        %1176 = vmatprep.subr.mxu0 0.0
        %1177 = vmatpush1.msra.mxu0 0.0
        %1178 = vmatprep.subr.mxu0 0.0
        %1179 = vmatpush1.msra.mxu0 0.0
        %1180 = vmatprep.subr.mxu0 0.0
        %1181 = vmatpush1.msra.mxu0 0.0
        %1182 = vmatprep.subr.mxu0 0.0
        %1183 = vmatpush1.msra.mxu0 0.0
        %1184 = vmatprep.subr.mxu0 0.0
        %1185 = vmatpush1.msra.mxu0 0.0
        %1186 = vmatprep.mubr.f32.mxu0 0.0
        %1187 = vmatmul.mubr.f32.gmra.mrb[0].mxu0 %v1120
        %v1188 = vpop.f32.mrb[0].mxu0
        %v1189 = vadd.f32 0.0, %v1188
        %v1190 = vpop.f32.mrb[0].mxu0
        %1191 = vdwg.mxu0
        %v1193 = vsel %vm815, %v875, 0
        %1195 = vmatprep.subr.mxu0 0.0
        %1196 = vmatpush1.msra.mxu0 %v972
        %1197 = vmatprep.subr.mxu0 0.0
        %1198 = vmatpush1.msra.mxu0 0.0
        %1199 = vmatprep.subr.mxu0 0.0
        %1200 = vmatpush1.msra.mxu0 0.0
        %1201 = vmatprep.subr.mxu0 0.0
        %1202 = vmatpush1.msra.mxu0 0.0
        %1203 = vmatprep.subr.mxu0 0.0
        %1204 = vmatpush1.msra.mxu0 0.0
        %1205 = vmatprep.subr.mxu0 0.0
        %1206 = vmatpush1.msra.mxu0 0.0
        %1207 = vmatprep.subr.mxu0 0.0
        %1208 = vmatpush1.msra.mxu0 0.0
        %1209 = vmatprep.subr.mxu0 0.0
        %1210 = vmatpush1.msra.mxu0 0.0
        %1211 = vmatprep.subr.mxu0 0.0
        %1212 = vmatpush1.msra.mxu0 0.0
        %1213 = vmatprep.subr.mxu0 0.0
        %1214 = vmatpush1.msra.mxu0 0.0
        %1215 = vmatprep.subr.mxu0 0.0
        %1216 = vmatpush1.msra.mxu0 0.0
        %1217 = vmatprep.subr.mxu0 0.0
        %1218 = vmatpush1.msra.mxu0 0.0
        %1219 = vmatprep.subr.mxu0 0.0
        %1220 = vmatpush1.msra.mxu0 0.0
        %1221 = vmatprep.subr.mxu0 0.0
        %1222 = vmatpush1.msra.mxu0 0.0
        %1223 = vmatprep.subr.mxu0 0.0
        %1224 = vmatpush1.msra.mxu0 0.0
        %1225 = vmatprep.subr.mxu0 0.0
        %1226 = vmatpush1.msra.mxu0 0.0
        %1227 = vmatprep.subr.mxu0 0.0
        %1228 = vmatpush1.msra.mxu0 0.0
        %1229 = vmatprep.subr.mxu0 0.0
        %1230 = vmatpush1.msra.mxu0 0.0
        %1231 = vmatprep.subr.mxu0 0.0
        %1232 = vmatpush1.msra.mxu0 0.0
        %1233 = vmatprep.subr.mxu0 0.0
        %1234 = vmatpush1.msra.mxu0 0.0
        %1235 = vmatprep.subr.mxu0 0.0
        %1236 = vmatpush1.msra.mxu0 0.0
        %1237 = vmatprep.subr.mxu0 0.0
        %1238 = vmatpush1.msra.mxu0 0.0
        %1239 = vmatprep.subr.mxu0 0.0
        %1240 = vmatpush1.msra.mxu0 0.0
        %1241 = vmatprep.subr.mxu0 0.0
        %1242 = vmatpush1.msra.mxu0 0.0
        %1243 = vmatprep.subr.mxu0 0.0
        %1244 = vmatpush1.msra.mxu0 0.0
        %1245 = vmatprep.subr.mxu0 0.0
        %1246 = vmatpush1.msra.mxu0 0.0
        %1247 = vmatprep.subr.mxu0 0.0
        %1248 = vmatpush1.msra.mxu0 0.0
        %1249 = vmatprep.subr.mxu0 0.0
        %1250 = vmatpush1.msra.mxu0 0.0
        %1251 = vmatprep.subr.mxu0 0.0
        %1252 = vmatpush1.msra.mxu0 0.0
        %1253 = vmatprep.subr.mxu0 0.0
        %1254 = vmatpush1.msra.mxu0 0.0
        %1255 = vmatprep.subr.mxu0 0.0
        %1256 = vmatpush1.msra.mxu0 0.0
        %1257 = vmatprep.subr.mxu0 0.0
        %1258 = vmatpush1.msra.mxu0 0.0
        %1259 = vmatprep.mubr.f32.mxu0 0.0
        %1260 = vmatmul.mubr.f32.gmra.mrb[0].mxu0 %v1193
        %v1261 = vpop.f32.mrb[0].mxu0
        %v1262 = vadd.f32 0.0, %v1261
        %v1263 = vpop.f32.mrb[0].mxu0
        %1264 = vdwg.mxu0
        %v1265 = vld [vmem:[#allocation4] sm:$0xff]
        %v1266 = vld [vmem:[#allocation4 + $0x8] sm:$0xff]
        %v1267 = vld [vmem:[#allocation4 + $0x10] sm:$0xff]
        %v1268 = vld [vmem:[#allocation4 + $0x18] sm:$0xff]
        %1270 = vset.pattern.permute.xlu0 0
        %1271 = vperm.xlu0 %1270, %v837
        %v1272 = vpop.permute.xlu0 %1271
        %1275 = vset.pattern.permute.xlu0 0
        %1276 = vperm.xlu0 %1275, %v839
        %v1277 = vpop.permute.xlu0 %1276
        %1280 = vset.pattern.permute.xlu0 0
        %1281 = vperm.xlu0 %1280, %v841
        %v1282 = vpop.permute.xlu0 %1281
        %1285 = vset.pattern.permute.xlu0 0
        %1286 = vperm.xlu0 %1285, %v843
        %v1287 = vpop.permute.xlu0 %1286
        %v1289 = vmul.f32 %v1272, %v1265
        %v1290 = vmul.f32 %v1277, %v1266
        %v1291 = vmul.f32 %v1282, %v1267
        %v1292 = vmul.f32 %v1287, %v1268
        %v1293 = vadd.f32 %v1289, %v1043
        %v1294 = vadd.f32 %v1290, %v1116
        %v1295 = vadd.f32 %v1291, %v1189
        %v1296 = vadd.f32 %v1292, %v1262
        %1297 = vst.msk [vmem:[#allocation4] sm:$0xff] %vm506, %v1293
        %1298 = vst.msk [vmem:[#allocation4 + $0x8] sm:$0xff] %vm506, %v1294
        %1299 = vst.msk [vmem:[#allocation4 + $0x10] sm:$0xff] %vm506, %v1295
        %1300 = vst.msk [vmem:[#allocation4 + $0x18] sm:$0xff] %vm506, %v1296
        %1301 = vst.msk [vmem:[#allocation2] sm:$0xff] %vm900, %v828
        %1302 = vst.msk [vmem:[#allocation2 + $0x8] sm:$0xff] %vm900, %v829
        %1303 = vst.msk [vmem:[#allocation2 + $0x10] sm:$0xff] %vm900, %v830
        %1304 = vst.msk [vmem:[#allocation2 + $0x18] sm:$0xff] %vm900, %v831
        // Predicated region
        $region49: #{tpu_custom_call.1} parent=31 // pred_check
          %p1305 = pneg %p320
        $region50: #{tpu_custom_call.1} parent=31 // pred_check_branch
          %1307 = sbr.rel (%p1305) target = $region52
        $region51: #{tpu_custom_call.1} parent=31 // pred_region
          %v1308 = vld [vmem:[#allocation3] sm:$0xff]
          %v1309 = vld [vmem:[#allocation3 + $0x8] sm:$0xff]
          %v1310 = vld [vmem:[#allocation3 + $0x10] sm:$0xff]
          %v1311 = vld [vmem:[#allocation3 + $0x18] sm:$0xff]
          %v1312 = vrcp.pop %v1308
          %v1313 = vrcp.pop %v1309
          %v1314 = vrcp.pop %v1310
          %v1315 = vrcp.pop %v1311
          %v1316 = vld [vmem:[#allocation4] sm:$0xff]
          %v1317 = vld [vmem:[#allocation4 + $0x8] sm:$0xff]
          %v1318 = vld [vmem:[#allocation4 + $0x10] sm:$0xff]
          %v1319 = vld [vmem:[#allocation4 + $0x18] sm:$0xff]
          %1321 = vset.pattern.permute.xlu0 0
          %1322 = vperm.xlu0 %1321, %v1312
          %v1323 = vpop.permute.xlu0 %1322
          %1326 = vset.pattern.permute.xlu0 0
          %1327 = vperm.xlu0 %1326, %v1313
          %v1328 = vpop.permute.xlu0 %1327
          %1331 = vset.pattern.permute.xlu0 0
          %1332 = vperm.xlu0 %1331, %v1314
          %v1333 = vpop.permute.xlu0 %1332
          %1336 = vset.pattern.permute.xlu0 0
          %1337 = vperm.xlu0 %1336, %v1315
          %v1338 = vpop.permute.xlu0 %1337
          %v1340 = vmul.f32 %v1316, %v1323
          %v1341 = vmul.f32 %v1317, %v1328
          %v1342 = vmul.f32 %v1318, %v1333
          %v1343 = vmul.f32 %v1319, %v1338
          %v1344 = vcombine.low %v1340, %v1342
          %v1345 = vcombine.high %v1340, %v1342
          %v1347 = vunpack.c.l.s4 1983009808
          %v1348 = vunpack.c.0.s8 %v1347
          %v1349 = vlaneseq
          %v1350 = vshrl.u32 %v1349, 7
          %v1351 = vsub.s32 %v1348, %v1350
          %v1352 = vrot.slane %v1344, %v1351
          %v1354 = vunpack.c.l.s4 1983009808
          %v1355 = vunpack.c.0.s8 %v1354
          %v1356 = vlaneseq
          %v1357 = vshrl.u32 %v1356, 7
          %v1358 = vsub.s32 %v1355, %v1357
          %v1359 = vrot.slane %v1345, %v1358
          %v1360 = vcombine.low %v1341, %v1343
          %v1361 = vcombine.high %v1341, %v1343
          %v1363 = vunpack.c.l.s4 1983009808
          %v1364 = vunpack.c.0.s8 %v1363
          %v1365 = vlaneseq
          %v1366 = vshrl.u32 %v1365, 7
          %v1367 = vsub.s32 %v1364, %v1366
          %v1368 = vrot.slane %v1360, %v1367
          %v1370 = vunpack.c.l.s4 1983009808
          %v1371 = vunpack.c.0.s8 %v1370
          %v1372 = vlaneseq
          %v1373 = vshrl.u32 %v1372, 7
          %v1374 = vsub.s32 %v1371, %v1373
          %v1375 = vrot.slane %v1361, %v1374
          %v1376 = vcombine.low %v1352, %v1368
          %v1377 = vcombine.high %v1352, %v1368
          %v1379 = vunpack.c.l.s4 1934713408
          %v1380 = vunpack.c.0.s8 %v1379
          %v1381 = vlaneseq
          %v1382 = vshrl.u32 %v1381, 7
          %v1383 = vsub.s32 %v1380, %v1382
          %v1384 = vrot.slane %v1376, %v1383
          %v1386 = vunpack.c.l.s4 1934713408
          %v1387 = vunpack.c.0.s8 %v1386
          %v1388 = vlaneseq
          %v1389 = vshrl.u32 %v1388, 7
          %v1390 = vsub.s32 %v1387, %v1389
          %v1391 = vrot.slane %v1377, %v1390
          %v1392 = vcombine.low %v1359, %v1375
          %v1393 = vcombine.high %v1359, %v1375
          %v1395 = vunpack.c.l.s4 1934713408
          %v1396 = vunpack.c.0.s8 %v1395
          %v1397 = vlaneseq
          %v1398 = vshrl.u32 %v1397, 7
          %v1399 = vsub.s32 %v1396, %v1398
          %v1400 = vrot.slane %v1392, %v1399
          %v1402 = vunpack.c.l.s4 1934713408
          %v1403 = vunpack.c.0.s8 %v1402
          %v1404 = vlaneseq
          %v1405 = vshrl.u32 %v1404, 7
          %v1406 = vsub.s32 %v1403, %v1405
          %v1407 = vrot.slane %v1393, %v1406
          %v1408 = vcombine.high %v1384, 0.0
          %v1409 = vcombine.high %v1391, 0.0
          %v1410 = vcombine.high %v1400, 0.0
          %v1411 = vcombine.high %v1407, 0.0
          %v1412 = vcombine.low %v1384, %v1391
          %v1414 = vunpack.c.l.s4 1983009808
          %v1415 = vunpack.c.0.s8 %v1414
          %v1416 = vlaneseq
          %v1417 = vshrl.u32 %v1416, 7
          %v1418 = vsub.s32 %v1415, %v1417
          %v1419 = vrot.slane %v1412, %v1418
          %v1420 = vcombine.low %v1408, %v1409
          %v1422 = vunpack.c.l.s4 1983009808
          %v1423 = vunpack.c.0.s8 %v1422
          %v1424 = vlaneseq
          %v1425 = vshrl.u32 %v1424, 7
          %v1426 = vsub.s32 %v1423, %v1425
          %v1427 = vrot.slane %v1420, %v1426
          %v1428 = vcombine.low %v1400, %v1407
          %v1430 = vunpack.c.l.s4 1983009808
          %v1431 = vunpack.c.0.s8 %v1430
          %v1432 = vlaneseq
          %v1433 = vshrl.u32 %v1432, 7
          %v1434 = vsub.s32 %v1431, %v1433
          %v1435 = vrot.slane %v1428, %v1434
          %v1436 = vcombine.low %v1410, %v1411
          %v1438 = vunpack.c.l.s4 1983009808
          %v1439 = vunpack.c.0.s8 %v1438
          %v1440 = vlaneseq
          %v1441 = vshrl.u32 %v1440, 7
          %v1442 = vsub.s32 %v1439, %v1441
          %v1443 = vrot.slane %v1436, %v1442
          %v1444 = vcombine.low %v1419, %v1427
          %v1445 = vcombine.high %v1419, %v1427
          %v1447 = vunpack.c.l.s4 1934713408
          %v1448 = vunpack.c.0.s8 %v1447
          %v1449 = vlaneseq
          %v1450 = vshrl.u32 %v1449, 7
          %v1451 = vsub.s32 %v1448, %v1450
          %v1452 = vrot.slane %v1444, %v1451
          %v1454 = vunpack.c.l.s4 1934713408
          %v1455 = vunpack.c.0.s8 %v1454
          %v1456 = vlaneseq
          %v1457 = vshrl.u32 %v1456, 7
          %v1458 = vsub.s32 %v1455, %v1457
          %v1459 = vrot.slane %v1445, %v1458
          %v1460 = vcombine.low %v1435, %v1443
          %v1461 = vcombine.high %v1435, %v1443
          %v1463 = vunpack.c.l.s4 1934713408
          %v1464 = vunpack.c.0.s8 %v1463
          %v1465 = vlaneseq
          %v1466 = vshrl.u32 %v1465, 7
          %v1467 = vsub.s32 %v1464, %v1466
          %v1468 = vrot.slane %v1460, %v1467
          %v1470 = vunpack.c.l.s4 1934713408
          %v1471 = vunpack.c.0.s8 %v1470
          %v1472 = vlaneseq
          %v1473 = vshrl.u32 %v1472, 7
          %v1474 = vsub.s32 %v1471, %v1473
          %v1475 = vrot.slane %v1461, %v1474
          %v1476 = vcombine.low %v1452, %v1468
          %v1477 = vcombine.high %v1452, %v1468
          %v1478 = vcombine.low %v1459, %v1475
          %v1479 = vcombine.high %v1459, %v1475
          %1481 = vrot.lane.b32.xlu0 %v1477, 32
          %v1482 = vpop.permute.xlu0 %1481
          %1485 = vrot.lane.b32.xlu0 %v1478, 64
          %v1486 = vpop.permute.xlu0 %1485
          %1489 = vrot.lane.b32.xlu0 %v1479, 96
          %v1490 = vpop.permute.xlu0 %1489
          %v1492 = vsel %vm506, %v1476, %v1482
          %vm1493 = vcmask 523264
          %v1494 = vsel %vm1493, %v1492, %v1486
          %vm1495 = vcmask 785408
          %v1496 = vsel %vm1495, %v1494, %v1490
          %1497 = vst [vmem:[%s316] sm:$0xff] %v1496
        $region52: #{tpu_custom_call.1} parent=31 // pred_fallthru
          _
        %s1498 = sand.u32 %s151, 1
        %s1499 = scalar_lea.sflag [#allocation7], %s1498
        %s1500 = sand.u32 %s151, 1
        %s1501 = smul.addr %s1500, 8
        %s1502 = scalar_lea.vmem [#allocation11], %s1501
        // Predicated region
        $region53: #{tpu_custom_call.1} parent=31 // pred_check
          %p1503 = pneg %p161
        $region54: #{tpu_custom_call.1} parent=31 // pred_check_branch
          %1505 = sbr.rel (%p1503) target = $region56
        $region55: #{tpu_custom_call.1} parent=31 // pred_region
          %s1507 = ssub.s32 128, 128
          %1508 = vsyncadd %s1499, %s1507
          %s1509 = sadd.s32 %s30, %s31
          %s1510 = sadd.s32 %s1509, %s29
          %s1511 = smul.addr %s1510, 128
          %s1512 = scalar_lea.hbm %s3, %s1511
          %s1514 = sshll.u32 %s1502, 4
          %s1515 = int_to_ptr.vmem [resolvable:$true] %s1514
          %1517 = dma.vmem_to_hbm [thread:$0]  %s1515, 128, %s1512, %s1499
        $region56: #{tpu_custom_call.1} parent=31 // pred_fallthru
          _
      $region32: #{tpu_custom_call.1} parent=5 // pred_fallthru
        _
      %p1518 = scmp.le.s32.totalorder 2, %s18
      // Predicated region
      $region57: #{tpu_custom_call.1} parent=5 // pred_check
        %p1519 = pneg %p1518
      $region58: #{tpu_custom_call.1} parent=5 // pred_check_branch
        %1521 = sbr.rel (%p1519) target = $region60
      $region59: #{tpu_custom_call.1} parent=5 // pred_region
        %s1522 = ssub.s32 %s18, 2
        // Predicated region
        $region61: #{tpu_custom_call.1} parent=59 // pred_check
          %p1523 = pneg %p167
        $region62: #{tpu_custom_call.1} parent=59 // pred_check_branch
          %1525 = sbr.rel (%p1523) target = $region64
        $region63: #{tpu_custom_call.1} parent=59 // pred_region
          %s1526 = sand.u32 %s152, 1
          %s1527 = scalar_lea.sflag [#allocation7], %s1526
          %s1528 = sand.u32 %s152, 1
          %s1529 = smul.addr %s1528, 8
          %s1530 = scalar_lea.vmem [#allocation11], %s1529
          %1531 = dma.done %s1527, 128
        $region64: #{tpu_custom_call.1} parent=59 // pred_fallthru
          _
      $region60: #{tpu_custom_call.1} parent=5 // pred_fallthru
        _
    $region6: #{tpu_custom_call.1} parent=1 // loop_footer
      %s22 = sadd.s32 1, %s18
    $region7: #{tpu_custom_call.1} parent=1 // loop_footer_branch
      %17 = sbr.rel target = $region3
    $region8: #{tpu_custom_call.1} parent=1 // loop_exit
      _
    %1532 = vsyncpa [#allocation6], 1
    %s1533 = scalar_lea.sflag [#allocation6], 1
    %1534 = vsyncpa %s1533, 1
    %1535 = vsyncpa [#allocation9], 1
    %s1536 = scalar_lea.sflag [#allocation9], 1
    %1537 = vsyncpa %s1536, 1
    %1538 = vsyncpa [#allocation7], 1
    %s1539 = scalar_lea.sflag [#allocation7], 1
    %1540 = vsyncpa %s1539, 1

</llo_original>
